<compile_context>
chip_gen: v6e
topology: v6e:2x2x1
jax: 0.10.0
libtpu: 0.0.40
codegen_flags: <defaults>
</compile_context>

<pallas_src>
import jax
import jax.numpy as jnp
from jax.experimental import pallas as pl
from jax.experimental.pallas import tpu as pltpu

# ---- module constants (from DeepGRAIL.py) ----------------------------------
N = 4
Nr = 6
Nt = Nr

STATE_DIM = 2 * Nr * Nt          # 72  (real/imag channel matrix, flattened)
ACTION_DIM = 2 * Nt * N          # 48  -> reshaped to (B, 2, Nt, N)
HIDDEN = 1024                    # hidden_dim_1 = hidden_dim_2 = 1024
MAX_ACTION = 1.0

STATE_PAD = 128                  # lane-dense input width
ACTION_PAD = 128                 # lane-dense output width (unmasked vst)


def _round_up(x, m):
    return ((x + m - 1) // m) * m


def _default_tile_b():
    """512 on v5* (slower MXU, tighter scoped VMEM), 1024 on v6e/v7x."""
    try:
        kind = jax.devices()[0].device_kind.lower()
    except Exception:
        return 512
    return 512 if "v5" in kind else 1024


# ---- Pallas kernel: one batch tile (3 matmuls + tanh + power normalisation) -
def _actor_kernel(s_ref, w1_ref, b1_ref, w2_ref, b2_ref, w3_ref, b3_ref,
                  o_ref):
    # MLP (l1 -> relu -> l2 -> relu -> l3); bf16 operands, f32 MXU accumulation.
    s = s_ref[...]                                               # bf16 (tb,128)
    h = jnp.dot(s, w1_ref[...], preferred_element_type=jnp.float32)
    h = jnp.maximum(h + b1_ref[...], 0.0)
    h = jnp.dot(h.astype(jnp.bfloat16), w2_ref[...],
                preferred_element_type=jnp.float32)
    h = jnp.maximum(h + b2_ref[...], 0.0)
    a = jnp.dot(h.astype(jnp.bfloat16), w3_ref[...],
                preferred_element_type=jnp.float32) + b3_ref[...]

    # tanh on EUP.  PyTorch multiplies by max_action here, but the subsequent
    # unit-power normalisation makes the result exactly invariant to that
    # scale, so the multiply is omitted (saves a full-tile VPU pass).
    a = jnp.tanh(a)

    # power = sum(a^2) over torch dims (1,2,3) == per-row sum over flat action;
    # padded lanes have w3=b3=0 -> tanh(0)=0, contribute nothing.  Epsilon
    # avoids Inf on an all-zero row (e.g. padded batch rows, sliced off later).
    power = jnp.sum(a * a, axis=-1, keepdims=True)               # (tb, 1)
    scale = jax.lax.rsqrt(power + 1e-12)
    o_ref[...] = (a * scale).astype(o_ref.dtype)


# ---- parameter preparation: pad + cast to kernel-ready bf16 layout ----------
def prepare_params(params):
    """f32 (w1,b1,w2,b2,w3,b3) -> padded bf16 weights + f32 biases."""
    w1, b1, w2, b2, w3, b3 = params
    w1p = (jnp.zeros((STATE_PAD, HIDDEN), jnp.float32)
           .at[:STATE_DIM, :].set(w1)).astype(jnp.bfloat16)
    w2p = w2.astype(jnp.bfloat16)
    w3p = (jnp.zeros((HIDDEN, ACTION_PAD), jnp.float32)
           .at[:, :ACTION_DIM].set(w3)).astype(jnp.bfloat16)
    b3p = (jnp.zeros((1, ACTION_PAD), jnp.float32)
           .at[:, :ACTION_DIM].set(b3))
    return (w1p, b1.astype(jnp.float32), w2p, b2.astype(jnp.float32), w3p, b3p)


# ---- wrapper ----------------------------------------------------------------
def actor_forward(state, prepared_params, max_action=MAX_ACTION, tile_b=None):
    """state: (B, STATE_DIM) f32 -> action: (B, 2, Nt, N) f32 (unit power)."""
    del max_action  # output is invariant to max_action (unit-power normalised)
    B = state.shape[0]
    w1, b1, w2, b2, w3, b3 = prepared_params

    if tile_b is None:
        tile_b = _default_tile_b()

    # Batch tile: multiple of 16 (bf16 sublane packing); pad batch to a
    # tile multiple.
    tb = _round_up(min(tile_b, _round_up(B, 16)), 16)
    Bp = _round_up(B, tb)

    # State padded to a lane-dense 128-wide bf16 slab in the wrapper (the pad
    # op exists anyway) -> half the state DMA bytes, no in-kernel cast.
    state_p = (jnp.zeros((Bp, STATE_PAD), jnp.bfloat16)
               .at[:B, :STATE_DIM].set(state.astype(jnp.bfloat16)))

    num_tiles = Bp // tb
    grid = (num_tiles,)

    # v7x: shard batch tiles across both TensorCores when there is >1 tile;
    # no-op on v5e/v6e (1 TC).
    dim_sem = ("parallel",) if num_tiles >= 2 else ("arbitrary",)
    vmem_limit = (48 << 20) if tb > 512 else (28 << 20)

    # Constant weight/bias blocks: single-buffered (they never change block).
    const_buf = pl.Buffered(1)

    out_padded = pl.pallas_call(
        _actor_kernel,
        out_shape=jax.ShapeDtypeStruct((Bp, ACTION_PAD), jnp.float32),
        grid=grid,
        in_specs=[
            # state tiles pipeline over the batch grid axis (default 2-deep)
            pl.BlockSpec((tb, STATE_PAD), lambda i: (i, 0)),
            # weights/biases: constant index_map -> resident in VMEM, 1 buffer
            pl.BlockSpec((STATE_PAD, HIDDEN), lambda i: (0, 0),
                         pipeline_mode=const_buf),
            pl.BlockSpec((1, HIDDEN), lambda i: (0, 0),
                         pipeline_mode=const_buf),
            pl.BlockSpec((HIDDEN, HIDDEN), lambda i: (0, 0),
                         pipeline_mode=const_buf),
            pl.BlockSpec((1, HIDDEN), lambda i: (0, 0),
                         pipeline_mode=const_buf),
            pl.BlockSpec((HIDDEN, ACTION_PAD), lambda i: (0, 0),
                         pipeline_mode=const_buf),
            pl.BlockSpec((1, ACTION_PAD), lambda i: (0, 0),
                         pipeline_mode=const_buf),
        ],
        out_specs=pl.BlockSpec((tb, ACTION_PAD), lambda i: (i, 0)),
        compiler_params=pltpu.CompilerParams(
            dimension_semantics=dim_sem,
            vmem_limit_bytes=vmem_limit),
    )(state_p, w1, b1, w2, b2, w3, b3)

    return out_padded[:B, :ACTION_DIM].reshape(B, 2, Nt, N)


# ---- deterministic parameter init (PyTorch nn.Linear default: U(+-1/sqrt(fan_in)))
def init_params(key):
    keys = jax.random.split(key, 6)

    def linear(kw, kb, fan_in, fan_out):
        bound = 1.0 / jnp.sqrt(jnp.float32(fan_in))
        w = jax.random.uniform(kw, (fan_in, fan_out), jnp.float32, -bound, bound)
        b = jax.random.uniform(kb, (1, fan_out), jnp.float32, -bound, bound)
        return w, b

    w1, b1 = linear(keys[0], keys[1], STATE_DIM, HIDDEN)
    w2, b2 = linear(keys[2], keys[3], HIDDEN, HIDDEN)
    w3, b3 = linear(keys[4], keys[5], HIDDEN, ACTION_DIM)
    return (w1, b1, w2, b2, w3, b3)


# ---- pure-JAX reference (same bf16 weight/state path) for a correctness check
def actor_forward_ref(state, prepared_params, max_action=MAX_ACTION):
    del max_action
    w1, b1, w2, b2, w3, b3 = prepared_params
    B = state.shape[0]
    sp = (jnp.zeros((B, STATE_PAD), jnp.bfloat16)
          .at[:, :STATE_DIM].set(state.astype(jnp.bfloat16)))
    h = jnp.dot(sp, w1, preferred_element_type=jnp.float32) + b1
    h = jnp.maximum(h, 0.0)
    h = jnp.dot(h.astype(jnp.bfloat16), w2,
                preferred_element_type=jnp.float32) + b2
    h = jnp.maximum(h, 0.0)
    a = jnp.dot(h.astype(jnp.bfloat16), w3,
                preferred_element_type=jnp.float32) + b3
    a = jnp.tanh(a)
    a = a[:, :ACTION_DIM].reshape(B, 2, Nt, N)
    power = jnp.sum(a * a, axis=(1, 2, 3)).reshape(B, 1, 1, 1)
    return (a * jax.lax.rsqrt(power + 1e-12)).astype(jnp.float32)


if __name__ == "__main__":
    key = jax.random.PRNGKey(0)
    k_state, k_params = jax.random.split(key)

    B = 2
    state = jax.random.normal(k_state, (B, STATE_DIM), jnp.float32)
    params = init_params(k_params)
    prepared = prepare_params(params)

    out = actor_forward(state, prepared)
    out = jax.block_until_ready(out)

    ref = actor_forward_ref(state, prepared)
    assert out.shape == (B, 2, Nt, N), out.shape
    assert jnp.allclose(out, ref, atol=5e-3, rtol=5e-3), "mismatch vs reference"
    # per-sample power after normalisation must be 1
    assert jnp.allclose(jnp.sum(out * out, axis=(1, 2, 3)),
                        jnp.ones((B,), jnp.float32), atol=1e-3)

    print("KERNEL_OK")
</pallas_src>

<mosaic_0001>
module attributes {stable_mosaic.version = 11 : i64} {
  func.func @_actor_kernel(%arg0: i32, %arg1: memref<16x128xbf16, #tpu.memory_space<vmem>>, %arg2: memref<128x1024xbf16, #tpu.memory_space<vmem>>, %arg3: memref<1x1024xf32, #tpu.memory_space<vmem>>, %arg4: memref<1024x1024xbf16, #tpu.memory_space<vmem>>, %arg5: memref<1x1024xf32, #tpu.memory_space<vmem>>, %arg6: memref<1024x128xbf16, #tpu.memory_space<vmem>>, %arg7: memref<1x128xf32, #tpu.memory_space<vmem>>, %arg8: memref<16x128xf32, #tpu.memory_space<vmem>>) attributes {dimension_semantics = [#tpu.dimension_semantics<arbitrary>], iteration_bounds = array<i64: 1>, scalar_prefetch = 0 : i64, scratch_operands = 0 : i64, tpu.core_type = #tpu.core_type<tc>, window_params = [{transform_indices = @transform_0, window_bounds = array<i64: 16, 128>}, {pipeline_mode = #tpu.pipeline_mode<synchronous>, transform_indices = @transform_1, window_bounds = array<i64: 128, 1024>}, {pipeline_mode = #tpu.pipeline_mode<synchronous>, transform_indices = @transform_2, window_bounds = array<i64: 1, 1024>}, {pipeline_mode = #tpu.pipeline_mode<synchronous>, transform_indices = @transform_3, window_bounds = array<i64: 1024, 1024>}, {pipeline_mode = #tpu.pipeline_mode<synchronous>, transform_indices = @transform_4, window_bounds = array<i64: 1, 1024>}, {pipeline_mode = #tpu.pipeline_mode<synchronous>, transform_indices = @transform_5, window_bounds = array<i64: 1024, 128>}, {pipeline_mode = #tpu.pipeline_mode<synchronous>, transform_indices = @transform_6, window_bounds = array<i64: 1, 128>}, {transform_indices = @transform_7, window_bounds = array<i64: 16, 128>}]} {
    %c0 = arith.constant 0 : index
    %c0_0 = arith.constant 0 : index
    %0 = vector.load %arg1[%c0, %c0_0] : memref<16x128xbf16, #tpu.memory_space<vmem>>, vector<16x128xbf16>
    %c0_1 = arith.constant 0 : index
    %c0_2 = arith.constant 0 : index
    %1 = vector.load %arg2[%c0_1, %c0_2] : memref<128x1024xbf16, #tpu.memory_space<vmem>>, vector<128x1024xbf16>
    %cst = arith.constant dense<0.000000e+00> : vector<16x1024xf32>
    %2 = tpu.matmul %0, %1, %cst {dimension_numbers = #tpu.dot_dimension_numbers<[1], [0], [0], [1], [0, 0, 1, 1], [], []>} : vector<16x128xbf16>, vector<128x1024xbf16>, vector<16x1024xf32> -> vector<16x1024xf32>
    %c0_3 = arith.constant 0 : index
    %c0_4 = arith.constant 0 : index
    %3 = vector.load %arg3[%c0_3, %c0_4] : memref<1x1024xf32, #tpu.memory_space<vmem>>, vector<1x1024xf32>
    %4 = vector.broadcast %3 : vector<1x1024xf32> to vector<16x1024xf32>
    %5 = arith.addf %2, %4 : vector<16x1024xf32>
    %cst_5 = arith.constant 0.000000e+00 : f32
    %6 = vector.broadcast %cst_5 : f32 to vector<16x1024xf32>
    %7 = arith.maximumf %5, %6 : vector<16x1024xf32>
    %8 = arith.truncf %7 : vector<16x1024xf32> to vector<16x1024xbf16>
    %c0_6 = arith.constant 0 : index
    %c0_7 = arith.constant 0 : index
    %9 = vector.load %arg4[%c0_6, %c0_7] : memref<1024x1024xbf16, #tpu.memory_space<vmem>>, vector<1024x1024xbf16>
    %cst_8 = arith.constant dense<0.000000e+00> : vector<16x1024xf32>
    %10 = tpu.matmul %8, %9, %cst_8 {dimension_numbers = #tpu.dot_dimension_numbers<[1], [0], [0], [1], [0, 0, 1, 1], [], []>} : vector<16x1024xbf16>, vector<1024x1024xbf16>, vector<16x1024xf32> -> vector<16x1024xf32>
    %c0_9 = arith.constant 0 : index
    %c0_10 = arith.constant 0 : index
    %11 = vector.load %arg5[%c0_9, %c0_10] : memref<1x1024xf32, #tpu.memory_space<vmem>>, vector<1x1024xf32>
    %12 = vector.broadcast %11 : vector<1x1024xf32> to vector<16x1024xf32>
    %13 = arith.addf %10, %12 : vector<16x1024xf32>
    %cst_11 = arith.constant 0.000000e+00 : f32
    %14 = vector.broadcast %cst_11 : f32 to vector<16x1024xf32>
    %15 = arith.maximumf %13, %14 : vector<16x1024xf32>
    %16 = arith.truncf %15 : vector<16x1024xf32> to vector<16x1024xbf16>
    %c0_12 = arith.constant 0 : index
    %c0_13 = arith.constant 0 : index
    %17 = vector.load %arg6[%c0_12, %c0_13] : memref<1024x128xbf16, #tpu.memory_space<vmem>>, vector<1024x128xbf16>
    %cst_14 = arith.constant dense<0.000000e+00> : vector<16x128xf32>
    %18 = tpu.matmul %16, %17, %cst_14 {dimension_numbers = #tpu.dot_dimension_numbers<[1], [0], [0], [1], [0, 0, 1, 1], [], []>} : vector<16x1024xbf16>, vector<1024x128xbf16>, vector<16x128xf32> -> vector<16x128xf32>
    %c0_15 = arith.constant 0 : index
    %c0_16 = arith.constant 0 : index
    %19 = vector.load %arg7[%c0_15, %c0_16] : memref<1x128xf32, #tpu.memory_space<vmem>>, vector<1x128xf32>
    %20 = vector.broadcast %19 : vector<1x128xf32> to vector<16x128xf32>
    %21 = arith.addf %18, %20 : vector<16x128xf32>
    %22 = math.tanh %21 : vector<16x128xf32>
    %23 = arith.mulf %22, %22 : vector<16x128xf32>
    %cst_17 = arith.constant dense<0.000000e+00> : vector<16xf32>
    %24 = vector.multi_reduction <add>, %23, %cst_17 [1] : vector<16x128xf32> to vector<16xf32>
    %25 = vector.shape_cast %24 : vector<16xf32> to vector<16x1xf32>
    %cst_18 = arith.constant 9.99999996E-13 : f32
    %26 = vector.broadcast %cst_18 : f32 to vector<16x1xf32>
    %27 = arith.addf %25, %26 : vector<16x1xf32>
    %28 = math.rsqrt %27 : vector<16x1xf32>
    %29 = vector.broadcast %28 : vector<16x1xf32> to vector<16x128xf32>
    %30 = arith.mulf %22, %29 : vector<16x128xf32>
    %c0_19 = arith.constant 0 : index
    %c0_20 = arith.constant 0 : index
    %31 = vector.load %arg8[%c0_19, %c0_20] : memref<16x128xf32, #tpu.memory_space<vmem>>, vector<16x128xf32>
    tpu.vector_store %arg8[%c0_19, %c0_20], %30 {strides = array<i32>} : memref<16x128xf32, #tpu.memory_space<vmem>>, vector<16x128xf32>,
    return
  }
  func.func @transform_0(%arg0: i32) -> (i32, i32) {
    %c0_i32 = arith.constant 0 : i32
    %c0_i32_0 = arith.constant 0 : i32
    return %arg0, %c0_i32 : i32, i32
  }
  func.func @transform_1(%arg0: i32) -> (i32, i32) {
    %c0_i32 = arith.constant 0 : i32
    %c0_i32_0 = arith.constant 0 : i32
    %c0_i32_1 = arith.constant 0 : i32
    return %c0_i32, %c0_i32_0 : i32, i32
  }
  func.func @transform_2(%arg0: i32) -> (i32, i32) {
    %c0_i32 = arith.constant 0 : i32
    %c0_i32_0 = arith.constant 0 : i32
    %c0_i32_1 = arith.constant 0 : i32
    return %c0_i32, %c0_i32_0 : i32, i32
  }
  func.func @transform_3(%arg0: i32) -> (i32, i32) {
    %c0_i32 = arith.constant 0 : i32
    %c0_i32_0 = arith.constant 0 : i32
    %c0_i32_1 = arith.constant 0 : i32
    return %c0_i32, %c0_i32_0 : i32, i32
  }
  func.func @transform_4(%arg0: i32) -> (i32, i32) {
    %c0_i32 = arith.constant 0 : i32
    %c0_i32_0 = arith.constant 0 : i32
    %c0_i32_1 = arith.constant 0 : i32
    return %c0_i32, %c0_i32_0 : i32, i32
  }
  func.func @transform_5(%arg0: i32) -> (i32, i32) {
    %c0_i32 = arith.constant 0 : i32
    %c0_i32_0 = arith.constant 0 : i32
    %c0_i32_1 = arith.constant 0 : i32
    return %c0_i32, %c0_i32_0 : i32, i32
  }
  func.func @transform_6(%arg0: i32) -> (i32, i32) {
    %c0_i32 = arith.constant 0 : i32
    %c0_i32_0 = arith.constant 0 : i32
    %c0_i32_1 = arith.constant 0 : i32
    return %c0_i32, %c0_i32_0 : i32, i32
  }
  func.func @transform_7(%arg0: i32) -> (i32, i32) {
    %c0_i32 = arith.constant 0 : i32
    %c0_i32_0 = arith.constant 0 : i32
    return %arg0, %c0_i32 : i32, i32
  }
}

</mosaic_0001>

<llo_original>
// kernel: tpu_custom_call.1
$region0: #{tpu_custom_call.1}
  #allocation0 [shape = 'u32[]', space=smem, size = 0x4, offset = 0x4, fixed_abs, tag = 'smem constant byte address 0x4 - core index']
  #allocation1 [shape = 'u32[144,128]{1,0:T(1,128)}', space=vmem, size = 0x12000, scoped, tag = 'internal scratch']
  %s0 = inlined_call_operand.hbm [shape: bf16[16,128], index: 0, kind: input, shape index: {}]
  %s1 = inlined_call_operand.hbm [shape: bf16[128,1024], index: 1, kind: input, shape index: {}]
  %s2 = inlined_call_operand.hbm [shape: f32[1,1024], index: 2, kind: input, shape index: {}]
  %s3 = inlined_call_operand.hbm [shape: bf16[1024,1024], index: 3, kind: input, shape index: {}]
  %s4 = inlined_call_operand.hbm [shape: f32[1,1024], index: 4, kind: input, shape index: {}]
  %s5 = inlined_call_operand.hbm [shape: bf16[1024,128], index: 5, kind: input, shape index: {}]
  %s6 = inlined_call_operand.hbm [shape: f32[1,128], index: 6, kind: input, shape index: {}]
  %s7 = inlined_call_operand.hbm [shape: f32[16,128], index: 7, kind: output, shape index: {}]
  %s8 = sld [smem:[#allocation0]]
  $region66: #{tpu_custom_call.1} parent=0
    _
  %s10 = ssub.s32 1, %s8
  %s11 = scalar_select 0, %s10, %s8
  $region1: #{tpu_custom_call.1} parent=0
    #allocation2 [shape = 'u8[4096]{0}', space=vmem, size = 0x1000, scoped, tag = 'input window, operand 0, single buffered']
    #allocation3 [shape = 's32[1]{0}', space=sflag, size = 0x4, scoped, tag = 'scoped memory for tpu_custom_call.1']
    #allocation4 [shape = 's32[1]{0}', space=sflag, size = 0x4, scoped, tag = 'scoped memory for tpu_custom_call.1']
    #allocation5 [shape = 'u8[262144]{0}', space=vmem, size = 0x40000, scoped, tag = 'input window, operand 1, single buffered']
    #allocation6 [shape = 's32[1]{0}', space=sflag, size = 0x4, scoped, tag = 'scoped memory for tpu_custom_call.1']
    #allocation7 [shape = 'u8[4096]{0}', space=vmem, size = 0x1000, scoped, tag = 'input window, operand 2, single buffered']
    #allocation8 [shape = 'u8[2097152]{0}', space=vmem, size = 0x200000, scoped, tag = 'input window, operand 3, single buffered']
    #allocation9 [shape = 's32[1]{0}', space=sflag, size = 0x4, scoped, tag = 'scoped memory for tpu_custom_call.1']
    #allocation10 [shape = 'u8[4096]{0}', space=vmem, size = 0x1000, scoped, tag = 'input window, operand 4, single buffered']
    #allocation11 [shape = 'u8[262144]{0}', space=vmem, size = 0x40000, scoped, tag = 'input window, operand 5, single buffered']
    #allocation12 [shape = 's32[1]{0}', space=sflag, size = 0x4, scoped, tag = 'scoped memory for tpu_custom_call.1']
    #allocation13 [shape = 'u8[512]{0}', space=vmem, size = 0x400, scoped, tag = 'input window, operand 6, single buffered']
    #allocation14 [shape = 'u8[8192]{0}', space=vmem, size = 0x2000, scoped, tag = 'output window, operand 0, single buffered']
    %12 = vsyncpa [#allocation3], 0
    %13 = vsyncpa [#allocation6], 0
    %14 = vsyncpa [#allocation9], 0
    %15 = vsyncpa [#allocation12], 0
    %16 = vsyncpa [#allocation4], 0
    // Predicated region
    $region2: #{tpu_custom_call.1} parent=1 // pred_check
      _
    $region3: #{tpu_custom_call.1} parent=1 // pred_check_branch
      %18 = sbr.rel (0) target = $region5
    $region4: #{tpu_custom_call.1} parent=1 // pred_region
      %s20 = ssub.s32 128, 128
      %21 = vsyncadd [#allocation3], %s20
      %s22 = sshll.u32 [#allocation2], 4
      %s23 = int_to_ptr.vmem [resolvable:$true] %s22
      %28 = dma.hbm_to_vmem [thread:$0]  %s0, 128, %s23, [#allocation3], 64, 64, 4
    $region5: #{tpu_custom_call.1} parent=1 // pred_fallthru
      _
    // Predicated region
    $region6: #{tpu_custom_call.1} parent=1 // pred_check
      _
    $region7: #{tpu_custom_call.1} parent=1 // pred_check_branch
      %30 = sbr.rel (0) target = $region9
    $region8: #{tpu_custom_call.1} parent=1 // pred_region
      %s32 = ssub.s32 8192, 8192
      %33 = vsyncadd [#allocation6], %s32
      %s34 = sshll.u32 [#allocation5], 4
      %s35 = int_to_ptr.vmem [resolvable:$true] %s34
      %40 = dma.hbm_to_vmem [thread:$0]  %s1, 8192, %s35, [#allocation6], 512, 512, 32
    $region9: #{tpu_custom_call.1} parent=1 // pred_fallthru
      _
    // Predicated region
    $region10: #{tpu_custom_call.1} parent=1 // pred_check
      _
    $region11: #{tpu_custom_call.1} parent=1 // pred_check_branch
      %42 = sbr.rel (0) target = $region13
    $region12: #{tpu_custom_call.1} parent=1 // pred_region
      %s44 = ssub.s32 128, 128
      %45 = vsyncadd [#allocation6], %s44
      %s47 = sshll.u32 [#allocation7], 4
      %s48 = int_to_ptr.vmem [resolvable:$true] %s47
      %50 = dma.hbm_to_vmem [thread:$0]  %s2, 128, %s48, [#allocation6]
    $region13: #{tpu_custom_call.1} parent=1 // pred_fallthru
      _
    // Predicated region
    $region14: #{tpu_custom_call.1} parent=1 // pred_check
      _
    $region15: #{tpu_custom_call.1} parent=1 // pred_check_branch
      %52 = sbr.rel (0) target = $region17
    $region16: #{tpu_custom_call.1} parent=1 // pred_region
      %s54 = ssub.s32 65536, 65536
      %55 = vsyncadd [#allocation9], %s54
      %s56 = sshll.u32 [#allocation8], 4
      %s57 = int_to_ptr.vmem [resolvable:$true] %s56
      %62 = dma.hbm_to_vmem [thread:$0]  %s3, 65536, %s57, [#allocation9], 512, 512, 32
    $region17: #{tpu_custom_call.1} parent=1 // pred_fallthru
      _
    // Predicated region
    $region18: #{tpu_custom_call.1} parent=1 // pred_check
      _
    $region19: #{tpu_custom_call.1} parent=1 // pred_check_branch
      %64 = sbr.rel (0) target = $region21
    $region20: #{tpu_custom_call.1} parent=1 // pred_region
      %s66 = ssub.s32 128, 128
      %67 = vsyncadd [#allocation9], %s66
      %s69 = sshll.u32 [#allocation10], 4
      %s70 = int_to_ptr.vmem [resolvable:$true] %s69
      %72 = dma.hbm_to_vmem [thread:$0]  %s4, 128, %s70, [#allocation9]
    $region21: #{tpu_custom_call.1} parent=1 // pred_fallthru
      _
    // Predicated region
    $region22: #{tpu_custom_call.1} parent=1 // pred_check
      _
    $region23: #{tpu_custom_call.1} parent=1 // pred_check_branch
      %74 = sbr.rel (0) target = $region25
    $region24: #{tpu_custom_call.1} parent=1 // pred_region
      %s76 = ssub.s32 8192, 8192
      %77 = vsyncadd [#allocation12], %s76
      %s78 = sshll.u32 [#allocation11], 4
      %s79 = int_to_ptr.vmem [resolvable:$true] %s78
      %84 = dma.hbm_to_vmem [thread:$0]  %s5, 8192, %s79, [#allocation12], 64, 64, 4
    $region25: #{tpu_custom_call.1} parent=1 // pred_fallthru
      _
    // Predicated region
    $region26: #{tpu_custom_call.1} parent=1 // pred_check
      _
    $region27: #{tpu_custom_call.1} parent=1 // pred_check_branch
      %86 = sbr.rel (0) target = $region29
    $region28: #{tpu_custom_call.1} parent=1 // pred_region
      %s88 = ssub.s32 16, 16
      %89 = vsyncadd [#allocation12], %s88
      %s91 = sshll.u32 [#allocation13], 4
      %s92 = int_to_ptr.vmem [resolvable:$true] %s91
      %94 = dma.hbm_to_vmem [thread:$0]  %s6, 16, %s92, [#allocation12]
    $region29: #{tpu_custom_call.1} parent=1 // pred_fallthru
      _
    // Predicated region
    $region30: #{tpu_custom_call.1} parent=1 // pred_check
      _
    $region31: #{tpu_custom_call.1} parent=1 // pred_check_branch
      %96 = sbr.rel (0) target = $region33
    $region32: #{tpu_custom_call.1} parent=1 // pred_region
      %97 = dma.done [#allocation3], 128
    $region33: #{tpu_custom_call.1} parent=1 // pred_fallthru
      _
    // Predicated region
    $region34: #{tpu_custom_call.1} parent=1 // pred_check
      _
    $region35: #{tpu_custom_call.1} parent=1 // pred_check_branch
      %99 = sbr.rel (0) target = $region37
    $region36: #{tpu_custom_call.1} parent=1 // pred_region
      %100 = dma.done [#allocation6], 8192
    $region37: #{tpu_custom_call.1} parent=1 // pred_fallthru
      _
    // Predicated region
    $region38: #{tpu_custom_call.1} parent=1 // pred_check
      _
    $region39: #{tpu_custom_call.1} parent=1 // pred_check_branch
      %102 = sbr.rel (0) target = $region41
    $region40: #{tpu_custom_call.1} parent=1 // pred_region
      %103 = dma.done [#allocation6], 128
    $region41: #{tpu_custom_call.1} parent=1 // pred_fallthru
      _
    // Predicated region
    $region42: #{tpu_custom_call.1} parent=1 // pred_check
      _
    $region43: #{tpu_custom_call.1} parent=1 // pred_check_branch
      %105 = sbr.rel (0) target = $region45
    $region44: #{tpu_custom_call.1} parent=1 // pred_region
      %106 = dma.done [#allocation9], 65536
    $region45: #{tpu_custom_call.1} parent=1 // pred_fallthru
      _
    // Predicated region
    $region46: #{tpu_custom_call.1} parent=1 // pred_check
      _
    $region47: #{tpu_custom_call.1} parent=1 // pred_check_branch
      %108 = sbr.rel (0) target = $region49
    $region48: #{tpu_custom_call.1} parent=1 // pred_region
      %109 = dma.done [#allocation9], 128
    $region49: #{tpu_custom_call.1} parent=1 // pred_fallthru
      _
    // Predicated region
    $region50: #{tpu_custom_call.1} parent=1 // pred_check
      _
    $region51: #{tpu_custom_call.1} parent=1 // pred_check_branch
      %111 = sbr.rel (0) target = $region53
    $region52: #{tpu_custom_call.1} parent=1 // pred_region
      %112 = dma.done [#allocation12], 8192
    $region53: #{tpu_custom_call.1} parent=1 // pred_fallthru
      _
    // Predicated region
    $region54: #{tpu_custom_call.1} parent=1 // pred_check
      _
    $region55: #{tpu_custom_call.1} parent=1 // pred_check_branch
      %114 = sbr.rel (0) target = $region57
    $region56: #{tpu_custom_call.1} parent=1 // pred_region
      %115 = dma.done [#allocation12], 16
    $region57: #{tpu_custom_call.1} parent=1 // pred_fallthru
      _
    %v117 = vld [vmem:[#allocation2] sm:$0xf]
    %v118 = vld [vmem:[#allocation2 + $0x4] sm:$0xf]
    %v119 = vld [vmem:[#allocation5] sm:$0xff]
    %v120 = vld [vmem:[#allocation5 + $0x8] sm:$0xff]
    %v121 = vld [vmem:[#allocation5 + $0x10] sm:$0xff]
    %v122 = vld [vmem:[#allocation5 + $0x18] sm:$0xff]
    %v123 = vld [vmem:[#allocation5 + $0x20] sm:$0xff]
    %v124 = vld [vmem:[#allocation5 + $0x28] sm:$0xff]
    %v125 = vld [vmem:[#allocation5 + $0x30] sm:$0xff]
    %v126 = vld [vmem:[#allocation5 + $0x38] sm:$0xff]
    %v127 = vld [vmem:[#allocation5 + $0x40] sm:$0xff]
    %v128 = vld [vmem:[#allocation5 + $0x48] sm:$0xff]
    %v129 = vld [vmem:[#allocation5 + $0x50] sm:$0xff]
    %v130 = vld [vmem:[#allocation5 + $0x58] sm:$0xff]
    %v131 = vld [vmem:[#allocation5 + $0x60] sm:$0xff]
    %v132 = vld [vmem:[#allocation5 + $0x68] sm:$0xff]
    %v133 = vld [vmem:[#allocation5 + $0x70] sm:$0xff]
    %v134 = vld [vmem:[#allocation5 + $0x78] sm:$0xff]
    %v135 = vld [vmem:[#allocation5 + $0x80] sm:$0xff]
    %v136 = vld [vmem:[#allocation5 + $0x88] sm:$0xff]
    %v137 = vld [vmem:[#allocation5 + $0x90] sm:$0xff]
    %v138 = vld [vmem:[#allocation5 + $0x98] sm:$0xff]
    %v139 = vld [vmem:[#allocation5 + $0xa0] sm:$0xff]
    %v140 = vld [vmem:[#allocation5 + $0xa8] sm:$0xff]
    %v141 = vld [vmem:[#allocation5 + $0xb0] sm:$0xff]
    %v142 = vld [vmem:[#allocation5 + $0xb8] sm:$0xff]
    %v143 = vld [vmem:[#allocation5 + $0xc0] sm:$0xff]
    %v144 = vld [vmem:[#allocation5 + $0xc8] sm:$0xff]
    %v145 = vld [vmem:[#allocation5 + $0xd0] sm:$0xff]
    %v146 = vld [vmem:[#allocation5 + $0xd8] sm:$0xff]
    %v147 = vld [vmem:[#allocation5 + $0xe0] sm:$0xff]
    %v148 = vld [vmem:[#allocation5 + $0xe8] sm:$0xff]
    %v149 = vld [vmem:[#allocation5 + $0xf0] sm:$0xff]
    %v150 = vld [vmem:[#allocation5 + $0xf8] sm:$0xff]
    %v151 = vld [vmem:[#allocation5 + $0x100] sm:$0xff]
    %v152 = vld [vmem:[#allocation5 + $0x108] sm:$0xff]
    %v153 = vld [vmem:[#allocation5 + $0x110] sm:$0xff]
    %v154 = vld [vmem:[#allocation5 + $0x118] sm:$0xff]
    %v155 = vld [vmem:[#allocation5 + $0x120] sm:$0xff]
    %v156 = vld [vmem:[#allocation5 + $0x128] sm:$0xff]
    %v157 = vld [vmem:[#allocation5 + $0x130] sm:$0xff]
    %v158 = vld [vmem:[#allocation5 + $0x138] sm:$0xff]
    %v159 = vld [vmem:[#allocation5 + $0x140] sm:$0xff]
    %v160 = vld [vmem:[#allocation5 + $0x148] sm:$0xff]
    %v161 = vld [vmem:[#allocation5 + $0x150] sm:$0xff]
    %v162 = vld [vmem:[#allocation5 + $0x158] sm:$0xff]
    %v163 = vld [vmem:[#allocation5 + $0x160] sm:$0xff]
    %v164 = vld [vmem:[#allocation5 + $0x168] sm:$0xff]
    %v165 = vld [vmem:[#allocation5 + $0x170] sm:$0xff]
    %v166 = vld [vmem:[#allocation5 + $0x178] sm:$0xff]
    %v167 = vld [vmem:[#allocation5 + $0x180] sm:$0xff]
    %v168 = vld [vmem:[#allocation5 + $0x188] sm:$0xff]
    %v169 = vld [vmem:[#allocation5 + $0x190] sm:$0xff]
    %v170 = vld [vmem:[#allocation5 + $0x198] sm:$0xff]
    %v171 = vld [vmem:[#allocation5 + $0x1a0] sm:$0xff]
    %v172 = vld [vmem:[#allocation5 + $0x1a8] sm:$0xff]
    %v173 = vld [vmem:[#allocation5 + $0x1b0] sm:$0xff]
    %v174 = vld [vmem:[#allocation5 + $0x1b8] sm:$0xff]
    %v175 = vld [vmem:[#allocation5 + $0x1c0] sm:$0xff]
    %v176 = vld [vmem:[#allocation5 + $0x1c8] sm:$0xff]
    %v177 = vld [vmem:[#allocation5 + $0x1d0] sm:$0xff]
    %v178 = vld [vmem:[#allocation5 + $0x1d8] sm:$0xff]
    %v179 = vld [vmem:[#allocation5 + $0x1e0] sm:$0xff]
    %v180 = vld [vmem:[#allocation5 + $0x1e8] sm:$0xff]
    %v181 = vld [vmem:[#allocation5 + $0x1f0] sm:$0xff]
    %v182 = vld [vmem:[#allocation5 + $0x1f8] sm:$0xff]
    %v183 = vld [vmem:[#allocation7] sm:$0xff]
    %v185 = vlaneseq
    %v186 = vshrl.u32 %v185, 7
    %v187 = vsub.s32 0, %v186
    %v188 = vrot.slane %v183, %v187
    %v189 = vlaneseq
    %v190 = vshrl.u32 %v189, 7
    %v191 = vsub.s32 1, %v190
    %v192 = vrot.slane %v183, %v191
    %v193 = vlaneseq
    %v194 = vshrl.u32 %v193, 7
    %v195 = vsub.s32 2, %v194
    %v196 = vrot.slane %v183, %v195
    %v197 = vlaneseq
    %v198 = vshrl.u32 %v197, 7
    %v199 = vsub.s32 3, %v198
    %v200 = vrot.slane %v183, %v199
    %v201 = vlaneseq
    %v202 = vshrl.u32 %v201, 7
    %v203 = vsub.s32 4, %v202
    %v204 = vrot.slane %v183, %v203
    %v205 = vlaneseq
    %v206 = vshrl.u32 %v205, 7
    %v207 = vsub.s32 5, %v206
    %v208 = vrot.slane %v183, %v207
    %v209 = vlaneseq
    %v210 = vshrl.u32 %v209, 7
    %v211 = vsub.s32 6, %v210
    %v212 = vrot.slane %v183, %v211
    %v213 = vlaneseq
    %v214 = vshrl.u32 %v213, 7
    %v215 = vsub.s32 7, %v214
    %v216 = vrot.slane %v183, %v215
    %v227 = vunpack.c.l.b16 %v117
    %v228 = vunpack.c.l.b16 %v118
    %v229 = vpack.c.b16 %v228, %v227
    %v295 = vunpack.c.l.b16 %v119
    %v296 = vunpack.c.h.b16 %v119
    %v297 = vunpack.c.l.b16 %v120
    %v298 = vunpack.c.h.b16 %v120
    %v299 = vunpack.c.l.b16 %v121
    %v300 = vunpack.c.h.b16 %v121
    %v301 = vunpack.c.l.b16 %v122
    %v302 = vunpack.c.h.b16 %v122
    %v303 = vunpack.c.l.b16 %v123
    %v304 = vunpack.c.h.b16 %v123
    %v305 = vunpack.c.l.b16 %v124
    %v306 = vunpack.c.h.b16 %v124
    %v307 = vunpack.c.l.b16 %v125
    %v308 = vunpack.c.h.b16 %v125
    %v309 = vunpack.c.l.b16 %v126
    %v310 = vunpack.c.h.b16 %v126
    %v311 = vunpack.c.l.b16 %v127
    %v312 = vunpack.c.h.b16 %v127
    %v313 = vunpack.c.l.b16 %v128
    %v314 = vunpack.c.h.b16 %v128
    %v315 = vunpack.c.l.b16 %v129
    %v316 = vunpack.c.h.b16 %v129
    %v317 = vunpack.c.l.b16 %v130
    %v318 = vunpack.c.h.b16 %v130
    %v319 = vunpack.c.l.b16 %v131
    %v320 = vunpack.c.h.b16 %v131
    %v321 = vunpack.c.l.b16 %v132
    %v322 = vunpack.c.h.b16 %v132
    %v323 = vunpack.c.l.b16 %v133
    %v324 = vunpack.c.h.b16 %v133
    %v325 = vunpack.c.l.b16 %v134
    %v326 = vunpack.c.h.b16 %v134
    %v327 = vunpack.c.l.b16 %v135
    %v328 = vunpack.c.h.b16 %v135
    %v329 = vunpack.c.l.b16 %v136
    %v330 = vunpack.c.h.b16 %v136
    %v331 = vunpack.c.l.b16 %v137
    %v332 = vunpack.c.h.b16 %v137
    %v333 = vunpack.c.l.b16 %v138
    %v334 = vunpack.c.h.b16 %v138
    %v335 = vunpack.c.l.b16 %v139
    %v336 = vunpack.c.h.b16 %v139
    %v337 = vunpack.c.l.b16 %v140
    %v338 = vunpack.c.h.b16 %v140
    %v339 = vunpack.c.l.b16 %v141
    %v340 = vunpack.c.h.b16 %v141
    %v341 = vunpack.c.l.b16 %v142
    %v342 = vunpack.c.h.b16 %v142
    %v343 = vunpack.c.l.b16 %v143
    %v344 = vunpack.c.h.b16 %v143
    %v345 = vunpack.c.l.b16 %v144
    %v346 = vunpack.c.h.b16 %v144
    %v347 = vunpack.c.l.b16 %v145
    %v348 = vunpack.c.h.b16 %v145
    %v349 = vunpack.c.l.b16 %v146
    %v350 = vunpack.c.h.b16 %v146
    %v351 = vunpack.c.l.b16 %v147
    %v352 = vunpack.c.h.b16 %v147
    %v353 = vunpack.c.l.b16 %v148
    %v354 = vunpack.c.h.b16 %v148
    %v355 = vunpack.c.l.b16 %v149
    %v356 = vunpack.c.h.b16 %v149
    %v357 = vunpack.c.l.b16 %v150
    %v358 = vunpack.c.h.b16 %v150
    %v359 = vunpack.c.l.b16 %v151
    %v360 = vunpack.c.h.b16 %v151
    %v361 = vunpack.c.l.b16 %v152
    %v362 = vunpack.c.h.b16 %v152
    %v363 = vunpack.c.l.b16 %v153
    %v364 = vunpack.c.h.b16 %v153
    %v365 = vunpack.c.l.b16 %v154
    %v366 = vunpack.c.h.b16 %v154
    %v367 = vunpack.c.l.b16 %v155
    %v368 = vunpack.c.h.b16 %v155
    %v369 = vunpack.c.l.b16 %v156
    %v370 = vunpack.c.h.b16 %v156
    %v371 = vunpack.c.l.b16 %v157
    %v372 = vunpack.c.h.b16 %v157
    %v373 = vunpack.c.l.b16 %v158
    %v374 = vunpack.c.h.b16 %v158
    %v375 = vunpack.c.l.b16 %v159
    %v376 = vunpack.c.h.b16 %v159
    %v377 = vunpack.c.l.b16 %v160
    %v378 = vunpack.c.h.b16 %v160
    %v379 = vunpack.c.l.b16 %v161
    %v380 = vunpack.c.h.b16 %v161
    %v381 = vunpack.c.l.b16 %v162
    %v382 = vunpack.c.h.b16 %v162
    %v383 = vunpack.c.l.b16 %v163
    %v384 = vunpack.c.h.b16 %v163
    %v385 = vunpack.c.l.b16 %v164
    %v386 = vunpack.c.h.b16 %v164
    %v387 = vunpack.c.l.b16 %v165
    %v388 = vunpack.c.h.b16 %v165
    %v389 = vunpack.c.l.b16 %v166
    %v390 = vunpack.c.h.b16 %v166
    %v391 = vunpack.c.l.b16 %v167
    %v392 = vunpack.c.h.b16 %v167
    %v393 = vunpack.c.l.b16 %v168
    %v394 = vunpack.c.h.b16 %v168
    %v395 = vunpack.c.l.b16 %v169
    %v396 = vunpack.c.h.b16 %v169
    %v397 = vunpack.c.l.b16 %v170
    %v398 = vunpack.c.h.b16 %v170
    %v399 = vunpack.c.l.b16 %v171
    %v400 = vunpack.c.h.b16 %v171
    %v401 = vunpack.c.l.b16 %v172
    %v402 = vunpack.c.h.b16 %v172
    %v403 = vunpack.c.l.b16 %v173
    %v404 = vunpack.c.h.b16 %v173
    %v405 = vunpack.c.l.b16 %v174
    %v406 = vunpack.c.h.b16 %v174
    %v407 = vunpack.c.l.b16 %v175
    %v408 = vunpack.c.h.b16 %v175
    %v409 = vunpack.c.l.b16 %v176
    %v410 = vunpack.c.h.b16 %v176
    %v411 = vunpack.c.l.b16 %v177
    %v412 = vunpack.c.h.b16 %v177
    %v413 = vunpack.c.l.b16 %v178
    %v414 = vunpack.c.h.b16 %v178
    %v415 = vunpack.c.l.b16 %v179
    %v416 = vunpack.c.h.b16 %v179
    %v417 = vunpack.c.l.b16 %v180
    %v418 = vunpack.c.h.b16 %v180
    %v419 = vunpack.c.l.b16 %v181
    %v420 = vunpack.c.h.b16 %v181
    %v421 = vunpack.c.l.b16 %v182
    %v422 = vunpack.c.h.b16 %v182
    %v423 = vpack.c.b16 %v303, %v295
    %v424 = vpack.c.b16 %v304, %v296
    %v425 = vpack.c.b16 %v305, %v297
    %v426 = vpack.c.b16 %v306, %v298
    %v427 = vpack.c.b16 %v307, %v299
    %v428 = vpack.c.b16 %v308, %v300
    %v429 = vpack.c.b16 %v309, %v301
    %v430 = vpack.c.b16 %v310, %v302
    %v431 = vpack.c.b16 %v319, %v311
    %v432 = vpack.c.b16 %v320, %v312
    %v433 = vpack.c.b16 %v321, %v313
    %v434 = vpack.c.b16 %v322, %v314
    %v435 = vpack.c.b16 %v323, %v315
    %v436 = vpack.c.b16 %v324, %v316
    %v437 = vpack.c.b16 %v325, %v317
    %v438 = vpack.c.b16 %v326, %v318
    %v439 = vpack.c.b16 %v335, %v327
    %v440 = vpack.c.b16 %v336, %v328
    %v441 = vpack.c.b16 %v337, %v329
    %v442 = vpack.c.b16 %v338, %v330
    %v443 = vpack.c.b16 %v339, %v331
    %v444 = vpack.c.b16 %v340, %v332
    %v445 = vpack.c.b16 %v341, %v333
    %v446 = vpack.c.b16 %v342, %v334
    %v447 = vpack.c.b16 %v351, %v343
    %v448 = vpack.c.b16 %v352, %v344
    %v449 = vpack.c.b16 %v353, %v345
    %v450 = vpack.c.b16 %v354, %v346
    %v451 = vpack.c.b16 %v355, %v347
    %v452 = vpack.c.b16 %v356, %v348
    %v453 = vpack.c.b16 %v357, %v349
    %v454 = vpack.c.b16 %v358, %v350
    %v455 = vpack.c.b16 %v367, %v359
    %v456 = vpack.c.b16 %v368, %v360
    %v457 = vpack.c.b16 %v369, %v361
    %v458 = vpack.c.b16 %v370, %v362
    %v459 = vpack.c.b16 %v371, %v363
    %v460 = vpack.c.b16 %v372, %v364
    %v461 = vpack.c.b16 %v373, %v365
    %v462 = vpack.c.b16 %v374, %v366
    %v463 = vpack.c.b16 %v383, %v375
    %v464 = vpack.c.b16 %v384, %v376
    %v465 = vpack.c.b16 %v385, %v377
    %v466 = vpack.c.b16 %v386, %v378
    %v467 = vpack.c.b16 %v387, %v379
    %v468 = vpack.c.b16 %v388, %v380
    %v469 = vpack.c.b16 %v389, %v381
    %v470 = vpack.c.b16 %v390, %v382
    %v471 = vpack.c.b16 %v399, %v391
    %v472 = vpack.c.b16 %v400, %v392
    %v473 = vpack.c.b16 %v401, %v393
    %v474 = vpack.c.b16 %v402, %v394
    %v475 = vpack.c.b16 %v403, %v395
    %v476 = vpack.c.b16 %v404, %v396
    %v477 = vpack.c.b16 %v405, %v397
    %v478 = vpack.c.b16 %v406, %v398
    %v479 = vpack.c.b16 %v415, %v407
    %v480 = vpack.c.b16 %v416, %v408
    %v481 = vpack.c.b16 %v417, %v409
    %v482 = vpack.c.b16 %v418, %v410
    %v483 = vpack.c.b16 %v419, %v411
    %v484 = vpack.c.b16 %v420, %v412
    %v485 = vpack.c.b16 %v421, %v413
    %v486 = vpack.c.b16 %v422, %v414
    %551 = vmatprep.subr.bf16.mxu0 %v480
    %552 = vmatpush1.bf16.msra.mxu0 %v479
    %553 = vmatprep.subr.bf16.mxu0 %v472
    %554 = vmatpush1.bf16.msra.mxu0 %v471
    %555 = vmatprep.subr.bf16.mxu0 %v464
    %556 = vmatpush1.bf16.msra.mxu0 %v463
    %557 = vmatprep.subr.bf16.mxu0 %v456
    %558 = vmatpush1.bf16.msra.mxu0 %v455
    %559 = vmatprep.subr.bf16.mxu0 %v448
    %560 = vmatpush1.bf16.msra.mxu0 %v447
    %561 = vmatprep.subr.bf16.mxu0 %v440
    %562 = vmatpush1.bf16.msra.mxu0 %v439
    %563 = vmatprep.subr.bf16.mxu0 %v432
    %564 = vmatpush1.bf16.msra.mxu0 %v431
    %565 = vmatprep.subr.bf16.mxu0 %v424
    %566 = vmatpush1.bf16.msra.mxu0 %v423
    %567 = vmatprep.subr.bf16.mxu0 0
    %568 = vmatpush2.bf16.msra.mxu0 0
    %569 = vmatprep.subr.bf16.mxu0 0
    %570 = vmatpush2.bf16.msra.mxu0 0
    %571 = vmatprep.subr.bf16.mxu0 0
    %572 = vmatpush2.bf16.msra.mxu0 0
    %573 = vmatprep.subr.bf16.mxu0 0
    %574 = vmatpush2.bf16.msra.mxu0 0
    %575 = vmatprep.subr.bf16.mxu0 0
    %576 = vmatpush2.bf16.msra.mxu0 0
    %577 = vmatprep.subr.bf16.mxu0 0
    %578 = vmatpush2.bf16.msra.mxu0 0
    %579 = vmatprep.subr.bf16.mxu0 0
    %580 = vmatpush2.bf16.msra.mxu0 0
    %581 = vmatprep.subr.bf16.mxu0 0
    %582 = vmatpush2.bf16.msra.mxu0 0
    %583 = vmatprep.mubr.bf16.mxu0 0
    %584 = vmatmul.mubr.bf16.gmra.mxu0 %v229
    %v585 = vpop.f32.mrf.mxu0
    %v586 = vadd.f32 %v188, %v585
    %v587 = vpop.f32.mrf.mxu0
    %v588 = vadd.f32 %v192, %v587
    %v589 = vpop.f32.mrf.mxu0
    %v590 = vadd.f32 %v188, %v589
    %v591 = vpop.f32.mrf.mxu0
    %v592 = vadd.f32 %v192, %v591
    %593 = vdwg.mxu0
    %594 = vmatprep.subr.bf16.mxu0 %v482
    %595 = vmatpush1.bf16.msra.mxu0 %v481
    %596 = vmatprep.subr.bf16.mxu0 %v474
    %597 = vmatpush1.bf16.msra.mxu0 %v473
    %598 = vmatprep.subr.bf16.mxu0 %v466
    %599 = vmatpush1.bf16.msra.mxu0 %v465
    %600 = vmatprep.subr.bf16.mxu0 %v458
    %601 = vmatpush1.bf16.msra.mxu0 %v457
    %602 = vmatprep.subr.bf16.mxu0 %v450
    %603 = vmatpush1.bf16.msra.mxu0 %v449
    %604 = vmatprep.subr.bf16.mxu0 %v442
    %605 = vmatpush1.bf16.msra.mxu0 %v441
    %606 = vmatprep.subr.bf16.mxu0 %v434
    %607 = vmatpush1.bf16.msra.mxu0 %v433
    %608 = vmatprep.subr.bf16.mxu0 %v426
    %609 = vmatpush1.bf16.msra.mxu0 %v425
    %610 = vmatprep.subr.bf16.mxu0 0
    %611 = vmatpush2.bf16.msra.mxu0 0
    %612 = vmatprep.subr.bf16.mxu0 0
    %613 = vmatpush2.bf16.msra.mxu0 0
    %614 = vmatprep.subr.bf16.mxu0 0
    %615 = vmatpush2.bf16.msra.mxu0 0
    %616 = vmatprep.subr.bf16.mxu0 0
    %617 = vmatpush2.bf16.msra.mxu0 0
    %618 = vmatprep.subr.bf16.mxu0 0
    %619 = vmatpush2.bf16.msra.mxu0 0
    %620 = vmatprep.subr.bf16.mxu0 0
    %621 = vmatpush2.bf16.msra.mxu0 0
    %622 = vmatprep.subr.bf16.mxu0 0
    %623 = vmatpush2.bf16.msra.mxu0 0
    %624 = vmatprep.subr.bf16.mxu0 0
    %625 = vmatpush2.bf16.msra.mxu0 0
    %626 = vmatprep.mubr.bf16.mxu0 0
    %627 = vmatmul.mubr.bf16.gmra.mxu0 %v229
    %v628 = vpop.f32.mrf.mxu0
    %v629 = vadd.f32 %v196, %v628
    %v630 = vpop.f32.mrf.mxu0
    %v631 = vadd.f32 %v200, %v630
    %v632 = vpop.f32.mrf.mxu0
    %v633 = vadd.f32 %v196, %v632
    %v634 = vpop.f32.mrf.mxu0
    %v635 = vadd.f32 %v200, %v634
    %636 = vdwg.mxu0
    %637 = vmatprep.subr.bf16.mxu0 %v484
    %638 = vmatpush1.bf16.msra.mxu0 %v483
    %639 = vmatprep.subr.bf16.mxu0 %v476
    %640 = vmatpush1.bf16.msra.mxu0 %v475
    %641 = vmatprep.subr.bf16.mxu0 %v468
    %642 = vmatpush1.bf16.msra.mxu0 %v467
    %643 = vmatprep.subr.bf16.mxu0 %v460
    %644 = vmatpush1.bf16.msra.mxu0 %v459
    %645 = vmatprep.subr.bf16.mxu0 %v452
    %646 = vmatpush1.bf16.msra.mxu0 %v451
    %647 = vmatprep.subr.bf16.mxu0 %v444
    %648 = vmatpush1.bf16.msra.mxu0 %v443
    %649 = vmatprep.subr.bf16.mxu0 %v436
    %650 = vmatpush1.bf16.msra.mxu0 %v435
    %651 = vmatprep.subr.bf16.mxu0 %v428
    %652 = vmatpush1.bf16.msra.mxu0 %v427
    %653 = vmatprep.subr.bf16.mxu0 0
    %654 = vmatpush2.bf16.msra.mxu0 0
    %655 = vmatprep.subr.bf16.mxu0 0
    %656 = vmatpush2.bf16.msra.mxu0 0
    %657 = vmatprep.subr.bf16.mxu0 0
    %658 = vmatpush2.bf16.msra.mxu0 0
    %659 = vmatprep.subr.bf16.mxu0 0
    %660 = vmatpush2.bf16.msra.mxu0 0
    %661 = vmatprep.subr.bf16.mxu0 0
    %662 = vmatpush2.bf16.msra.mxu0 0
    %663 = vmatprep.subr.bf16.mxu0 0
    %664 = vmatpush2.bf16.msra.mxu0 0
    %665 = vmatprep.subr.bf16.mxu0 0
    %666 = vmatpush2.bf16.msra.mxu0 0
    %667 = vmatprep.subr.bf16.mxu0 0
    %668 = vmatpush2.bf16.msra.mxu0 0
    %669 = vmatprep.mubr.bf16.mxu0 0
    %670 = vmatmul.mubr.bf16.gmra.mxu0 %v229
    %v671 = vpop.f32.mrf.mxu0
    %v672 = vadd.f32 %v204, %v671
    %v673 = vpop.f32.mrf.mxu0
    %v674 = vadd.f32 %v208, %v673
    %v675 = vpop.f32.mrf.mxu0
    %v676 = vadd.f32 %v204, %v675
    %v677 = vpop.f32.mrf.mxu0
    %v678 = vadd.f32 %v208, %v677
    %679 = vdwg.mxu0
    %680 = vmatprep.subr.bf16.mxu0 %v486
    %681 = vmatpush1.bf16.msra.mxu0 %v485
    %682 = vmatprep.subr.bf16.mxu0 %v478
    %683 = vmatpush1.bf16.msra.mxu0 %v477
    %684 = vmatprep.subr.bf16.mxu0 %v470
    %685 = vmatpush1.bf16.msra.mxu0 %v469
    %686 = vmatprep.subr.bf16.mxu0 %v462
    %687 = vmatpush1.bf16.msra.mxu0 %v461
    %688 = vmatprep.subr.bf16.mxu0 %v454
    %689 = vmatpush1.bf16.msra.mxu0 %v453
    %690 = vmatprep.subr.bf16.mxu0 %v446
    %691 = vmatpush1.bf16.msra.mxu0 %v445
    %692 = vmatprep.subr.bf16.mxu0 %v438
    %693 = vmatpush1.bf16.msra.mxu0 %v437
    %694 = vmatprep.subr.bf16.mxu0 %v430
    %695 = vmatpush1.bf16.msra.mxu0 %v429
    %696 = vmatprep.subr.bf16.mxu0 0
    %697 = vmatpush2.bf16.msra.mxu0 0
    %698 = vmatprep.subr.bf16.mxu0 0
    %699 = vmatpush2.bf16.msra.mxu0 0
    %700 = vmatprep.subr.bf16.mxu0 0
    %701 = vmatpush2.bf16.msra.mxu0 0
    %702 = vmatprep.subr.bf16.mxu0 0
    %703 = vmatpush2.bf16.msra.mxu0 0
    %704 = vmatprep.subr.bf16.mxu0 0
    %705 = vmatpush2.bf16.msra.mxu0 0
    %706 = vmatprep.subr.bf16.mxu0 0
    %707 = vmatpush2.bf16.msra.mxu0 0
    %708 = vmatprep.subr.bf16.mxu0 0
    %709 = vmatpush2.bf16.msra.mxu0 0
    %710 = vmatprep.subr.bf16.mxu0 0
    %711 = vmatpush2.bf16.msra.mxu0 0
    %712 = vmatprep.mubr.bf16.mxu0 0
    %713 = vmatmul.mubr.bf16.gmra.mxu0 %v229
    %v714 = vpop.f32.mrf.mxu0
    %v715 = vadd.f32 %v212, %v714
    %v716 = vpop.f32.mrf.mxu0
    %v717 = vadd.f32 %v216, %v716
    %v718 = vpop.f32.mrf.mxu0
    %v719 = vadd.f32 %v212, %v718
    %v720 = vpop.f32.mrf.mxu0
    %v721 = vadd.f32 %v216, %v720
    %722 = vdwg.mxu0
    %v723 = vmax.f32 %v586, 0.0
    %v724 = vmax.f32 %v588, 0.0
    %v725 = vmax.f32 %v629, 0.0
    %v726 = vmax.f32 %v631, 0.0
    %v727 = vmax.f32 %v672, 0.0
    %v728 = vmax.f32 %v674, 0.0
    %v729 = vmax.f32 %v715, 0.0
    %v730 = vmax.f32 %v717, 0.0
    %v731 = vmax.f32 %v590, 0.0
    %v732 = vmax.f32 %v592, 0.0
    %v733 = vmax.f32 %v633, 0.0
    %v734 = vmax.f32 %v635, 0.0
    %v735 = vmax.f32 %v676, 0.0
    %v736 = vmax.f32 %v678, 0.0
    %v737 = vmax.f32 %v719, 0.0
    %v738 = vmax.f32 %v721, 0.0
    %v739 = vpack.c.bf16 %v731, %v723
    %v740 = vpack.c.bf16 %v732, %v724
    %v741 = vpack.c.bf16 %v733, %v725
    %v742 = vpack.c.bf16 %v734, %v726
    %v743 = vpack.c.bf16 %v735, %v727
    %v744 = vpack.c.bf16 %v736, %v728
    %v745 = vpack.c.bf16 %v737, %v729
    %v746 = vpack.c.bf16 %v738, %v730
    %v747 = vld [vmem:[#allocation8] sm:$0xff]
    %v748 = vld [vmem:[#allocation8 + $0x8] sm:$0xff]
    %v749 = vld [vmem:[#allocation8 + $0x10] sm:$0xff]
    %v750 = vld [vmem:[#allocation8 + $0x18] sm:$0xff]
    %v751 = vld [vmem:[#allocation8 + $0x20] sm:$0xff]
    %v752 = vld [vmem:[#allocation8 + $0x28] sm:$0xff]
    %v753 = vld [vmem:[#allocation8 + $0x30] sm:$0xff]
    %v754 = vld [vmem:[#allocation8 + $0x38] sm:$0xff]
    %v755 = vld [vmem:[#allocation8 + $0x40] sm:$0xff]
    %v756 = vld [vmem:[#allocation8 + $0x48] sm:$0xff]
    %v757 = vld [vmem:[#allocation8 + $0x50] sm:$0xff]
    %v758 = vld [vmem:[#allocation8 + $0x58] sm:$0xff]
    %v759 = vld [vmem:[#allocation8 + $0x60] sm:$0xff]
    %v760 = vld [vmem:[#allocation8 + $0x68] sm:$0xff]
    %v761 = vld [vmem:[#allocation8 + $0x70] sm:$0xff]
    %v762 = vld [vmem:[#allocation8 + $0x78] sm:$0xff]
    %v763 = vld [vmem:[#allocation8 + $0x80] sm:$0xff]
    %v764 = vld [vmem:[#allocation8 + $0x88] sm:$0xff]
    %v765 = vld [vmem:[#allocation8 + $0x90] sm:$0xff]
    %v766 = vld [vmem:[#allocation8 + $0x98] sm:$0xff]
    %v767 = vld [vmem:[#allocation8 + $0xa0] sm:$0xff]
    %v768 = vld [vmem:[#allocation8 + $0xa8] sm:$0xff]
    %v769 = vld [vmem:[#allocation8 + $0xb0] sm:$0xff]
    %v770 = vld [vmem:[#allocation8 + $0xb8] sm:$0xff]
    %v771 = vld [vmem:[#allocation8 + $0xc0] sm:$0xff]
    %v772 = vld [vmem:[#allocation8 + $0xc8] sm:$0xff]
    %v773 = vld [vmem:[#allocation8 + $0xd0] sm:$0xff]
    %v774 = vld [vmem:[#allocation8 + $0xd8] sm:$0xff]
    %v775 = vld [vmem:[#allocation8 + $0xe0] sm:$0xff]
    %v776 = vld [vmem:[#allocation8 + $0xe8] sm:$0xff]
    %v777 = vld [vmem:[#allocation8 + $0xf0] sm:$0xff]
    %v778 = vld [vmem:[#allocation8 + $0xf8] sm:$0xff]
    %v779 = vld [vmem:[#allocation8 + $0x100] sm:$0xff]
    %v780 = vld [vmem:[#allocation8 + $0x108] sm:$0xff]
    %v781 = vld [vmem:[#allocation8 + $0x110] sm:$0xff]
    %v782 = vld [vmem:[#allocation8 + $0x118] sm:$0xff]
    %v783 = vld [vmem:[#allocation8 + $0x120] sm:$0xff]
    %v784 = vld [vmem:[#allocation8 + $0x128] sm:$0xff]
    %v785 = vld [vmem:[#allocation8 + $0x130] sm:$0xff]
    %v786 = vld [vmem:[#allocation8 + $0x138] sm:$0xff]
    %v787 = vld [vmem:[#allocation8 + $0x140] sm:$0xff]
    %v788 = vld [vmem:[#allocation8 + $0x148] sm:$0xff]
    %v789 = vld [vmem:[#allocation8 + $0x150] sm:$0xff]
    %v790 = vld [vmem:[#allocation8 + $0x158] sm:$0xff]
    %v791 = vld [vmem:[#allocation8 + $0x160] sm:$0xff]
    %v792 = vld [vmem:[#allocation8 + $0x168] sm:$0xff]
    %v793 = vld [vmem:[#allocation8 + $0x170] sm:$0xff]
    %v794 = vld [vmem:[#allocation8 + $0x178] sm:$0xff]
    %v795 = vld [vmem:[#allocation8 + $0x180] sm:$0xff]
    %v796 = vld [vmem:[#allocation8 + $0x188] sm:$0xff]
    %v797 = vld [vmem:[#allocation8 + $0x190] sm:$0xff]
    %v798 = vld [vmem:[#allocation8 + $0x198] sm:$0xff]
    %v799 = vld [vmem:[#allocation8 + $0x1a0] sm:$0xff]
    %v800 = vld [vmem:[#allocation8 + $0x1a8] sm:$0xff]
    %v801 = vld [vmem:[#allocation8 + $0x1b0] sm:$0xff]
    %v802 = vld [vmem:[#allocation8 + $0x1b8] sm:$0xff]
    %v803 = vld [vmem:[#allocation8 + $0x1c0] sm:$0xff]
    %v804 = vld [vmem:[#allocation8 + $0x1c8] sm:$0xff]
    %v805 = vld [vmem:[#allocation8 + $0x1d0] sm:$0xff]
    %v806 = vld [vmem:[#allocation8 + $0x1d8] sm:$0xff]
    %v807 = vld [vmem:[#allocation8 + $0x1e0] sm:$0xff]
    %v808 = vld [vmem:[#allocation8 + $0x1e8] sm:$0xff]
    %v809 = vld [vmem:[#allocation8 + $0x1f0] sm:$0xff]
    %v810 = vld [vmem:[#allocation8 + $0x1f8] sm:$0xff]
    %v811 = vld [vmem:[#allocation8 + $0x200] sm:$0xff]
    %v812 = vld [vmem:[#allocation8 + $0x208] sm:$0xff]
    %v813 = vld [vmem:[#allocation8 + $0x210] sm:$0xff]
    %v814 = vld [vmem:[#allocation8 + $0x218] sm:$0xff]
    %v815 = vld [vmem:[#allocation8 + $0x220] sm:$0xff]
    %v816 = vld [vmem:[#allocation8 + $0x228] sm:$0xff]
    %v817 = vld [vmem:[#allocation8 + $0x230] sm:$0xff]
    %v818 = vld [vmem:[#allocation8 + $0x238] sm:$0xff]
    %v819 = vld [vmem:[#allocation8 + $0x240] sm:$0xff]
    %v820 = vld [vmem:[#allocation8 + $0x248] sm:$0xff]
    %v821 = vld [vmem:[#allocation8 + $0x250] sm:$0xff]
    %v822 = vld [vmem:[#allocation8 + $0x258] sm:$0xff]
    %v823 = vld [vmem:[#allocation8 + $0x260] sm:$0xff]
    %v824 = vld [vmem:[#allocation8 + $0x268] sm:$0xff]
    %v825 = vld [vmem:[#allocation8 + $0x270] sm:$0xff]
    %v826 = vld [vmem:[#allocation8 + $0x278] sm:$0xff]
    %v827 = vld [vmem:[#allocation8 + $0x280] sm:$0xff]
    %v828 = vld [vmem:[#allocation8 + $0x288] sm:$0xff]
    %v829 = vld [vmem:[#allocation8 + $0x290] sm:$0xff]
    %v830 = vld [vmem:[#allocation8 + $0x298] sm:$0xff]
    %v831 = vld [vmem:[#allocation8 + $0x2a0] sm:$0xff]
    %v832 = vld [vmem:[#allocation8 + $0x2a8] sm:$0xff]
    %v833 = vld [vmem:[#allocation8 + $0x2b0] sm:$0xff]
    %v834 = vld [vmem:[#allocation8 + $0x2b8] sm:$0xff]
    %v835 = vld [vmem:[#allocation8 + $0x2c0] sm:$0xff]
    %v836 = vld [vmem:[#allocation8 + $0x2c8] sm:$0xff]
    %v837 = vld [vmem:[#allocation8 + $0x2d0] sm:$0xff]
    %v838 = vld [vmem:[#allocation8 + $0x2d8] sm:$0xff]
    %v839 = vld [vmem:[#allocation8 + $0x2e0] sm:$0xff]
    %v840 = vld [vmem:[#allocation8 + $0x2e8] sm:$0xff]
    %v841 = vld [vmem:[#allocation8 + $0x2f0] sm:$0xff]
    %v842 = vld [vmem:[#allocation8 + $0x2f8] sm:$0xff]
    %v843 = vld [vmem:[#allocation8 + $0x300] sm:$0xff]
    %v844 = vld [vmem:[#allocation8 + $0x308] sm:$0xff]
    %v845 = vld [vmem:[#allocation8 + $0x310] sm:$0xff]
    %v846 = vld [vmem:[#allocation8 + $0x318] sm:$0xff]
    %v847 = vld [vmem:[#allocation8 + $0x320] sm:$0xff]
    %v848 = vld [vmem:[#allocation8 + $0x328] sm:$0xff]
    %v849 = vld [vmem:[#allocation8 + $0x330] sm:$0xff]
    %v850 = vld [vmem:[#allocation8 + $0x338] sm:$0xff]
    %v851 = vld [vmem:[#allocation8 + $0x340] sm:$0xff]
    %v852 = vld [vmem:[#allocation8 + $0x348] sm:$0xff]
    %v853 = vld [vmem:[#allocation8 + $0x350] sm:$0xff]
    %v854 = vld [vmem:[#allocation8 + $0x358] sm:$0xff]
    %v855 = vld [vmem:[#allocation8 + $0x360] sm:$0xff]
    %v856 = vld [vmem:[#allocation8 + $0x368] sm:$0xff]
    %v857 = vld [vmem:[#allocation8 + $0x370] sm:$0xff]
    %v858 = vld [vmem:[#allocation8 + $0x378] sm:$0xff]
    %v859 = vld [vmem:[#allocation8 + $0x380] sm:$0xff]
    %v860 = vld [vmem:[#allocation8 + $0x388] sm:$0xff]
    %v861 = vld [vmem:[#allocation8 + $0x390] sm:$0xff]
    %v862 = vld [vmem:[#allocation8 + $0x398] sm:$0xff]
    %v863 = vld [vmem:[#allocation8 + $0x3a0] sm:$0xff]
    %v864 = vld [vmem:[#allocation8 + $0x3a8] sm:$0xff]
    %v865 = vld [vmem:[#allocation8 + $0x3b0] sm:$0xff]
    %v866 = vld [vmem:[#allocation8 + $0x3b8] sm:$0xff]
    %v867 = vld [vmem:[#allocation8 + $0x3c0] sm:$0xff]
    %v868 = vld [vmem:[#allocation8 + $0x3c8] sm:$0xff]
    %v869 = vld [vmem:[#allocation8 + $0x3d0] sm:$0xff]
    %v870 = vld [vmem:[#allocation8 + $0x3d8] sm:$0xff]
    %v871 = vld [vmem:[#allocation8 + $0x3e0] sm:$0xff]
    %v872 = vld [vmem:[#allocation8 + $0x3e8] sm:$0xff]
    %v873 = vld [vmem:[#allocation8 + $0x3f0] sm:$0xff]
    %v874 = vld [vmem:[#allocation8 + $0x3f8] sm:$0xff]
    %v875 = vld [vmem:[#allocation8 + $0x400] sm:$0xff]
    %v876 = vld [vmem:[#allocation8 + $0x408] sm:$0xff]
    %v877 = vld [vmem:[#allocation8 + $0x410] sm:$0xff]
    %v878 = vld [vmem:[#allocation8 + $0x418] sm:$0xff]
    %v879 = vld [vmem:[#allocation8 + $0x420] sm:$0xff]
    %v880 = vld [vmem:[#allocation8 + $0x428] sm:$0xff]
    %v881 = vld [vmem:[#allocation8 + $0x430] sm:$0xff]
    %v882 = vld [vmem:[#allocation8 + $0x438] sm:$0xff]
    %v883 = vld [vmem:[#allocation8 + $0x440] sm:$0xff]
    %v884 = vld [vmem:[#allocation8 + $0x448] sm:$0xff]
    %v885 = vld [vmem:[#allocation8 + $0x450] sm:$0xff]
    %v886 = vld [vmem:[#allocation8 + $0x458] sm:$0xff]
    %v887 = vld [vmem:[#allocation8 + $0x460] sm:$0xff]
    %v888 = vld [vmem:[#allocation8 + $0x468] sm:$0xff]
    %v889 = vld [vmem:[#allocation8 + $0x470] sm:$0xff]
    %v890 = vld [vmem:[#allocation8 + $0x478] sm:$0xff]
    %v891 = vld [vmem:[#allocation8 + $0x480] sm:$0xff]
    %v892 = vld [vmem:[#allocation8 + $0x488] sm:$0xff]
    %v893 = vld [vmem:[#allocation8 + $0x490] sm:$0xff]
    %v894 = vld [vmem:[#allocation8 + $0x498] sm:$0xff]
    %v895 = vld [vmem:[#allocation8 + $0x4a0] sm:$0xff]
    %v896 = vld [vmem:[#allocation8 + $0x4a8] sm:$0xff]
    %v897 = vld [vmem:[#allocation8 + $0x4b0] sm:$0xff]
    %v898 = vld [vmem:[#allocation8 + $0x4b8] sm:$0xff]
    %v899 = vld [vmem:[#allocation8 + $0x4c0] sm:$0xff]
    %v900 = vld [vmem:[#allocation8 + $0x4c8] sm:$0xff]
    %v901 = vld [vmem:[#allocation8 + $0x4d0] sm:$0xff]
    %v902 = vld [vmem:[#allocation8 + $0x4d8] sm:$0xff]
    %v903 = vld [vmem:[#allocation8 + $0x4e0] sm:$0xff]
    %v904 = vld [vmem:[#allocation8 + $0x4e8] sm:$0xff]
    %v905 = vld [vmem:[#allocation8 + $0x4f0] sm:$0xff]
    %v906 = vld [vmem:[#allocation8 + $0x4f8] sm:$0xff]
    %v907 = vld [vmem:[#allocation8 + $0x500] sm:$0xff]
    %v908 = vld [vmem:[#allocation8 + $0x508] sm:$0xff]
    %v909 = vld [vmem:[#allocation8 + $0x510] sm:$0xff]
    %v910 = vld [vmem:[#allocation8 + $0x518] sm:$0xff]
    %v911 = vld [vmem:[#allocation8 + $0x520] sm:$0xff]
    %v912 = vld [vmem:[#allocation8 + $0x528] sm:$0xff]
    %v913 = vld [vmem:[#allocation8 + $0x530] sm:$0xff]
    %v914 = vld [vmem:[#allocation8 + $0x538] sm:$0xff]
    %v915 = vld [vmem:[#allocation8 + $0x540] sm:$0xff]
    %v916 = vld [vmem:[#allocation8 + $0x548] sm:$0xff]
    %v917 = vld [vmem:[#allocation8 + $0x550] sm:$0xff]
    %v918 = vld [vmem:[#allocation8 + $0x558] sm:$0xff]
    %v919 = vld [vmem:[#allocation8 + $0x560] sm:$0xff]
    %v920 = vld [vmem:[#allocation8 + $0x568] sm:$0xff]
    %v921 = vld [vmem:[#allocation8 + $0x570] sm:$0xff]
    %v922 = vld [vmem:[#allocation8 + $0x578] sm:$0xff]
    %v923 = vld [vmem:[#allocation8 + $0x580] sm:$0xff]
    %v924 = vld [vmem:[#allocation8 + $0x588] sm:$0xff]
    %v925 = vld [vmem:[#allocation8 + $0x590] sm:$0xff]
    %v926 = vld [vmem:[#allocation8 + $0x598] sm:$0xff]
    %v927 = vld [vmem:[#allocation8 + $0x5a0] sm:$0xff]
    %v928 = vld [vmem:[#allocation8 + $0x5a8] sm:$0xff]
    %v929 = vld [vmem:[#allocation8 + $0x5b0] sm:$0xff]
    %v930 = vld [vmem:[#allocation8 + $0x5b8] sm:$0xff]
    %v931 = vld [vmem:[#allocation8 + $0x5c0] sm:$0xff]
    %v932 = vld [vmem:[#allocation8 + $0x5c8] sm:$0xff]
    %v933 = vld [vmem:[#allocation8 + $0x5d0] sm:$0xff]
    %v934 = vld [vmem:[#allocation8 + $0x5d8] sm:$0xff]
    %v935 = vld [vmem:[#allocation8 + $0x5e0] sm:$0xff]
    %v936 = vld [vmem:[#allocation8 + $0x5e8] sm:$0xff]
    %v937 = vld [vmem:[#allocation8 + $0x5f0] sm:$0xff]
    %v938 = vld [vmem:[#allocation8 + $0x5f8] sm:$0xff]
    %v939 = vld [vmem:[#allocation8 + $0x600] sm:$0xff]
    %v940 = vld [vmem:[#allocation8 + $0x608] sm:$0xff]
    %v941 = vld [vmem:[#allocation8 + $0x610] sm:$0xff]
    %v942 = vld [vmem:[#allocation8 + $0x618] sm:$0xff]
    %v943 = vld [vmem:[#allocation8 + $0x620] sm:$0xff]
    %v944 = vld [vmem:[#allocation8 + $0x628] sm:$0xff]
    %v945 = vld [vmem:[#allocation8 + $0x630] sm:$0xff]
    %v946 = vld [vmem:[#allocation8 + $0x638] sm:$0xff]
    %v947 = vld [vmem:[#allocation8 + $0x640] sm:$0xff]
    %v948 = vld [vmem:[#allocation8 + $0x648] sm:$0xff]
    %v949 = vld [vmem:[#allocation8 + $0x650] sm:$0xff]
    %v950 = vld [vmem:[#allocation8 + $0x658] sm:$0xff]
    %v951 = vld [vmem:[#allocation8 + $0x660] sm:$0xff]
    %v952 = vld [vmem:[#allocation8 + $0x668] sm:$0xff]
    %v953 = vld [vmem:[#allocation8 + $0x670] sm:$0xff]
    %v954 = vld [vmem:[#allocation8 + $0x678] sm:$0xff]
    %v955 = vld [vmem:[#allocation8 + $0x680] sm:$0xff]
    %v956 = vld [vmem:[#allocation8 + $0x688] sm:$0xff]
    %v957 = vld [vmem:[#allocation8 + $0x690] sm:$0xff]
    %v958 = vld [vmem:[#allocation8 + $0x698] sm:$0xff]
    %v959 = vld [vmem:[#allocation8 + $0x6a0] sm:$0xff]
    %v960 = vld [vmem:[#allocation8 + $0x6a8] sm:$0xff]
    %v961 = vld [vmem:[#allocation8 + $0x6b0] sm:$0xff]
    %v962 = vld [vmem:[#allocation8 + $0x6b8] sm:$0xff]
    %v963 = vld [vmem:[#allocation8 + $0x6c0] sm:$0xff]
    %v964 = vld [vmem:[#allocation8 + $0x6c8] sm:$0xff]
    %v965 = vld [vmem:[#allocation8 + $0x6d0] sm:$0xff]
    %v966 = vld [vmem:[#allocation8 + $0x6d8] sm:$0xff]
    %v967 = vld [vmem:[#allocation8 + $0x6e0] sm:$0xff]
    %v968 = vld [vmem:[#allocation8 + $0x6e8] sm:$0xff]
    %v969 = vld [vmem:[#allocation8 + $0x6f0] sm:$0xff]
    %v970 = vld [vmem:[#allocation8 + $0x6f8] sm:$0xff]
    %v971 = vld [vmem:[#allocation8 + $0x700] sm:$0xff]
    %v972 = vld [vmem:[#allocation8 + $0x708] sm:$0xff]
    %v973 = vld [vmem:[#allocation8 + $0x710] sm:$0xff]
    %v974 = vld [vmem:[#allocation8 + $0x718] sm:$0xff]
    %v975 = vld [vmem:[#allocation8 + $0x720] sm:$0xff]
    %v976 = vld [vmem:[#allocation8 + $0x728] sm:$0xff]
    %v977 = vld [vmem:[#allocation8 + $0x730] sm:$0xff]
    %v978 = vld [vmem:[#allocation8 + $0x738] sm:$0xff]
    %v979 = vld [vmem:[#allocation8 + $0x740] sm:$0xff]
    %v980 = vld [vmem:[#allocation8 + $0x748] sm:$0xff]
    %v981 = vld [vmem:[#allocation8 + $0x750] sm:$0xff]
    %v982 = vld [vmem:[#allocation8 + $0x758] sm:$0xff]
    %v983 = vld [vmem:[#allocation8 + $0x760] sm:$0xff]
    %v984 = vld [vmem:[#allocation8 + $0x768] sm:$0xff]
    %v985 = vld [vmem:[#allocation8 + $0x770] sm:$0xff]
    %v986 = vld [vmem:[#allocation8 + $0x778] sm:$0xff]
    %v987 = vld [vmem:[#allocation8 + $0x780] sm:$0xff]
    %v988 = vld [vmem:[#allocation8 + $0x788] sm:$0xff]
    %v989 = vld [vmem:[#allocation8 + $0x790] sm:$0xff]
    %v990 = vld [vmem:[#allocation8 + $0x798] sm:$0xff]
    %v991 = vld [vmem:[#allocation8 + $0x7a0] sm:$0xff]
    %v992 = vld [vmem:[#allocation8 + $0x7a8] sm:$0xff]
    %v993 = vld [vmem:[#allocation8 + $0x7b0] sm:$0xff]
    %v994 = vld [vmem:[#allocation8 + $0x7b8] sm:$0xff]
    %v995 = vld [vmem:[#allocation8 + $0x7c0] sm:$0xff]
    %v996 = vld [vmem:[#allocation8 + $0x7c8] sm:$0xff]
    %v997 = vld [vmem:[#allocation8 + $0x7d0] sm:$0xff]
    %v998 = vld [vmem:[#allocation8 + $0x7d8] sm:$0xff]
    %v999 = vld [vmem:[#allocation8 + $0x7e0] sm:$0xff]
    %v1000 = vld [vmem:[#allocation8 + $0x7e8] sm:$0xff]
    %v1001 = vld [vmem:[#allocation8 + $0x7f0] sm:$0xff]
    %v1002 = vld [vmem:[#allocation8 + $0x7f8] sm:$0xff]
    %v1003 = vld [vmem:[#allocation8 + $0x800] sm:$0xff]
    %v1004 = vld [vmem:[#allocation8 + $0x808] sm:$0xff]
    %v1005 = vld [vmem:[#allocation8 + $0x810] sm:$0xff]
    %v1006 = vld [vmem:[#allocation8 + $0x818] sm:$0xff]
    %v1007 = vld [vmem:[#allocation8 + $0x820] sm:$0xff]
    %v1008 = vld [vmem:[#allocation8 + $0x828] sm:$0xff]
    %v1009 = vld [vmem:[#allocation8 + $0x830] sm:$0xff]
    %v1010 = vld [vmem:[#allocation8 + $0x838] sm:$0xff]
    %v1011 = vld [vmem:[#allocation8 + $0x840] sm:$0xff]
    %v1012 = vld [vmem:[#allocation8 + $0x848] sm:$0xff]
    %v1013 = vld [vmem:[#allocation8 + $0x850] sm:$0xff]
    %v1014 = vld [vmem:[#allocation8 + $0x858] sm:$0xff]
    %v1015 = vld [vmem:[#allocation8 + $0x860] sm:$0xff]
    %v1016 = vld [vmem:[#allocation8 + $0x868] sm:$0xff]
    %v1017 = vld [vmem:[#allocation8 + $0x870] sm:$0xff]
    %v1018 = vld [vmem:[#allocation8 + $0x878] sm:$0xff]
    %v1019 = vld [vmem:[#allocation8 + $0x880] sm:$0xff]
    %v1020 = vld [vmem:[#allocation8 + $0x888] sm:$0xff]
    %v1021 = vld [vmem:[#allocation8 + $0x890] sm:$0xff]
    %v1022 = vld [vmem:[#allocation8 + $0x898] sm:$0xff]
    %v1023 = vld [vmem:[#allocation8 + $0x8a0] sm:$0xff]
    %v1024 = vld [vmem:[#allocation8 + $0x8a8] sm:$0xff]
    %v1025 = vld [vmem:[#allocation8 + $0x8b0] sm:$0xff]
    %v1026 = vld [vmem:[#allocation8 + $0x8b8] sm:$0xff]
    %v1027 = vld [vmem:[#allocation8 + $0x8c0] sm:$0xff]
    %v1028 = vld [vmem:[#allocation8 + $0x8c8] sm:$0xff]
    %v1029 = vld [vmem:[#allocation8 + $0x8d0] sm:$0xff]
    %v1030 = vld [vmem:[#allocation8 + $0x8d8] sm:$0xff]
    %v1031 = vld [vmem:[#allocation8 + $0x8e0] sm:$0xff]
    %v1032 = vld [vmem:[#allocation8 + $0x8e8] sm:$0xff]
    %v1033 = vld [vmem:[#allocation8 + $0x8f0] sm:$0xff]
    %v1034 = vld [vmem:[#allocation8 + $0x8f8] sm:$0xff]
    %v1035 = vld [vmem:[#allocation8 + $0x900] sm:$0xff]
    %v1036 = vld [vmem:[#allocation8 + $0x908] sm:$0xff]
    %v1037 = vld [vmem:[#allocation8 + $0x910] sm:$0xff]
    %v1038 = vld [vmem:[#allocation8 + $0x918] sm:$0xff]
    %v1039 = vld [vmem:[#allocation8 + $0x920] sm:$0xff]
    %v1040 = vld [vmem:[#allocation8 + $0x928] sm:$0xff]
    %v1041 = vld [vmem:[#allocation8 + $0x930] sm:$0xff]
    %v1042 = vld [vmem:[#allocation8 + $0x938] sm:$0xff]
    %v1043 = vld [vmem:[#allocation8 + $0x940] sm:$0xff]
    %v1044 = vld [vmem:[#allocation8 + $0x948] sm:$0xff]
    %v1045 = vld [vmem:[#allocation8 + $0x950] sm:$0xff]
    %v1046 = vld [vmem:[#allocation8 + $0x958] sm:$0xff]
    %v1047 = vld [vmem:[#allocation8 + $0x960] sm:$0xff]
    %v1048 = vld [vmem:[#allocation8 + $0x968] sm:$0xff]
    %v1049 = vld [vmem:[#allocation8 + $0x970] sm:$0xff]
    %v1050 = vld [vmem:[#allocation8 + $0x978] sm:$0xff]
    %v1051 = vld [vmem:[#allocation8 + $0x980] sm:$0xff]
    %v1052 = vld [vmem:[#allocation8 + $0x988] sm:$0xff]
    %v1053 = vld [vmem:[#allocation8 + $0x990] sm:$0xff]
    %v1054 = vld [vmem:[#allocation8 + $0x998] sm:$0xff]
    %v1055 = vld [vmem:[#allocation8 + $0x9a0] sm:$0xff]
    %v1056 = vld [vmem:[#allocation8 + $0x9a8] sm:$0xff]
    %v1057 = vld [vmem:[#allocation8 + $0x9b0] sm:$0xff]
    %v1058 = vld [vmem:[#allocation8 + $0x9b8] sm:$0xff]
    %v1059 = vld [vmem:[#allocation8 + $0x9c0] sm:$0xff]
    %v1060 = vld [vmem:[#allocation8 + $0x9c8] sm:$0xff]
    %v1061 = vld [vmem:[#allocation8 + $0x9d0] sm:$0xff]
    %v1062 = vld [vmem:[#allocation8 + $0x9d8] sm:$0xff]
    %v1063 = vld [vmem:[#allocation8 + $0x9e0] sm:$0xff]
    %v1064 = vld [vmem:[#allocation8 + $0x9e8] sm:$0xff]
    %v1065 = vld [vmem:[#allocation8 + $0x9f0] sm:$0xff]
    %v1066 = vld [vmem:[#allocation8 + $0x9f8] sm:$0xff]
    %v1067 = vld [vmem:[#allocation8 + $0xa00] sm:$0xff]
    %v1068 = vld [vmem:[#allocation8 + $0xa08] sm:$0xff]
    %v1069 = vld [vmem:[#allocation8 + $0xa10] sm:$0xff]
    %v1070 = vld [vmem:[#allocation8 + $0xa18] sm:$0xff]
    %v1071 = vld [vmem:[#allocation8 + $0xa20] sm:$0xff]
    %v1072 = vld [vmem:[#allocation8 + $0xa28] sm:$0xff]
    %v1073 = vld [vmem:[#allocation8 + $0xa30] sm:$0xff]
    %v1074 = vld [vmem:[#allocation8 + $0xa38] sm:$0xff]
    %v1075 = vld [vmem:[#allocation8 + $0xa40] sm:$0xff]
    %v1076 = vld [vmem:[#allocation8 + $0xa48] sm:$0xff]
    %v1077 = vld [vmem:[#allocation8 + $0xa50] sm:$0xff]
    %v1078 = vld [vmem:[#allocation8 + $0xa58] sm:$0xff]
    %v1079 = vld [vmem:[#allocation8 + $0xa60] sm:$0xff]
    %v1080 = vld [vmem:[#allocation8 + $0xa68] sm:$0xff]
    %v1081 = vld [vmem:[#allocation8 + $0xa70] sm:$0xff]
    %v1082 = vld [vmem:[#allocation8 + $0xa78] sm:$0xff]
    %v1083 = vld [vmem:[#allocation8 + $0xa80] sm:$0xff]
    %v1084 = vld [vmem:[#allocation8 + $0xa88] sm:$0xff]
    %v1085 = vld [vmem:[#allocation8 + $0xa90] sm:$0xff]
    %v1086 = vld [vmem:[#allocation8 + $0xa98] sm:$0xff]
    %v1087 = vld [vmem:[#allocation8 + $0xaa0] sm:$0xff]
    %v1088 = vld [vmem:[#allocation8 + $0xaa8] sm:$0xff]
    %v1089 = vld [vmem:[#allocation8 + $0xab0] sm:$0xff]
    %v1090 = vld [vmem:[#allocation8 + $0xab8] sm:$0xff]
    %v1091 = vld [vmem:[#allocation8 + $0xac0] sm:$0xff]
    %v1092 = vld [vmem:[#allocation8 + $0xac8] sm:$0xff]
    %v1093 = vld [vmem:[#allocation8 + $0xad0] sm:$0xff]
    %v1094 = vld [vmem:[#allocation8 + $0xad8] sm:$0xff]
    %v1095 = vld [vmem:[#allocation8 + $0xae0] sm:$0xff]
    %v1096 = vld [vmem:[#allocation8 + $0xae8] sm:$0xff]
    %v1097 = vld [vmem:[#allocation8 + $0xaf0] sm:$0xff]
    %v1098 = vld [vmem:[#allocation8 + $0xaf8] sm:$0xff]
    %v1099 = vld [vmem:[#allocation8 + $0xb00] sm:$0xff]
    %v1100 = vld [vmem:[#allocation8 + $0xb08] sm:$0xff]
    %v1101 = vld [vmem:[#allocation8 + $0xb10] sm:$0xff]
    %v1102 = vld [vmem:[#allocation8 + $0xb18] sm:$0xff]
    %v1103 = vld [vmem:[#allocation8 + $0xb20] sm:$0xff]
    %v1104 = vld [vmem:[#allocation8 + $0xb28] sm:$0xff]
    %v1105 = vld [vmem:[#allocation8 + $0xb30] sm:$0xff]
    %v1106 = vld [vmem:[#allocation8 + $0xb38] sm:$0xff]
    %v1107 = vld [vmem:[#allocation8 + $0xb40] sm:$0xff]
    %v1108 = vld [vmem:[#allocation8 + $0xb48] sm:$0xff]
    %v1109 = vld [vmem:[#allocation8 + $0xb50] sm:$0xff]
    %v1110 = vld [vmem:[#allocation8 + $0xb58] sm:$0xff]
    %v1111 = vld [vmem:[#allocation8 + $0xb60] sm:$0xff]
    %v1112 = vld [vmem:[#allocation8 + $0xb68] sm:$0xff]
    %v1113 = vld [vmem:[#allocation8 + $0xb70] sm:$0xff]
    %v1114 = vld [vmem:[#allocation8 + $0xb78] sm:$0xff]
    %v1115 = vld [vmem:[#allocation8 + $0xb80] sm:$0xff]
    %v1116 = vld [vmem:[#allocation8 + $0xb88] sm:$0xff]
    %v1117 = vld [vmem:[#allocation8 + $0xb90] sm:$0xff]
    %v1118 = vld [vmem:[#allocation8 + $0xb98] sm:$0xff]
    %v1119 = vld [vmem:[#allocation8 + $0xba0] sm:$0xff]
    %v1120 = vld [vmem:[#allocation8 + $0xba8] sm:$0xff]
    %v1121 = vld [vmem:[#allocation8 + $0xbb0] sm:$0xff]
    %v1122 = vld [vmem:[#allocation8 + $0xbb8] sm:$0xff]
    %v1123 = vld [vmem:[#allocation8 + $0xbc0] sm:$0xff]
    %v1124 = vld [vmem:[#allocation8 + $0xbc8] sm:$0xff]
    %v1125 = vld [vmem:[#allocation8 + $0xbd0] sm:$0xff]
    %v1126 = vld [vmem:[#allocation8 + $0xbd8] sm:$0xff]
    %v1127 = vld [vmem:[#allocation8 + $0xbe0] sm:$0xff]
    %v1128 = vld [vmem:[#allocation8 + $0xbe8] sm:$0xff]
    %v1129 = vld [vmem:[#allocation8 + $0xbf0] sm:$0xff]
    %v1130 = vld [vmem:[#allocation8 + $0xbf8] sm:$0xff]
    %v1131 = vld [vmem:[#allocation8 + $0xc00] sm:$0xff]
    %v1132 = vld [vmem:[#allocation8 + $0xc08] sm:$0xff]
    %v1133 = vld [vmem:[#allocation8 + $0xc10] sm:$0xff]
    %v1134 = vld [vmem:[#allocation8 + $0xc18] sm:$0xff]
    %v1135 = vld [vmem:[#allocation8 + $0xc20] sm:$0xff]
    %v1136 = vld [vmem:[#allocation8 + $0xc28] sm:$0xff]
    %v1137 = vld [vmem:[#allocation8 + $0xc30] sm:$0xff]
    %v1138 = vld [vmem:[#allocation8 + $0xc38] sm:$0xff]
    %v1139 = vld [vmem:[#allocation8 + $0xc40] sm:$0xff]
    %v1140 = vld [vmem:[#allocation8 + $0xc48] sm:$0xff]
    %v1141 = vld [vmem:[#allocation8 + $0xc50] sm:$0xff]
    %v1142 = vld [vmem:[#allocation8 + $0xc58] sm:$0xff]
    %v1143 = vld [vmem:[#allocation8 + $0xc60] sm:$0xff]
    %v1144 = vld [vmem:[#allocation8 + $0xc68] sm:$0xff]
    %v1145 = vld [vmem:[#allocation8 + $0xc70] sm:$0xff]
    %v1146 = vld [vmem:[#allocation8 + $0xc78] sm:$0xff]
    %v1147 = vld [vmem:[#allocation8 + $0xc80] sm:$0xff]
    %v1148 = vld [vmem:[#allocation8 + $0xc88] sm:$0xff]
    %v1149 = vld [vmem:[#allocation8 + $0xc90] sm:$0xff]
    %v1150 = vld [vmem:[#allocation8 + $0xc98] sm:$0xff]
    %v1151 = vld [vmem:[#allocation8 + $0xca0] sm:$0xff]
    %v1152 = vld [vmem:[#allocation8 + $0xca8] sm:$0xff]
    %v1153 = vld [vmem:[#allocation8 + $0xcb0] sm:$0xff]
    %v1154 = vld [vmem:[#allocation8 + $0xcb8] sm:$0xff]
    %v1155 = vld [vmem:[#allocation8 + $0xcc0] sm:$0xff]
    %v1156 = vld [vmem:[#allocation8 + $0xcc8] sm:$0xff]
    %v1157 = vld [vmem:[#allocation8 + $0xcd0] sm:$0xff]
    %v1158 = vld [vmem:[#allocation8 + $0xcd8] sm:$0xff]
    %v1159 = vld [vmem:[#allocation8 + $0xce0] sm:$0xff]
    %v1160 = vld [vmem:[#allocation8 + $0xce8] sm:$0xff]
    %v1161 = vld [vmem:[#allocation8 + $0xcf0] sm:$0xff]
    %v1162 = vld [vmem:[#allocation8 + $0xcf8] sm:$0xff]
    %v1163 = vld [vmem:[#allocation8 + $0xd00] sm:$0xff]
    %v1164 = vld [vmem:[#allocation8 + $0xd08] sm:$0xff]
    %v1165 = vld [vmem:[#allocation8 + $0xd10] sm:$0xff]
    %v1166 = vld [vmem:[#allocation8 + $0xd18] sm:$0xff]
    %v1167 = vld [vmem:[#allocation8 + $0xd20] sm:$0xff]
    %v1168 = vld [vmem:[#allocation8 + $0xd28] sm:$0xff]
    %v1169 = vld [vmem:[#allocation8 + $0xd30] sm:$0xff]
    %v1170 = vld [vmem:[#allocation8 + $0xd38] sm:$0xff]
    %v1171 = vld [vmem:[#allocation8 + $0xd40] sm:$0xff]
    %v1172 = vld [vmem:[#allocation8 + $0xd48] sm:$0xff]
    %v1173 = vld [vmem:[#allocation8 + $0xd50] sm:$0xff]
    %v1174 = vld [vmem:[#allocation8 + $0xd58] sm:$0xff]
    %v1175 = vld [vmem:[#allocation8 + $0xd60] sm:$0xff]
    %v1176 = vld [vmem:[#allocation8 + $0xd68] sm:$0xff]
    %v1177 = vld [vmem:[#allocation8 + $0xd70] sm:$0xff]
    %v1178 = vld [vmem:[#allocation8 + $0xd78] sm:$0xff]
    %v1179 = vld [vmem:[#allocation8 + $0xd80] sm:$0xff]
    %v1180 = vld [vmem:[#allocation8 + $0xd88] sm:$0xff]
    %v1181 = vld [vmem:[#allocation8 + $0xd90] sm:$0xff]
    %v1182 = vld [vmem:[#allocation8 + $0xd98] sm:$0xff]
    %v1183 = vld [vmem:[#allocation8 + $0xda0] sm:$0xff]
    %v1184 = vld [vmem:[#allocation8 + $0xda8] sm:$0xff]
    %v1185 = vld [vmem:[#allocation8 + $0xdb0] sm:$0xff]
    %v1186 = vld [vmem:[#allocation8 + $0xdb8] sm:$0xff]
    %v1187 = vld [vmem:[#allocation8 + $0xdc0] sm:$0xff]
    %v1188 = vld [vmem:[#allocation8 + $0xdc8] sm:$0xff]
    %v1189 = vld [vmem:[#allocation8 + $0xdd0] sm:$0xff]
    %v1190 = vld [vmem:[#allocation8 + $0xdd8] sm:$0xff]
    %v1191 = vld [vmem:[#allocation8 + $0xde0] sm:$0xff]
    %v1192 = vld [vmem:[#allocation8 + $0xde8] sm:$0xff]
    %v1193 = vld [vmem:[#allocation8 + $0xdf0] sm:$0xff]
    %v1194 = vld [vmem:[#allocation8 + $0xdf8] sm:$0xff]
    %v1195 = vld [vmem:[#allocation8 + $0xe00] sm:$0xff]
    %v1196 = vld [vmem:[#allocation8 + $0xe08] sm:$0xff]
    %v1197 = vld [vmem:[#allocation8 + $0xe10] sm:$0xff]
    %v1198 = vld [vmem:[#allocation8 + $0xe18] sm:$0xff]
    %v1199 = vld [vmem:[#allocation8 + $0xe20] sm:$0xff]
    %v1200 = vld [vmem:[#allocation8 + $0xe28] sm:$0xff]
    %v1201 = vld [vmem:[#allocation8 + $0xe30] sm:$0xff]
    %v1202 = vld [vmem:[#allocation8 + $0xe38] sm:$0xff]
    %v1203 = vld [vmem:[#allocation8 + $0xe40] sm:$0xff]
    %v1204 = vld [vmem:[#allocation8 + $0xe48] sm:$0xff]
    %v1205 = vld [vmem:[#allocation8 + $0xe50] sm:$0xff]
    %v1206 = vld [vmem:[#allocation8 + $0xe58] sm:$0xff]
    %v1207 = vld [vmem:[#allocation8 + $0xe60] sm:$0xff]
    %v1208 = vld [vmem:[#allocation8 + $0xe68] sm:$0xff]
    %v1209 = vld [vmem:[#allocation8 + $0xe70] sm:$0xff]
    %v1210 = vld [vmem:[#allocation8 + $0xe78] sm:$0xff]
    %v1211 = vld [vmem:[#allocation8 + $0xe80] sm:$0xff]
    %v1212 = vld [vmem:[#allocation8 + $0xe88] sm:$0xff]
    %v1213 = vld [vmem:[#allocation8 + $0xe90] sm:$0xff]
    %v1214 = vld [vmem:[#allocation8 + $0xe98] sm:$0xff]
    %v1215 = vld [vmem:[#allocation8 + $0xea0] sm:$0xff]
    %v1216 = vld [vmem:[#allocation8 + $0xea8] sm:$0xff]
    %v1217 = vld [vmem:[#allocation8 + $0xeb0] sm:$0xff]
    %v1218 = vld [vmem:[#allocation8 + $0xeb8] sm:$0xff]
    %v1219 = vld [vmem:[#allocation8 + $0xec0] sm:$0xff]
    %v1220 = vld [vmem:[#allocation8 + $0xec8] sm:$0xff]
    %v1221 = vld [vmem:[#allocation8 + $0xed0] sm:$0xff]
    %v1222 = vld [vmem:[#allocation8 + $0xed8] sm:$0xff]
    %v1223 = vld [vmem:[#allocation8 + $0xee0] sm:$0xff]
    %v1224 = vld [vmem:[#allocation8 + $0xee8] sm:$0xff]
    %v1225 = vld [vmem:[#allocation8 + $0xef0] sm:$0xff]
    %v1226 = vld [vmem:[#allocation8 + $0xef8] sm:$0xff]
    %v1227 = vld [vmem:[#allocation8 + $0xf00] sm:$0xff]
    %v1228 = vld [vmem:[#allocation8 + $0xf08] sm:$0xff]
    %v1229 = vld [vmem:[#allocation8 + $0xf10] sm:$0xff]
    %v1230 = vld [vmem:[#allocation8 + $0xf18] sm:$0xff]
    %v1231 = vld [vmem:[#allocation8 + $0xf20] sm:$0xff]
    %v1232 = vld [vmem:[#allocation8 + $0xf28] sm:$0xff]
    %v1233 = vld [vmem:[#allocation8 + $0xf30] sm:$0xff]
    %v1234 = vld [vmem:[#allocation8 + $0xf38] sm:$0xff]
    %v1235 = vld [vmem:[#allocation8 + $0xf40] sm:$0xff]
    %v1236 = vld [vmem:[#allocation8 + $0xf48] sm:$0xff]
    %v1237 = vld [vmem:[#allocation8 + $0xf50] sm:$0xff]
    %v1238 = vld [vmem:[#allocation8 + $0xf58] sm:$0xff]
    %v1239 = vld [vmem:[#allocation8 + $0xf60] sm:$0xff]
    %v1240 = vld [vmem:[#allocation8 + $0xf68] sm:$0xff]
    %v1241 = vld [vmem:[#allocation8 + $0xf70] sm:$0xff]
    %v1242 = vld [vmem:[#allocation8 + $0xf78] sm:$0xff]
    %v1243 = vld [vmem:[#allocation8 + $0xf80] sm:$0xff]
    %v1244 = vld [vmem:[#allocation8 + $0xf88] sm:$0xff]
    %v1245 = vld [vmem:[#allocation8 + $0xf90] sm:$0xff]
    %v1246 = vld [vmem:[#allocation8 + $0xf98] sm:$0xff]
    %v1247 = vld [vmem:[#allocation8 + $0xfa0] sm:$0xff]
    %v1248 = vld [vmem:[#allocation8 + $0xfa8] sm:$0xff]
    %v1249 = vld [vmem:[#allocation8 + $0xfb0] sm:$0xff]
    %v1250 = vld [vmem:[#allocation8 + $0xfb8] sm:$0xff]
    %v1251 = vld [vmem:[#allocation8 + $0xfc0] sm:$0xff]
    %v1252 = vld [vmem:[#allocation8 + $0xfc8] sm:$0xff]
    %v1253 = vld [vmem:[#allocation8 + $0xfd0] sm:$0xff]
    %v1254 = vld [vmem:[#allocation8 + $0xfd8] sm:$0xff]
    %v1255 = vld [vmem:[#allocation8 + $0xfe0] sm:$0xff]
    %v1256 = vld [vmem:[#allocation8 + $0xfe8] sm:$0xff]
    %v1257 = vld [vmem:[#allocation8 + $0xff0] sm:$0xff]
    %v1258 = vld [vmem:[#allocation8 + $0xff8] sm:$0xff]
    %v1259 = vld [vmem:[#allocation10] sm:$0xff]
    %v1261 = vlaneseq
    %v1262 = vshrl.u32 %v1261, 7
    %v1263 = vsub.s32 0, %v1262
    %v1264 = vrot.slane %v1259, %v1263
    %v1265 = vlaneseq
    %v1266 = vshrl.u32 %v1265, 7
    %v1267 = vsub.s32 1, %v1266
    %v1268 = vrot.slane %v1259, %v1267
    %v1269 = vlaneseq
    %v1270 = vshrl.u32 %v1269, 7
    %v1271 = vsub.s32 2, %v1270
    %v1272 = vrot.slane %v1259, %v1271
    %v1273 = vlaneseq
    %v1274 = vshrl.u32 %v1273, 7
    %v1275 = vsub.s32 3, %v1274
    %v1276 = vrot.slane %v1259, %v1275
    %v1277 = vlaneseq
    %v1278 = vshrl.u32 %v1277, 7
    %v1279 = vsub.s32 4, %v1278
    %v1280 = vrot.slane %v1259, %v1279
    %v1281 = vlaneseq
    %v1282 = vshrl.u32 %v1281, 7
    %v1283 = vsub.s32 5, %v1282
    %v1284 = vrot.slane %v1259, %v1283
    %v1285 = vlaneseq
    %v1286 = vshrl.u32 %v1285, 7
    %v1287 = vsub.s32 6, %v1286
    %v1288 = vrot.slane %v1259, %v1287
    %v1289 = vlaneseq
    %v1290 = vshrl.u32 %v1289, 7
    %v1291 = vsub.s32 7, %v1290
    %v1292 = vrot.slane %v1259, %v1291
    %v1813 = vunpack.c.l.b16 %v747
    %v1814 = vunpack.c.h.b16 %v747
    %v1815 = vunpack.c.l.b16 %v748
    %v1816 = vunpack.c.h.b16 %v748
    %v1817 = vunpack.c.l.b16 %v749
    %v1818 = vunpack.c.h.b16 %v749
    %v1819 = vunpack.c.l.b16 %v750
    %v1820 = vunpack.c.h.b16 %v750
    %v1821 = vunpack.c.l.b16 %v751
    %v1822 = vunpack.c.h.b16 %v751
    %v1823 = vunpack.c.l.b16 %v752
    %v1824 = vunpack.c.h.b16 %v752
    %v1825 = vunpack.c.l.b16 %v753
    %v1826 = vunpack.c.h.b16 %v753
    %v1827 = vunpack.c.l.b16 %v754
    %v1828 = vunpack.c.h.b16 %v754
    %v1829 = vunpack.c.l.b16 %v755
    %v1830 = vunpack.c.h.b16 %v755
    %v1831 = vunpack.c.l.b16 %v756
    %v1832 = vunpack.c.h.b16 %v756
    %v1833 = vunpack.c.l.b16 %v757
    %v1834 = vunpack.c.h.b16 %v757
    %v1835 = vunpack.c.l.b16 %v758
    %v1836 = vunpack.c.h.b16 %v758
    %v1837 = vunpack.c.l.b16 %v759
    %v1838 = vunpack.c.h.b16 %v759
    %v1839 = vunpack.c.l.b16 %v760
    %v1840 = vunpack.c.h.b16 %v760
    %v1841 = vunpack.c.l.b16 %v761
    %v1842 = vunpack.c.h.b16 %v761
    %v1843 = vunpack.c.l.b16 %v762
    %v1844 = vunpack.c.h.b16 %v762
    %v1845 = vunpack.c.l.b16 %v763
    %v1846 = vunpack.c.h.b16 %v763
    %v1847 = vunpack.c.l.b16 %v764
    %v1848 = vunpack.c.h.b16 %v764
    %v1849 = vunpack.c.l.b16 %v765
    %v1850 = vunpack.c.h.b16 %v765
    %v1851 = vunpack.c.l.b16 %v766
    %v1852 = vunpack.c.h.b16 %v766
    %v1853 = vunpack.c.l.b16 %v767
    %v1854 = vunpack.c.h.b16 %v767
    %v1855 = vunpack.c.l.b16 %v768
    %v1856 = vunpack.c.h.b16 %v768
    %v1857 = vunpack.c.l.b16 %v769
    %v1858 = vunpack.c.h.b16 %v769
    %v1859 = vunpack.c.l.b16 %v770
    %v1860 = vunpack.c.h.b16 %v770
    %v1861 = vunpack.c.l.b16 %v771
    %v1862 = vunpack.c.h.b16 %v771
    %v1863 = vunpack.c.l.b16 %v772
    %v1864 = vunpack.c.h.b16 %v772
    %v1865 = vunpack.c.l.b16 %v773
    %v1866 = vunpack.c.h.b16 %v773
    %v1867 = vunpack.c.l.b16 %v774
    %v1868 = vunpack.c.h.b16 %v774
    %v1869 = vunpack.c.l.b16 %v775
    %v1870 = vunpack.c.h.b16 %v775
    %v1871 = vunpack.c.l.b16 %v776
    %v1872 = vunpack.c.h.b16 %v776
    %v1873 = vunpack.c.l.b16 %v777
    %v1874 = vunpack.c.h.b16 %v777
    %v1875 = vunpack.c.l.b16 %v778
    %v1876 = vunpack.c.h.b16 %v778
    %v1877 = vunpack.c.l.b16 %v779
    %v1878 = vunpack.c.h.b16 %v779
    %v1879 = vunpack.c.l.b16 %v780
    %v1880 = vunpack.c.h.b16 %v780
    %v1881 = vunpack.c.l.b16 %v781
    %v1882 = vunpack.c.h.b16 %v781
    %v1883 = vunpack.c.l.b16 %v782
    %v1884 = vunpack.c.h.b16 %v782
    %v1885 = vunpack.c.l.b16 %v783
    %v1886 = vunpack.c.h.b16 %v783
    %v1887 = vunpack.c.l.b16 %v784
    %v1888 = vunpack.c.h.b16 %v784
    %v1889 = vunpack.c.l.b16 %v785
    %v1890 = vunpack.c.h.b16 %v785
    %v1891 = vunpack.c.l.b16 %v786
    %v1892 = vunpack.c.h.b16 %v786
    %v1893 = vunpack.c.l.b16 %v787
    %v1894 = vunpack.c.h.b16 %v787
    %v1895 = vunpack.c.l.b16 %v788
    %v1896 = vunpack.c.h.b16 %v788
    %v1897 = vunpack.c.l.b16 %v789
    %v1898 = vunpack.c.h.b16 %v789
    %v1899 = vunpack.c.l.b16 %v790
    %v1900 = vunpack.c.h.b16 %v790
    %v1901 = vunpack.c.l.b16 %v791
    %v1902 = vunpack.c.h.b16 %v791
    %v1903 = vunpack.c.l.b16 %v792
    %v1904 = vunpack.c.h.b16 %v792
    %v1905 = vunpack.c.l.b16 %v793
    %v1906 = vunpack.c.h.b16 %v793
    %v1907 = vunpack.c.l.b16 %v794
    %v1908 = vunpack.c.h.b16 %v794
    %v1909 = vunpack.c.l.b16 %v795
    %v1910 = vunpack.c.h.b16 %v795
    %v1911 = vunpack.c.l.b16 %v796
    %v1912 = vunpack.c.h.b16 %v796
    %v1913 = vunpack.c.l.b16 %v797
    %v1914 = vunpack.c.h.b16 %v797
    %v1915 = vunpack.c.l.b16 %v798
    %v1916 = vunpack.c.h.b16 %v798
    %v1917 = vunpack.c.l.b16 %v799
    %v1918 = vunpack.c.h.b16 %v799
    %v1919 = vunpack.c.l.b16 %v800
    %v1920 = vunpack.c.h.b16 %v800
    %v1921 = vunpack.c.l.b16 %v801
    %v1922 = vunpack.c.h.b16 %v801
    %v1923 = vunpack.c.l.b16 %v802
    %v1924 = vunpack.c.h.b16 %v802
    %v1925 = vunpack.c.l.b16 %v803
    %v1926 = vunpack.c.h.b16 %v803
    %v1927 = vunpack.c.l.b16 %v804
    %v1928 = vunpack.c.h.b16 %v804
    %v1929 = vunpack.c.l.b16 %v805
    %v1930 = vunpack.c.h.b16 %v805
    %v1931 = vunpack.c.l.b16 %v806
    %v1932 = vunpack.c.h.b16 %v806
    %v1933 = vunpack.c.l.b16 %v807
    %v1934 = vunpack.c.h.b16 %v807
    %v1935 = vunpack.c.l.b16 %v808
    %v1936 = vunpack.c.h.b16 %v808
    %v1937 = vunpack.c.l.b16 %v809
    %v1938 = vunpack.c.h.b16 %v809
    %v1939 = vunpack.c.l.b16 %v810
    %v1940 = vunpack.c.h.b16 %v810
    %v1941 = vunpack.c.l.b16 %v811
    %v1942 = vunpack.c.h.b16 %v811
    %v1943 = vunpack.c.l.b16 %v812
    %v1944 = vunpack.c.h.b16 %v812
    %v1945 = vunpack.c.l.b16 %v813
    %v1946 = vunpack.c.h.b16 %v813
    %v1947 = vunpack.c.l.b16 %v814
    %v1948 = vunpack.c.h.b16 %v814
    %v1949 = vunpack.c.l.b16 %v815
    %v1950 = vunpack.c.h.b16 %v815
    %v1951 = vunpack.c.l.b16 %v816
    %v1952 = vunpack.c.h.b16 %v816
    %v1953 = vunpack.c.l.b16 %v817
    %v1954 = vunpack.c.h.b16 %v817
    %v1955 = vunpack.c.l.b16 %v818
    %v1956 = vunpack.c.h.b16 %v818
    %v1957 = vunpack.c.l.b16 %v819
    %v1958 = vunpack.c.h.b16 %v819
    %v1959 = vunpack.c.l.b16 %v820
    %v1960 = vunpack.c.h.b16 %v820
    %v1961 = vunpack.c.l.b16 %v821
    %v1962 = vunpack.c.h.b16 %v821
    %v1963 = vunpack.c.l.b16 %v822
    %v1964 = vunpack.c.h.b16 %v822
    %v1965 = vunpack.c.l.b16 %v823
    %v1966 = vunpack.c.h.b16 %v823
    %v1967 = vunpack.c.l.b16 %v824
    %v1968 = vunpack.c.h.b16 %v824
    %v1969 = vunpack.c.l.b16 %v825
    %v1970 = vunpack.c.h.b16 %v825
    %v1971 = vunpack.c.l.b16 %v826
    %v1972 = vunpack.c.h.b16 %v826
    %v1973 = vunpack.c.l.b16 %v827
    %v1974 = vunpack.c.h.b16 %v827
    %v1975 = vunpack.c.l.b16 %v828
    %v1976 = vunpack.c.h.b16 %v828
    %v1977 = vunpack.c.l.b16 %v829
    %v1978 = vunpack.c.h.b16 %v829
    %v1979 = vunpack.c.l.b16 %v830
    %v1980 = vunpack.c.h.b16 %v830
    %v1981 = vunpack.c.l.b16 %v831
    %v1982 = vunpack.c.h.b16 %v831
    %v1983 = vunpack.c.l.b16 %v832
    %v1984 = vunpack.c.h.b16 %v832
    %v1985 = vunpack.c.l.b16 %v833
    %v1986 = vunpack.c.h.b16 %v833
    %v1987 = vunpack.c.l.b16 %v834
    %v1988 = vunpack.c.h.b16 %v834
    %v1989 = vunpack.c.l.b16 %v835
    %v1990 = vunpack.c.h.b16 %v835
    %v1991 = vunpack.c.l.b16 %v836
    %v1992 = vunpack.c.h.b16 %v836
    %v1993 = vunpack.c.l.b16 %v837
    %v1994 = vunpack.c.h.b16 %v837
    %v1995 = vunpack.c.l.b16 %v838
    %v1996 = vunpack.c.h.b16 %v838
    %v1997 = vunpack.c.l.b16 %v839
    %v1998 = vunpack.c.h.b16 %v839
    %v1999 = vunpack.c.l.b16 %v840
    %v2000 = vunpack.c.h.b16 %v840
    %v2001 = vunpack.c.l.b16 %v841
    %v2002 = vunpack.c.h.b16 %v841
    %v2003 = vunpack.c.l.b16 %v842
    %v2004 = vunpack.c.h.b16 %v842
    %v2005 = vunpack.c.l.b16 %v843
    %v2006 = vunpack.c.h.b16 %v843
    %v2007 = vunpack.c.l.b16 %v844
    %v2008 = vunpack.c.h.b16 %v844
    %v2009 = vunpack.c.l.b16 %v845
    %v2010 = vunpack.c.h.b16 %v845
    %v2011 = vunpack.c.l.b16 %v846
    %v2012 = vunpack.c.h.b16 %v846
    %v2013 = vunpack.c.l.b16 %v847
    %v2014 = vunpack.c.h.b16 %v847
    %v2015 = vunpack.c.l.b16 %v848
    %v2016 = vunpack.c.h.b16 %v848
    %v2017 = vunpack.c.l.b16 %v849
    %v2018 = vunpack.c.h.b16 %v849
    %v2019 = vunpack.c.l.b16 %v850
    %v2020 = vunpack.c.h.b16 %v850
    %v2021 = vunpack.c.l.b16 %v851
    %v2022 = vunpack.c.h.b16 %v851
    %v2023 = vunpack.c.l.b16 %v852
    %v2024 = vunpack.c.h.b16 %v852
    %v2025 = vunpack.c.l.b16 %v853
    %v2026 = vunpack.c.h.b16 %v853
    %v2027 = vunpack.c.l.b16 %v854
    %v2028 = vunpack.c.h.b16 %v854
    %v2029 = vunpack.c.l.b16 %v855
    %v2030 = vunpack.c.h.b16 %v855
    %v2031 = vunpack.c.l.b16 %v856
    %v2032 = vunpack.c.h.b16 %v856
    %v2033 = vunpack.c.l.b16 %v857
    %v2034 = vunpack.c.h.b16 %v857
    %v2035 = vunpack.c.l.b16 %v858
    %v2036 = vunpack.c.h.b16 %v858
    %v2037 = vunpack.c.l.b16 %v859
    %v2038 = vunpack.c.h.b16 %v859
    %v2039 = vunpack.c.l.b16 %v860
    %v2040 = vunpack.c.h.b16 %v860
    %v2041 = vunpack.c.l.b16 %v861
    %v2042 = vunpack.c.h.b16 %v861
    %v2043 = vunpack.c.l.b16 %v862
    %v2044 = vunpack.c.h.b16 %v862
    %v2045 = vunpack.c.l.b16 %v863
    %v2046 = vunpack.c.h.b16 %v863
    %v2047 = vunpack.c.l.b16 %v864
    %v2048 = vunpack.c.h.b16 %v864
    %v2049 = vunpack.c.l.b16 %v865
    %v2050 = vunpack.c.h.b16 %v865
    %v2051 = vunpack.c.l.b16 %v866
    %v2052 = vunpack.c.h.b16 %v866
    %v2053 = vunpack.c.l.b16 %v867
    %v2054 = vunpack.c.h.b16 %v867
    %v2055 = vunpack.c.l.b16 %v868
    %v2056 = vunpack.c.h.b16 %v868
    %v2057 = vunpack.c.l.b16 %v869
    %v2058 = vunpack.c.h.b16 %v869
    %v2059 = vunpack.c.l.b16 %v870
    %v2060 = vunpack.c.h.b16 %v870
    %v2061 = vunpack.c.l.b16 %v871
    %v2062 = vunpack.c.h.b16 %v871
    %v2063 = vunpack.c.l.b16 %v872
    %v2064 = vunpack.c.h.b16 %v872
    %v2065 = vunpack.c.l.b16 %v873
    %v2066 = vunpack.c.h.b16 %v873
    %v2067 = vunpack.c.l.b16 %v874
    %v2068 = vunpack.c.h.b16 %v874
    %v2069 = vunpack.c.l.b16 %v875
    %v2070 = vunpack.c.h.b16 %v875
    %v2071 = vunpack.c.l.b16 %v876
    %v2072 = vunpack.c.h.b16 %v876
    %v2073 = vunpack.c.l.b16 %v877
    %v2074 = vunpack.c.h.b16 %v877
    %v2075 = vunpack.c.l.b16 %v878
    %v2076 = vunpack.c.h.b16 %v878
    %v2077 = vunpack.c.l.b16 %v879
    %v2078 = vunpack.c.h.b16 %v879
    %v2079 = vunpack.c.l.b16 %v880
    %v2080 = vunpack.c.h.b16 %v880
    %v2081 = vunpack.c.l.b16 %v881
    %v2082 = vunpack.c.h.b16 %v881
    %v2083 = vunpack.c.l.b16 %v882
    %v2084 = vunpack.c.h.b16 %v882
    %v2085 = vunpack.c.l.b16 %v883
    %v2086 = vunpack.c.h.b16 %v883
    %v2087 = vunpack.c.l.b16 %v884
    %v2088 = vunpack.c.h.b16 %v884
    %v2089 = vunpack.c.l.b16 %v885
    %v2090 = vunpack.c.h.b16 %v885
    %v2091 = vunpack.c.l.b16 %v886
    %v2092 = vunpack.c.h.b16 %v886
    %v2093 = vunpack.c.l.b16 %v887
    %v2094 = vunpack.c.h.b16 %v887
    %v2095 = vunpack.c.l.b16 %v888
    %v2096 = vunpack.c.h.b16 %v888
    %v2097 = vunpack.c.l.b16 %v889
    %v2098 = vunpack.c.h.b16 %v889
    %v2099 = vunpack.c.l.b16 %v890
    %v2100 = vunpack.c.h.b16 %v890
    %v2101 = vunpack.c.l.b16 %v891
    %v2102 = vunpack.c.h.b16 %v891
    %v2103 = vunpack.c.l.b16 %v892
    %v2104 = vunpack.c.h.b16 %v892
    %v2105 = vunpack.c.l.b16 %v893
    %v2106 = vunpack.c.h.b16 %v893
    %v2107 = vunpack.c.l.b16 %v894
    %v2108 = vunpack.c.h.b16 %v894
    %v2109 = vunpack.c.l.b16 %v895
    %v2110 = vunpack.c.h.b16 %v895
    %v2111 = vunpack.c.l.b16 %v896
    %v2112 = vunpack.c.h.b16 %v896
    %v2113 = vunpack.c.l.b16 %v897
    %v2114 = vunpack.c.h.b16 %v897
    %v2115 = vunpack.c.l.b16 %v898
    %v2116 = vunpack.c.h.b16 %v898
    %v2117 = vunpack.c.l.b16 %v899
    %v2118 = vunpack.c.h.b16 %v899
    %v2119 = vunpack.c.l.b16 %v900
    %v2120 = vunpack.c.h.b16 %v900
    %v2121 = vunpack.c.l.b16 %v901
    %v2122 = vunpack.c.h.b16 %v901
    %v2123 = vunpack.c.l.b16 %v902
    %v2124 = vunpack.c.h.b16 %v902
    %v2125 = vunpack.c.l.b16 %v903
    %v2126 = vunpack.c.h.b16 %v903
    %v2127 = vunpack.c.l.b16 %v904
    %v2128 = vunpack.c.h.b16 %v904
    %v2129 = vunpack.c.l.b16 %v905
    %v2130 = vunpack.c.h.b16 %v905
    %v2131 = vunpack.c.l.b16 %v906
    %v2132 = vunpack.c.h.b16 %v906
    %v2133 = vunpack.c.l.b16 %v907
    %v2134 = vunpack.c.h.b16 %v907
    %v2135 = vunpack.c.l.b16 %v908
    %v2136 = vunpack.c.h.b16 %v908
    %v2137 = vunpack.c.l.b16 %v909
    %v2138 = vunpack.c.h.b16 %v909
    %v2139 = vunpack.c.l.b16 %v910
    %v2140 = vunpack.c.h.b16 %v910
    %v2141 = vunpack.c.l.b16 %v911
    %v2142 = vunpack.c.h.b16 %v911
    %v2143 = vunpack.c.l.b16 %v912
    %v2144 = vunpack.c.h.b16 %v912
    %v2145 = vunpack.c.l.b16 %v913
    %v2146 = vunpack.c.h.b16 %v913
    %v2147 = vunpack.c.l.b16 %v914
    %v2148 = vunpack.c.h.b16 %v914
    %v2149 = vunpack.c.l.b16 %v915
    %v2150 = vunpack.c.h.b16 %v915
    %v2151 = vunpack.c.l.b16 %v916
    %v2152 = vunpack.c.h.b16 %v916
    %v2153 = vunpack.c.l.b16 %v917
    %v2154 = vunpack.c.h.b16 %v917
    %v2155 = vunpack.c.l.b16 %v918
    %v2156 = vunpack.c.h.b16 %v918
    %v2157 = vunpack.c.l.b16 %v919
    %v2158 = vunpack.c.h.b16 %v919
    %v2159 = vunpack.c.l.b16 %v920
    %v2160 = vunpack.c.h.b16 %v920
    %v2161 = vunpack.c.l.b16 %v921
    %v2162 = vunpack.c.h.b16 %v921
    %v2163 = vunpack.c.l.b16 %v922
    %v2164 = vunpack.c.h.b16 %v922
    %v2165 = vunpack.c.l.b16 %v923
    %v2166 = vunpack.c.h.b16 %v923
    %v2167 = vunpack.c.l.b16 %v924
    %v2168 = vunpack.c.h.b16 %v924
    %v2169 = vunpack.c.l.b16 %v925
    %v2170 = vunpack.c.h.b16 %v925
    %v2171 = vunpack.c.l.b16 %v926
    %v2172 = vunpack.c.h.b16 %v926
    %v2173 = vunpack.c.l.b16 %v927
    %v2174 = vunpack.c.h.b16 %v927
    %v2175 = vunpack.c.l.b16 %v928
    %v2176 = vunpack.c.h.b16 %v928
    %v2177 = vunpack.c.l.b16 %v929
    %v2178 = vunpack.c.h.b16 %v929
    %v2179 = vunpack.c.l.b16 %v930
    %v2180 = vunpack.c.h.b16 %v930
    %v2181 = vunpack.c.l.b16 %v931
    %v2182 = vunpack.c.h.b16 %v931
    %v2183 = vunpack.c.l.b16 %v932
    %v2184 = vunpack.c.h.b16 %v932
    %v2185 = vunpack.c.l.b16 %v933
    %v2186 = vunpack.c.h.b16 %v933
    %v2187 = vunpack.c.l.b16 %v934
    %v2188 = vunpack.c.h.b16 %v934
    %v2189 = vunpack.c.l.b16 %v935
    %v2190 = vunpack.c.h.b16 %v935
    %v2191 = vunpack.c.l.b16 %v936
    %v2192 = vunpack.c.h.b16 %v936
    %v2193 = vunpack.c.l.b16 %v937
    %v2194 = vunpack.c.h.b16 %v937
    %v2195 = vunpack.c.l.b16 %v938
    %v2196 = vunpack.c.h.b16 %v938
    %v2197 = vunpack.c.l.b16 %v939
    %v2198 = vunpack.c.h.b16 %v939
    %v2199 = vunpack.c.l.b16 %v940
    %v2200 = vunpack.c.h.b16 %v940
    %v2201 = vunpack.c.l.b16 %v941
    %v2202 = vunpack.c.h.b16 %v941
    %v2203 = vunpack.c.l.b16 %v942
    %v2204 = vunpack.c.h.b16 %v942
    %v2205 = vunpack.c.l.b16 %v943
    %v2206 = vunpack.c.h.b16 %v943
    %v2207 = vunpack.c.l.b16 %v944
    %v2208 = vunpack.c.h.b16 %v944
    %v2209 = vunpack.c.l.b16 %v945
    %v2210 = vunpack.c.h.b16 %v945
    %v2211 = vunpack.c.l.b16 %v946
    %v2212 = vunpack.c.h.b16 %v946
    %v2213 = vunpack.c.l.b16 %v947
    %v2214 = vunpack.c.h.b16 %v947
    %v2215 = vunpack.c.l.b16 %v948
    %v2216 = vunpack.c.h.b16 %v948
    %v2217 = vunpack.c.l.b16 %v949
    %v2218 = vunpack.c.h.b16 %v949
    %v2219 = vunpack.c.l.b16 %v950
    %v2220 = vunpack.c.h.b16 %v950
    %v2221 = vunpack.c.l.b16 %v951
    %v2222 = vunpack.c.h.b16 %v951
    %v2223 = vunpack.c.l.b16 %v952
    %v2224 = vunpack.c.h.b16 %v952
    %v2225 = vunpack.c.l.b16 %v953
    %v2226 = vunpack.c.h.b16 %v953
    %v2227 = vunpack.c.l.b16 %v954
    %v2228 = vunpack.c.h.b16 %v954
    %v2229 = vunpack.c.l.b16 %v955
    %v2230 = vunpack.c.h.b16 %v955
    %v2231 = vunpack.c.l.b16 %v956
    %v2232 = vunpack.c.h.b16 %v956
    %v2233 = vunpack.c.l.b16 %v957
    %v2234 = vunpack.c.h.b16 %v957
    %v2235 = vunpack.c.l.b16 %v958
    %v2236 = vunpack.c.h.b16 %v958
    %v2237 = vunpack.c.l.b16 %v959
    %v2238 = vunpack.c.h.b16 %v959
    %v2239 = vunpack.c.l.b16 %v960
    %v2240 = vunpack.c.h.b16 %v960
    %v2241 = vunpack.c.l.b16 %v961
    %v2242 = vunpack.c.h.b16 %v961
    %v2243 = vunpack.c.l.b16 %v962
    %v2244 = vunpack.c.h.b16 %v962
    %v2245 = vunpack.c.l.b16 %v963
    %v2246 = vunpack.c.h.b16 %v963
    %v2247 = vunpack.c.l.b16 %v964
    %v2248 = vunpack.c.h.b16 %v964
    %v2249 = vunpack.c.l.b16 %v965
    %v2250 = vunpack.c.h.b16 %v965
    %v2251 = vunpack.c.l.b16 %v966
    %v2252 = vunpack.c.h.b16 %v966
    %v2253 = vunpack.c.l.b16 %v967
    %v2254 = vunpack.c.h.b16 %v967
    %v2255 = vunpack.c.l.b16 %v968
    %v2256 = vunpack.c.h.b16 %v968
    %v2257 = vunpack.c.l.b16 %v969
    %v2258 = vunpack.c.h.b16 %v969
    %v2259 = vunpack.c.l.b16 %v970
    %v2260 = vunpack.c.h.b16 %v970
    %v2261 = vunpack.c.l.b16 %v971
    %v2262 = vunpack.c.h.b16 %v971
    %v2263 = vunpack.c.l.b16 %v972
    %v2264 = vunpack.c.h.b16 %v972
    %v2265 = vunpack.c.l.b16 %v973
    %v2266 = vunpack.c.h.b16 %v973
    %v2267 = vunpack.c.l.b16 %v974
    %v2268 = vunpack.c.h.b16 %v974
    %v2269 = vunpack.c.l.b16 %v975
    %v2270 = vunpack.c.h.b16 %v975
    %v2271 = vunpack.c.l.b16 %v976
    %v2272 = vunpack.c.h.b16 %v976
    %v2273 = vunpack.c.l.b16 %v977
    %v2274 = vunpack.c.h.b16 %v977
    %v2275 = vunpack.c.l.b16 %v978
    %v2276 = vunpack.c.h.b16 %v978
    %v2277 = vunpack.c.l.b16 %v979
    %v2278 = vunpack.c.h.b16 %v979
    %v2279 = vunpack.c.l.b16 %v980
    %v2280 = vunpack.c.h.b16 %v980
    %v2281 = vunpack.c.l.b16 %v981
    %v2282 = vunpack.c.h.b16 %v981
    %v2283 = vunpack.c.l.b16 %v982
    %v2284 = vunpack.c.h.b16 %v982
    %v2285 = vunpack.c.l.b16 %v983
    %v2286 = vunpack.c.h.b16 %v983
    %v2287 = vunpack.c.l.b16 %v984
    %v2288 = vunpack.c.h.b16 %v984
    %v2289 = vunpack.c.l.b16 %v985
    %v2290 = vunpack.c.h.b16 %v985
    %v2291 = vunpack.c.l.b16 %v986
    %v2292 = vunpack.c.h.b16 %v986
    %v2293 = vunpack.c.l.b16 %v987
    %v2294 = vunpack.c.h.b16 %v987
    %v2295 = vunpack.c.l.b16 %v988
    %v2296 = vunpack.c.h.b16 %v988
    %v2297 = vunpack.c.l.b16 %v989
    %v2298 = vunpack.c.h.b16 %v989
    %v2299 = vunpack.c.l.b16 %v990
    %v2300 = vunpack.c.h.b16 %v990
    %v2301 = vunpack.c.l.b16 %v991
    %v2302 = vunpack.c.h.b16 %v991
    %v2303 = vunpack.c.l.b16 %v992
    %v2304 = vunpack.c.h.b16 %v992
    %v2305 = vunpack.c.l.b16 %v993
    %v2306 = vunpack.c.h.b16 %v993
    %v2307 = vunpack.c.l.b16 %v994
    %v2308 = vunpack.c.h.b16 %v994
    %v2309 = vunpack.c.l.b16 %v995
    %v2310 = vunpack.c.h.b16 %v995
    %v2311 = vunpack.c.l.b16 %v996
    %v2312 = vunpack.c.h.b16 %v996
    %v2313 = vunpack.c.l.b16 %v997
    %v2314 = vunpack.c.h.b16 %v997
    %v2315 = vunpack.c.l.b16 %v998
    %v2316 = vunpack.c.h.b16 %v998
    %v2317 = vunpack.c.l.b16 %v999
    %v2318 = vunpack.c.h.b16 %v999
    %v2319 = vunpack.c.l.b16 %v1000
    %v2320 = vunpack.c.h.b16 %v1000
    %v2321 = vunpack.c.l.b16 %v1001
    %v2322 = vunpack.c.h.b16 %v1001
    %v2323 = vunpack.c.l.b16 %v1002
    %v2324 = vunpack.c.h.b16 %v1002
    %v2325 = vunpack.c.l.b16 %v1003
    %v2326 = vunpack.c.h.b16 %v1003
    %v2327 = vunpack.c.l.b16 %v1004
    %v2328 = vunpack.c.h.b16 %v1004
    %v2329 = vunpack.c.l.b16 %v1005
    %v2330 = vunpack.c.h.b16 %v1005
    %v2331 = vunpack.c.l.b16 %v1006
    %v2332 = vunpack.c.h.b16 %v1006
    %v2333 = vunpack.c.l.b16 %v1007
    %v2334 = vunpack.c.h.b16 %v1007
    %v2335 = vunpack.c.l.b16 %v1008
    %v2336 = vunpack.c.h.b16 %v1008
    %v2337 = vunpack.c.l.b16 %v1009
    %v2338 = vunpack.c.h.b16 %v1009
    %v2339 = vunpack.c.l.b16 %v1010
    %v2340 = vunpack.c.h.b16 %v1010
    %v2341 = vunpack.c.l.b16 %v1011
    %v2342 = vunpack.c.h.b16 %v1011
    %v2343 = vunpack.c.l.b16 %v1012
    %v2344 = vunpack.c.h.b16 %v1012
    %v2345 = vunpack.c.l.b16 %v1013
    %v2346 = vunpack.c.h.b16 %v1013
    %v2347 = vunpack.c.l.b16 %v1014
    %v2348 = vunpack.c.h.b16 %v1014
    %v2349 = vunpack.c.l.b16 %v1015
    %v2350 = vunpack.c.h.b16 %v1015
    %v2351 = vunpack.c.l.b16 %v1016
    %v2352 = vunpack.c.h.b16 %v1016
    %v2353 = vunpack.c.l.b16 %v1017
    %v2354 = vunpack.c.h.b16 %v1017
    %v2355 = vunpack.c.l.b16 %v1018
    %v2356 = vunpack.c.h.b16 %v1018
    %v2357 = vunpack.c.l.b16 %v1019
    %v2358 = vunpack.c.h.b16 %v1019
    %v2359 = vunpack.c.l.b16 %v1020
    %v2360 = vunpack.c.h.b16 %v1020
    %v2361 = vunpack.c.l.b16 %v1021
    %v2362 = vunpack.c.h.b16 %v1021
    %v2363 = vunpack.c.l.b16 %v1022
    %v2364 = vunpack.c.h.b16 %v1022
    %v2365 = vunpack.c.l.b16 %v1023
    %v2366 = vunpack.c.h.b16 %v1023
    %v2367 = vunpack.c.l.b16 %v1024
    %v2368 = vunpack.c.h.b16 %v1024
    %v2369 = vunpack.c.l.b16 %v1025
    %v2370 = vunpack.c.h.b16 %v1025
    %v2371 = vunpack.c.l.b16 %v1026
    %v2372 = vunpack.c.h.b16 %v1026
    %v2373 = vunpack.c.l.b16 %v1027
    %v2374 = vunpack.c.h.b16 %v1027
    %v2375 = vunpack.c.l.b16 %v1028
    %v2376 = vunpack.c.h.b16 %v1028
    %v2377 = vunpack.c.l.b16 %v1029
    %v2378 = vunpack.c.h.b16 %v1029
    %v2379 = vunpack.c.l.b16 %v1030
    %v2380 = vunpack.c.h.b16 %v1030
    %v2381 = vunpack.c.l.b16 %v1031
    %v2382 = vunpack.c.h.b16 %v1031
    %v2383 = vunpack.c.l.b16 %v1032
    %v2384 = vunpack.c.h.b16 %v1032
    %v2385 = vunpack.c.l.b16 %v1033
    %v2386 = vunpack.c.h.b16 %v1033
    %v2387 = vunpack.c.l.b16 %v1034
    %v2388 = vunpack.c.h.b16 %v1034
    %v2389 = vunpack.c.l.b16 %v1035
    %v2390 = vunpack.c.h.b16 %v1035
    %v2391 = vunpack.c.l.b16 %v1036
    %v2392 = vunpack.c.h.b16 %v1036
    %v2393 = vunpack.c.l.b16 %v1037
    %v2394 = vunpack.c.h.b16 %v1037
    %v2395 = vunpack.c.l.b16 %v1038
    %v2396 = vunpack.c.h.b16 %v1038
    %v2397 = vunpack.c.l.b16 %v1039
    %v2398 = vunpack.c.h.b16 %v1039
    %v2399 = vunpack.c.l.b16 %v1040
    %v2400 = vunpack.c.h.b16 %v1040
    %v2401 = vunpack.c.l.b16 %v1041
    %v2402 = vunpack.c.h.b16 %v1041
    %v2403 = vunpack.c.l.b16 %v1042
    %v2404 = vunpack.c.h.b16 %v1042
    %v2405 = vunpack.c.l.b16 %v1043
    %v2406 = vunpack.c.h.b16 %v1043
    %v2407 = vunpack.c.l.b16 %v1044
    %v2408 = vunpack.c.h.b16 %v1044
    %v2409 = vunpack.c.l.b16 %v1045
    %v2410 = vunpack.c.h.b16 %v1045
    %v2411 = vunpack.c.l.b16 %v1046
    %v2412 = vunpack.c.h.b16 %v1046
    %v2413 = vunpack.c.l.b16 %v1047
    %v2414 = vunpack.c.h.b16 %v1047
    %v2415 = vunpack.c.l.b16 %v1048
    %v2416 = vunpack.c.h.b16 %v1048
    %v2417 = vunpack.c.l.b16 %v1049
    %v2418 = vunpack.c.h.b16 %v1049
    %v2419 = vunpack.c.l.b16 %v1050
    %v2420 = vunpack.c.h.b16 %v1050
    %v2421 = vunpack.c.l.b16 %v1051
    %v2422 = vunpack.c.h.b16 %v1051
    %v2423 = vunpack.c.l.b16 %v1052
    %v2424 = vunpack.c.h.b16 %v1052
    %v2425 = vunpack.c.l.b16 %v1053
    %v2426 = vunpack.c.h.b16 %v1053
    %v2427 = vunpack.c.l.b16 %v1054
    %v2428 = vunpack.c.h.b16 %v1054
    %v2429 = vunpack.c.l.b16 %v1055
    %v2430 = vunpack.c.h.b16 %v1055
    %v2431 = vunpack.c.l.b16 %v1056
    %v2432 = vunpack.c.h.b16 %v1056
    %v2433 = vunpack.c.l.b16 %v1057
    %v2434 = vunpack.c.h.b16 %v1057
    %v2435 = vunpack.c.l.b16 %v1058
    %v2436 = vunpack.c.h.b16 %v1058
    %v2437 = vunpack.c.l.b16 %v1059
    %v2438 = vunpack.c.h.b16 %v1059
    %v2439 = vunpack.c.l.b16 %v1060
    %v2440 = vunpack.c.h.b16 %v1060
    %v2441 = vunpack.c.l.b16 %v1061
    %v2442 = vunpack.c.h.b16 %v1061
    %v2443 = vunpack.c.l.b16 %v1062
    %v2444 = vunpack.c.h.b16 %v1062
    %v2445 = vunpack.c.l.b16 %v1063
    %v2446 = vunpack.c.h.b16 %v1063
    %v2447 = vunpack.c.l.b16 %v1064
    %v2448 = vunpack.c.h.b16 %v1064
    %v2449 = vunpack.c.l.b16 %v1065
    %v2450 = vunpack.c.h.b16 %v1065
    %v2451 = vunpack.c.l.b16 %v1066
    %v2452 = vunpack.c.h.b16 %v1066
    %v2453 = vunpack.c.l.b16 %v1067
    %v2454 = vunpack.c.h.b16 %v1067
    %v2455 = vunpack.c.l.b16 %v1068
    %v2456 = vunpack.c.h.b16 %v1068
    %v2457 = vunpack.c.l.b16 %v1069
    %v2458 = vunpack.c.h.b16 %v1069
    %v2459 = vunpack.c.l.b16 %v1070
    %v2460 = vunpack.c.h.b16 %v1070
    %v2461 = vunpack.c.l.b16 %v1071
    %v2462 = vunpack.c.h.b16 %v1071
    %v2463 = vunpack.c.l.b16 %v1072
    %v2464 = vunpack.c.h.b16 %v1072
    %v2465 = vunpack.c.l.b16 %v1073
    %v2466 = vunpack.c.h.b16 %v1073
    %v2467 = vunpack.c.l.b16 %v1074
    %v2468 = vunpack.c.h.b16 %v1074
    %v2469 = vunpack.c.l.b16 %v1075
    %v2470 = vunpack.c.h.b16 %v1075
    %v2471 = vunpack.c.l.b16 %v1076
    %v2472 = vunpack.c.h.b16 %v1076
    %v2473 = vunpack.c.l.b16 %v1077
    %v2474 = vunpack.c.h.b16 %v1077
    %v2475 = vunpack.c.l.b16 %v1078
    %v2476 = vunpack.c.h.b16 %v1078
    %v2477 = vunpack.c.l.b16 %v1079
    %v2478 = vunpack.c.h.b16 %v1079
    %v2479 = vunpack.c.l.b16 %v1080
    %v2480 = vunpack.c.h.b16 %v1080
    %v2481 = vunpack.c.l.b16 %v1081
    %v2482 = vunpack.c.h.b16 %v1081
    %v2483 = vunpack.c.l.b16 %v1082
    %v2484 = vunpack.c.h.b16 %v1082
    %v2485 = vunpack.c.l.b16 %v1083
    %v2486 = vunpack.c.h.b16 %v1083
    %v2487 = vunpack.c.l.b16 %v1084
    %v2488 = vunpack.c.h.b16 %v1084
    %v2489 = vunpack.c.l.b16 %v1085
    %v2490 = vunpack.c.h.b16 %v1085
    %v2491 = vunpack.c.l.b16 %v1086
    %v2492 = vunpack.c.h.b16 %v1086
    %v2493 = vunpack.c.l.b16 %v1087
    %v2494 = vunpack.c.h.b16 %v1087
    %v2495 = vunpack.c.l.b16 %v1088
    %v2496 = vunpack.c.h.b16 %v1088
    %v2497 = vunpack.c.l.b16 %v1089
    %v2498 = vunpack.c.h.b16 %v1089
    %v2499 = vunpack.c.l.b16 %v1090
    %v2500 = vunpack.c.h.b16 %v1090
    %v2501 = vunpack.c.l.b16 %v1091
    %v2502 = vunpack.c.h.b16 %v1091
    %v2503 = vunpack.c.l.b16 %v1092
    %v2504 = vunpack.c.h.b16 %v1092
    %v2505 = vunpack.c.l.b16 %v1093
    %v2506 = vunpack.c.h.b16 %v1093
    %v2507 = vunpack.c.l.b16 %v1094
    %v2508 = vunpack.c.h.b16 %v1094
    %v2509 = vunpack.c.l.b16 %v1095
    %v2510 = vunpack.c.h.b16 %v1095
    %v2511 = vunpack.c.l.b16 %v1096
    %v2512 = vunpack.c.h.b16 %v1096
    %v2513 = vunpack.c.l.b16 %v1097
    %v2514 = vunpack.c.h.b16 %v1097
    %v2515 = vunpack.c.l.b16 %v1098
    %v2516 = vunpack.c.h.b16 %v1098
    %v2517 = vunpack.c.l.b16 %v1099
    %v2518 = vunpack.c.h.b16 %v1099
    %v2519 = vunpack.c.l.b16 %v1100
    %v2520 = vunpack.c.h.b16 %v1100
    %v2521 = vunpack.c.l.b16 %v1101
    %v2522 = vunpack.c.h.b16 %v1101
    %v2523 = vunpack.c.l.b16 %v1102
    %v2524 = vunpack.c.h.b16 %v1102
    %v2525 = vunpack.c.l.b16 %v1103
    %v2526 = vunpack.c.h.b16 %v1103
    %v2527 = vunpack.c.l.b16 %v1104
    %v2528 = vunpack.c.h.b16 %v1104
    %v2529 = vunpack.c.l.b16 %v1105
    %v2530 = vunpack.c.h.b16 %v1105
    %v2531 = vunpack.c.l.b16 %v1106
    %v2532 = vunpack.c.h.b16 %v1106
    %v2533 = vunpack.c.l.b16 %v1107
    %v2534 = vunpack.c.h.b16 %v1107
    %v2535 = vunpack.c.l.b16 %v1108
    %v2536 = vunpack.c.h.b16 %v1108
    %v2537 = vunpack.c.l.b16 %v1109
    %v2538 = vunpack.c.h.b16 %v1109
    %v2539 = vunpack.c.l.b16 %v1110
    %v2540 = vunpack.c.h.b16 %v1110
    %v2541 = vunpack.c.l.b16 %v1111
    %v2542 = vunpack.c.h.b16 %v1111
    %v2543 = vunpack.c.l.b16 %v1112
    %v2544 = vunpack.c.h.b16 %v1112
    %v2545 = vunpack.c.l.b16 %v1113
    %v2546 = vunpack.c.h.b16 %v1113
    %v2547 = vunpack.c.l.b16 %v1114
    %v2548 = vunpack.c.h.b16 %v1114
    %v2549 = vunpack.c.l.b16 %v1115
    %v2550 = vunpack.c.h.b16 %v1115
    %v2551 = vunpack.c.l.b16 %v1116
    %v2552 = vunpack.c.h.b16 %v1116
    %v2553 = vunpack.c.l.b16 %v1117
    %v2554 = vunpack.c.h.b16 %v1117
    %v2555 = vunpack.c.l.b16 %v1118
    %v2556 = vunpack.c.h.b16 %v1118
    %v2557 = vunpack.c.l.b16 %v1119
    %v2558 = vunpack.c.h.b16 %v1119
    %v2559 = vunpack.c.l.b16 %v1120
    %v2560 = vunpack.c.h.b16 %v1120
    %v2561 = vunpack.c.l.b16 %v1121
    %v2562 = vunpack.c.h.b16 %v1121
    %v2563 = vunpack.c.l.b16 %v1122
    %v2564 = vunpack.c.h.b16 %v1122
    %v2565 = vunpack.c.l.b16 %v1123
    %v2566 = vunpack.c.h.b16 %v1123
    %v2567 = vunpack.c.l.b16 %v1124
    %v2568 = vunpack.c.h.b16 %v1124
    %v2569 = vunpack.c.l.b16 %v1125
    %v2570 = vunpack.c.h.b16 %v1125
    %v2571 = vunpack.c.l.b16 %v1126
    %v2572 = vunpack.c.h.b16 %v1126
    %v2573 = vunpack.c.l.b16 %v1127
    %v2574 = vunpack.c.h.b16 %v1127
    %v2575 = vunpack.c.l.b16 %v1128
    %v2576 = vunpack.c.h.b16 %v1128
    %v2577 = vunpack.c.l.b16 %v1129
    %v2578 = vunpack.c.h.b16 %v1129
    %v2579 = vunpack.c.l.b16 %v1130
    %v2580 = vunpack.c.h.b16 %v1130
    %v2581 = vunpack.c.l.b16 %v1131
    %v2582 = vunpack.c.h.b16 %v1131
    %v2583 = vunpack.c.l.b16 %v1132
    %v2584 = vunpack.c.h.b16 %v1132
    %v2585 = vunpack.c.l.b16 %v1133
    %v2586 = vunpack.c.h.b16 %v1133
    %v2587 = vunpack.c.l.b16 %v1134
    %v2588 = vunpack.c.h.b16 %v1134
    %v2589 = vunpack.c.l.b16 %v1135
    %v2590 = vunpack.c.h.b16 %v1135
    %v2591 = vunpack.c.l.b16 %v1136
    %v2592 = vunpack.c.h.b16 %v1136
    %v2593 = vunpack.c.l.b16 %v1137
    %v2594 = vunpack.c.h.b16 %v1137
    %v2595 = vunpack.c.l.b16 %v1138
    %v2596 = vunpack.c.h.b16 %v1138
    %v2597 = vunpack.c.l.b16 %v1139
    %v2598 = vunpack.c.h.b16 %v1139
    %v2599 = vunpack.c.l.b16 %v1140
    %v2600 = vunpack.c.h.b16 %v1140
    %v2601 = vunpack.c.l.b16 %v1141
    %v2602 = vunpack.c.h.b16 %v1141
    %v2603 = vunpack.c.l.b16 %v1142
    %v2604 = vunpack.c.h.b16 %v1142
    %v2605 = vunpack.c.l.b16 %v1143
    %v2606 = vunpack.c.h.b16 %v1143
    %v2607 = vunpack.c.l.b16 %v1144
    %v2608 = vunpack.c.h.b16 %v1144
    %v2609 = vunpack.c.l.b16 %v1145
    %v2610 = vunpack.c.h.b16 %v1145
    %v2611 = vunpack.c.l.b16 %v1146
    %v2612 = vunpack.c.h.b16 %v1146
    %v2613 = vunpack.c.l.b16 %v1147
    %v2614 = vunpack.c.h.b16 %v1147
    %v2615 = vunpack.c.l.b16 %v1148
    %v2616 = vunpack.c.h.b16 %v1148
    %v2617 = vunpack.c.l.b16 %v1149
    %v2618 = vunpack.c.h.b16 %v1149
    %v2619 = vunpack.c.l.b16 %v1150
    %v2620 = vunpack.c.h.b16 %v1150
    %v2621 = vunpack.c.l.b16 %v1151
    %v2622 = vunpack.c.h.b16 %v1151
    %v2623 = vunpack.c.l.b16 %v1152
    %v2624 = vunpack.c.h.b16 %v1152
    %v2625 = vunpack.c.l.b16 %v1153
    %v2626 = vunpack.c.h.b16 %v1153
    %v2627 = vunpack.c.l.b16 %v1154
    %v2628 = vunpack.c.h.b16 %v1154
    %v2629 = vunpack.c.l.b16 %v1155
    %v2630 = vunpack.c.h.b16 %v1155
    %v2631 = vunpack.c.l.b16 %v1156
    %v2632 = vunpack.c.h.b16 %v1156
    %v2633 = vunpack.c.l.b16 %v1157
    %v2634 = vunpack.c.h.b16 %v1157
    %v2635 = vunpack.c.l.b16 %v1158
    %v2636 = vunpack.c.h.b16 %v1158
    %v2637 = vunpack.c.l.b16 %v1159
    %v2638 = vunpack.c.h.b16 %v1159
    %v2639 = vunpack.c.l.b16 %v1160
    %v2640 = vunpack.c.h.b16 %v1160
    %v2641 = vunpack.c.l.b16 %v1161
    %v2642 = vunpack.c.h.b16 %v1161
    %v2643 = vunpack.c.l.b16 %v1162
    %v2644 = vunpack.c.h.b16 %v1162
    %v2645 = vunpack.c.l.b16 %v1163
    %v2646 = vunpack.c.h.b16 %v1163
    %v2647 = vunpack.c.l.b16 %v1164
    %v2648 = vunpack.c.h.b16 %v1164
    %v2649 = vunpack.c.l.b16 %v1165
    %v2650 = vunpack.c.h.b16 %v1165
    %v2651 = vunpack.c.l.b16 %v1166
    %v2652 = vunpack.c.h.b16 %v1166
    %v2653 = vunpack.c.l.b16 %v1167
    %v2654 = vunpack.c.h.b16 %v1167
    %v2655 = vunpack.c.l.b16 %v1168
    %v2656 = vunpack.c.h.b16 %v1168
    %v2657 = vunpack.c.l.b16 %v1169
    %v2658 = vunpack.c.h.b16 %v1169
    %v2659 = vunpack.c.l.b16 %v1170
    %v2660 = vunpack.c.h.b16 %v1170
    %v2661 = vunpack.c.l.b16 %v1171
    %v2662 = vunpack.c.h.b16 %v1171
    %v2663 = vunpack.c.l.b16 %v1172
    %v2664 = vunpack.c.h.b16 %v1172
    %v2665 = vunpack.c.l.b16 %v1173
    %v2666 = vunpack.c.h.b16 %v1173
    %v2667 = vunpack.c.l.b16 %v1174
    %v2668 = vunpack.c.h.b16 %v1174
    %v2669 = vunpack.c.l.b16 %v1175
    %v2670 = vunpack.c.h.b16 %v1175
    %v2671 = vunpack.c.l.b16 %v1176
    %v2672 = vunpack.c.h.b16 %v1176
    %v2673 = vunpack.c.l.b16 %v1177
    %v2674 = vunpack.c.h.b16 %v1177
    %v2675 = vunpack.c.l.b16 %v1178
    %v2676 = vunpack.c.h.b16 %v1178
    %v2677 = vunpack.c.l.b16 %v1179
    %v2678 = vunpack.c.h.b16 %v1179
    %v2679 = vunpack.c.l.b16 %v1180
    %v2680 = vunpack.c.h.b16 %v1180
    %v2681 = vunpack.c.l.b16 %v1181
    %v2682 = vunpack.c.h.b16 %v1181
    %v2683 = vunpack.c.l.b16 %v1182
    %v2684 = vunpack.c.h.b16 %v1182
    %v2685 = vunpack.c.l.b16 %v1183
    %v2686 = vunpack.c.h.b16 %v1183
    %v2687 = vunpack.c.l.b16 %v1184
    %v2688 = vunpack.c.h.b16 %v1184
    %v2689 = vunpack.c.l.b16 %v1185
    %v2690 = vunpack.c.h.b16 %v1185
    %v2691 = vunpack.c.l.b16 %v1186
    %v2692 = vunpack.c.h.b16 %v1186
    %v2693 = vunpack.c.l.b16 %v1187
    %v2694 = vunpack.c.h.b16 %v1187
    %v2695 = vunpack.c.l.b16 %v1188
    %v2696 = vunpack.c.h.b16 %v1188
    %v2697 = vunpack.c.l.b16 %v1189
    %v2698 = vunpack.c.h.b16 %v1189
    %v2699 = vunpack.c.l.b16 %v1190
    %v2700 = vunpack.c.h.b16 %v1190
    %v2701 = vunpack.c.l.b16 %v1191
    %v2702 = vunpack.c.h.b16 %v1191
    %v2703 = vunpack.c.l.b16 %v1192
    %v2704 = vunpack.c.h.b16 %v1192
    %v2705 = vunpack.c.l.b16 %v1193
    %v2706 = vunpack.c.h.b16 %v1193
    %v2707 = vunpack.c.l.b16 %v1194
    %v2708 = vunpack.c.h.b16 %v1194
    %v2709 = vunpack.c.l.b16 %v1195
    %v2710 = vunpack.c.h.b16 %v1195
    %v2711 = vunpack.c.l.b16 %v1196
    %v2712 = vunpack.c.h.b16 %v1196
    %v2713 = vunpack.c.l.b16 %v1197
    %v2714 = vunpack.c.h.b16 %v1197
    %v2715 = vunpack.c.l.b16 %v1198
    %v2716 = vunpack.c.h.b16 %v1198
    %v2717 = vunpack.c.l.b16 %v1199
    %v2718 = vunpack.c.h.b16 %v1199
    %v2719 = vunpack.c.l.b16 %v1200
    %v2720 = vunpack.c.h.b16 %v1200
    %v2721 = vunpack.c.l.b16 %v1201
    %v2722 = vunpack.c.h.b16 %v1201
    %v2723 = vunpack.c.l.b16 %v1202
    %v2724 = vunpack.c.h.b16 %v1202
    %v2725 = vunpack.c.l.b16 %v1203
    %v2726 = vunpack.c.h.b16 %v1203
    %v2727 = vunpack.c.l.b16 %v1204
    %v2728 = vunpack.c.h.b16 %v1204
    %v2729 = vunpack.c.l.b16 %v1205
    %v2730 = vunpack.c.h.b16 %v1205
    %v2731 = vunpack.c.l.b16 %v1206
    %v2732 = vunpack.c.h.b16 %v1206
    %v2733 = vunpack.c.l.b16 %v1207
    %v2734 = vunpack.c.h.b16 %v1207
    %v2735 = vunpack.c.l.b16 %v1208
    %v2736 = vunpack.c.h.b16 %v1208
    %v2737 = vunpack.c.l.b16 %v1209
    %v2738 = vunpack.c.h.b16 %v1209
    %v2739 = vunpack.c.l.b16 %v1210
    %v2740 = vunpack.c.h.b16 %v1210
    %v2741 = vunpack.c.l.b16 %v1211
    %v2742 = vunpack.c.h.b16 %v1211
    %v2743 = vunpack.c.l.b16 %v1212
    %v2744 = vunpack.c.h.b16 %v1212
    %v2745 = vunpack.c.l.b16 %v1213
    %v2746 = vunpack.c.h.b16 %v1213
    %v2747 = vunpack.c.l.b16 %v1214
    %v2748 = vunpack.c.h.b16 %v1214
    %v2749 = vunpack.c.l.b16 %v1215
    %v2750 = vunpack.c.h.b16 %v1215
    %v2751 = vunpack.c.l.b16 %v1216
    %v2752 = vunpack.c.h.b16 %v1216
    %v2753 = vunpack.c.l.b16 %v1217
    %v2754 = vunpack.c.h.b16 %v1217
    %v2755 = vunpack.c.l.b16 %v1218
    %v2756 = vunpack.c.h.b16 %v1218
    %v2757 = vunpack.c.l.b16 %v1219
    %v2758 = vunpack.c.h.b16 %v1219
    %v2759 = vunpack.c.l.b16 %v1220
    %v2760 = vunpack.c.h.b16 %v1220
    %v2761 = vunpack.c.l.b16 %v1221
    %v2762 = vunpack.c.h.b16 %v1221
    %v2763 = vunpack.c.l.b16 %v1222
    %v2764 = vunpack.c.h.b16 %v1222
    %v2765 = vunpack.c.l.b16 %v1223
    %v2766 = vunpack.c.h.b16 %v1223
    %v2767 = vunpack.c.l.b16 %v1224
    %v2768 = vunpack.c.h.b16 %v1224
    %v2769 = vunpack.c.l.b16 %v1225
    %v2770 = vunpack.c.h.b16 %v1225
    %v2771 = vunpack.c.l.b16 %v1226
    %v2772 = vunpack.c.h.b16 %v1226
    %v2773 = vunpack.c.l.b16 %v1227
    %v2774 = vunpack.c.h.b16 %v1227
    %v2775 = vunpack.c.l.b16 %v1228
    %v2776 = vunpack.c.h.b16 %v1228
    %v2777 = vunpack.c.l.b16 %v1229
    %v2778 = vunpack.c.h.b16 %v1229
    %v2779 = vunpack.c.l.b16 %v1230
    %v2780 = vunpack.c.h.b16 %v1230
    %v2781 = vunpack.c.l.b16 %v1231
    %v2782 = vunpack.c.h.b16 %v1231
    %v2783 = vunpack.c.l.b16 %v1232
    %v2784 = vunpack.c.h.b16 %v1232
    %v2785 = vunpack.c.l.b16 %v1233
    %v2786 = vunpack.c.h.b16 %v1233
    %v2787 = vunpack.c.l.b16 %v1234
    %v2788 = vunpack.c.h.b16 %v1234
    %v2789 = vunpack.c.l.b16 %v1235
    %v2790 = vunpack.c.h.b16 %v1235
    %v2791 = vunpack.c.l.b16 %v1236
    %v2792 = vunpack.c.h.b16 %v1236
    %v2793 = vunpack.c.l.b16 %v1237
    %v2794 = vunpack.c.h.b16 %v1237
    %v2795 = vunpack.c.l.b16 %v1238
    %v2796 = vunpack.c.h.b16 %v1238
    %v2797 = vunpack.c.l.b16 %v1239
    %v2798 = vunpack.c.h.b16 %v1239
    %v2799 = vunpack.c.l.b16 %v1240
    %v2800 = vunpack.c.h.b16 %v1240
    %v2801 = vunpack.c.l.b16 %v1241
    %v2802 = vunpack.c.h.b16 %v1241
    %v2803 = vunpack.c.l.b16 %v1242
    %v2804 = vunpack.c.h.b16 %v1242
    %v2805 = vunpack.c.l.b16 %v1243
    %v2806 = vunpack.c.h.b16 %v1243
    %v2807 = vunpack.c.l.b16 %v1244
    %v2808 = vunpack.c.h.b16 %v1244
    %v2809 = vunpack.c.l.b16 %v1245
    %v2810 = vunpack.c.h.b16 %v1245
    %v2811 = vunpack.c.l.b16 %v1246
    %v2812 = vunpack.c.h.b16 %v1246
    %v2813 = vunpack.c.l.b16 %v1247
    %v2814 = vunpack.c.h.b16 %v1247
    %v2815 = vunpack.c.l.b16 %v1248
    %v2816 = vunpack.c.h.b16 %v1248
    %v2817 = vunpack.c.l.b16 %v1249
    %v2818 = vunpack.c.h.b16 %v1249
    %v2819 = vunpack.c.l.b16 %v1250
    %v2820 = vunpack.c.h.b16 %v1250
    %v2821 = vunpack.c.l.b16 %v1251
    %v2822 = vunpack.c.h.b16 %v1251
    %v2823 = vunpack.c.l.b16 %v1252
    %v2824 = vunpack.c.h.b16 %v1252
    %v2825 = vunpack.c.l.b16 %v1253
    %v2826 = vunpack.c.h.b16 %v1253
    %v2827 = vunpack.c.l.b16 %v1254
    %v2828 = vunpack.c.h.b16 %v1254
    %v2829 = vunpack.c.l.b16 %v1255
    %v2830 = vunpack.c.h.b16 %v1255
    %v2831 = vunpack.c.l.b16 %v1256
    %v2832 = vunpack.c.h.b16 %v1256
    %v2833 = vunpack.c.l.b16 %v1257
    %v2834 = vunpack.c.h.b16 %v1257
    %v2835 = vunpack.c.l.b16 %v1258
    %v2836 = vunpack.c.h.b16 %v1258
    %v2837 = vpack.c.b16 %v1821, %v1813
    %v2838 = vpack.c.b16 %v1822, %v1814
    %v2839 = vpack.c.b16 %v1823, %v1815
    %v2840 = vpack.c.b16 %v1824, %v1816
    %v2841 = vpack.c.b16 %v1825, %v1817
    %v2842 = vpack.c.b16 %v1826, %v1818
    %v2843 = vpack.c.b16 %v1827, %v1819
    %v2844 = vpack.c.b16 %v1828, %v1820
    %v2845 = vpack.c.b16 %v1837, %v1829
    %v2846 = vpack.c.b16 %v1838, %v1830
    %v2847 = vpack.c.b16 %v1839, %v1831
    %v2848 = vpack.c.b16 %v1840, %v1832
    %v2849 = vpack.c.b16 %v1841, %v1833
    %v2850 = vpack.c.b16 %v1842, %v1834
    %v2851 = vpack.c.b16 %v1843, %v1835
    %v2852 = vpack.c.b16 %v1844, %v1836
    %v2853 = vpack.c.b16 %v1853, %v1845
    %v2854 = vpack.c.b16 %v1854, %v1846
    %v2855 = vpack.c.b16 %v1855, %v1847
    %v2856 = vpack.c.b16 %v1856, %v1848
    %v2857 = vpack.c.b16 %v1857, %v1849
    %v2858 = vpack.c.b16 %v1858, %v1850
    %v2859 = vpack.c.b16 %v1859, %v1851
    %v2860 = vpack.c.b16 %v1860, %v1852
    %v2861 = vpack.c.b16 %v1869, %v1861
    %v2862 = vpack.c.b16 %v1870, %v1862
    %v2863 = vpack.c.b16 %v1871, %v1863
    %v2864 = vpack.c.b16 %v1872, %v1864
    %v2865 = vpack.c.b16 %v1873, %v1865
    %v2866 = vpack.c.b16 %v1874, %v1866
    %v2867 = vpack.c.b16 %v1875, %v1867
    %v2868 = vpack.c.b16 %v1876, %v1868
    %v2869 = vpack.c.b16 %v1885, %v1877
    %v2870 = vpack.c.b16 %v1886, %v1878
    %v2871 = vpack.c.b16 %v1887, %v1879
    %v2872 = vpack.c.b16 %v1888, %v1880
    %v2873 = vpack.c.b16 %v1889, %v1881
    %v2874 = vpack.c.b16 %v1890, %v1882
    %v2875 = vpack.c.b16 %v1891, %v1883
    %v2876 = vpack.c.b16 %v1892, %v1884
    %v2877 = vpack.c.b16 %v1901, %v1893
    %v2878 = vpack.c.b16 %v1902, %v1894
    %v2879 = vpack.c.b16 %v1903, %v1895
    %v2880 = vpack.c.b16 %v1904, %v1896
    %v2881 = vpack.c.b16 %v1905, %v1897
    %v2882 = vpack.c.b16 %v1906, %v1898
    %v2883 = vpack.c.b16 %v1907, %v1899
    %v2884 = vpack.c.b16 %v1908, %v1900
    %v2885 = vpack.c.b16 %v1917, %v1909
    %v2886 = vpack.c.b16 %v1918, %v1910
    %v2887 = vpack.c.b16 %v1919, %v1911
    %v2888 = vpack.c.b16 %v1920, %v1912
    %v2889 = vpack.c.b16 %v1921, %v1913
    %v2890 = vpack.c.b16 %v1922, %v1914
    %v2891 = vpack.c.b16 %v1923, %v1915
    %v2892 = vpack.c.b16 %v1924, %v1916
    %v2893 = vpack.c.b16 %v1933, %v1925
    %v2894 = vpack.c.b16 %v1934, %v1926
    %v2895 = vpack.c.b16 %v1935, %v1927
    %v2896 = vpack.c.b16 %v1936, %v1928
    %v2897 = vpack.c.b16 %v1937, %v1929
    %v2898 = vpack.c.b16 %v1938, %v1930
    %v2899 = vpack.c.b16 %v1939, %v1931
    %v2900 = vpack.c.b16 %v1940, %v1932
    %v2901 = vpack.c.b16 %v1949, %v1941
    %v2902 = vpack.c.b16 %v1950, %v1942
    %v2903 = vpack.c.b16 %v1951, %v1943
    %v2904 = vpack.c.b16 %v1952, %v1944
    %v2905 = vpack.c.b16 %v1953, %v1945
    %v2906 = vpack.c.b16 %v1954, %v1946
    %v2907 = vpack.c.b16 %v1955, %v1947
    %v2908 = vpack.c.b16 %v1956, %v1948
    %v2909 = vpack.c.b16 %v1965, %v1957
    %v2910 = vpack.c.b16 %v1966, %v1958
    %v2911 = vpack.c.b16 %v1967, %v1959
    %v2912 = vpack.c.b16 %v1968, %v1960
    %v2913 = vpack.c.b16 %v1969, %v1961
    %v2914 = vpack.c.b16 %v1970, %v1962
    %v2915 = vpack.c.b16 %v1971, %v1963
    %v2916 = vpack.c.b16 %v1972, %v1964
    %v2917 = vpack.c.b16 %v1981, %v1973
    %v2918 = vpack.c.b16 %v1982, %v1974
    %v2919 = vpack.c.b16 %v1983, %v1975
    %v2920 = vpack.c.b16 %v1984, %v1976
    %v2921 = vpack.c.b16 %v1985, %v1977
    %v2922 = vpack.c.b16 %v1986, %v1978
    %v2923 = vpack.c.b16 %v1987, %v1979
    %v2924 = vpack.c.b16 %v1988, %v1980
    %v2925 = vpack.c.b16 %v1997, %v1989
    %v2926 = vpack.c.b16 %v1998, %v1990
    %v2927 = vpack.c.b16 %v1999, %v1991
    %v2928 = vpack.c.b16 %v2000, %v1992
    %v2929 = vpack.c.b16 %v2001, %v1993
    %v2930 = vpack.c.b16 %v2002, %v1994
    %v2931 = vpack.c.b16 %v2003, %v1995
    %v2932 = vpack.c.b16 %v2004, %v1996
    %v2933 = vpack.c.b16 %v2013, %v2005
    %v2934 = vpack.c.b16 %v2014, %v2006
    %v2935 = vpack.c.b16 %v2015, %v2007
    %v2936 = vpack.c.b16 %v2016, %v2008
    %v2937 = vpack.c.b16 %v2017, %v2009
    %v2938 = vpack.c.b16 %v2018, %v2010
    %v2939 = vpack.c.b16 %v2019, %v2011
    %v2940 = vpack.c.b16 %v2020, %v2012
    %v2941 = vpack.c.b16 %v2029, %v2021
    %v2942 = vpack.c.b16 %v2030, %v2022
    %v2943 = vpack.c.b16 %v2031, %v2023
    %v2944 = vpack.c.b16 %v2032, %v2024
    %v2945 = vpack.c.b16 %v2033, %v2025
    %v2946 = vpack.c.b16 %v2034, %v2026
    %v2947 = vpack.c.b16 %v2035, %v2027
    %v2948 = vpack.c.b16 %v2036, %v2028
    %v2949 = vpack.c.b16 %v2045, %v2037
    %v2950 = vpack.c.b16 %v2046, %v2038
    %v2951 = vpack.c.b16 %v2047, %v2039
    %v2952 = vpack.c.b16 %v2048, %v2040
    %v2953 = vpack.c.b16 %v2049, %v2041
    %v2954 = vpack.c.b16 %v2050, %v2042
    %v2955 = vpack.c.b16 %v2051, %v2043
    %v2956 = vpack.c.b16 %v2052, %v2044
    %v2957 = vpack.c.b16 %v2061, %v2053
    %v2958 = vpack.c.b16 %v2062, %v2054
    %v2959 = vpack.c.b16 %v2063, %v2055
    %v2960 = vpack.c.b16 %v2064, %v2056
    %v2961 = vpack.c.b16 %v2065, %v2057
    %v2962 = vpack.c.b16 %v2066, %v2058
    %v2963 = vpack.c.b16 %v2067, %v2059
    %v2964 = vpack.c.b16 %v2068, %v2060
    %v2965 = vpack.c.b16 %v2077, %v2069
    %v2966 = vpack.c.b16 %v2078, %v2070
    %v2967 = vpack.c.b16 %v2079, %v2071
    %v2968 = vpack.c.b16 %v2080, %v2072
    %v2969 = vpack.c.b16 %v2081, %v2073
    %v2970 = vpack.c.b16 %v2082, %v2074
    %v2971 = vpack.c.b16 %v2083, %v2075
    %v2972 = vpack.c.b16 %v2084, %v2076
    %v2973 = vpack.c.b16 %v2093, %v2085
    %v2974 = vpack.c.b16 %v2094, %v2086
    %v2975 = vpack.c.b16 %v2095, %v2087
    %v2976 = vpack.c.b16 %v2096, %v2088
    %v2977 = vpack.c.b16 %v2097, %v2089
    %v2978 = vpack.c.b16 %v2098, %v2090
    %v2979 = vpack.c.b16 %v2099, %v2091
    %v2980 = vpack.c.b16 %v2100, %v2092
    %v2981 = vpack.c.b16 %v2109, %v2101
    %v2982 = vpack.c.b16 %v2110, %v2102
    %v2983 = vpack.c.b16 %v2111, %v2103
    %v2984 = vpack.c.b16 %v2112, %v2104
    %v2985 = vpack.c.b16 %v2113, %v2105
    %v2986 = vpack.c.b16 %v2114, %v2106
    %v2987 = vpack.c.b16 %v2115, %v2107
    %v2988 = vpack.c.b16 %v2116, %v2108
    %v2989 = vpack.c.b16 %v2125, %v2117
    %v2990 = vpack.c.b16 %v2126, %v2118
    %v2991 = vpack.c.b16 %v2127, %v2119
    %v2992 = vpack.c.b16 %v2128, %v2120
    %v2993 = vpack.c.b16 %v2129, %v2121
    %v2994 = vpack.c.b16 %v2130, %v2122
    %v2995 = vpack.c.b16 %v2131, %v2123
    %v2996 = vpack.c.b16 %v2132, %v2124
    %v2997 = vpack.c.b16 %v2141, %v2133
    %v2998 = vpack.c.b16 %v2142, %v2134
    %v2999 = vpack.c.b16 %v2143, %v2135
    %v3000 = vpack.c.b16 %v2144, %v2136
    %v3001 = vpack.c.b16 %v2145, %v2137
    %v3002 = vpack.c.b16 %v2146, %v2138
    %v3003 = vpack.c.b16 %v2147, %v2139
    %v3004 = vpack.c.b16 %v2148, %v2140
    %v3005 = vpack.c.b16 %v2157, %v2149
    %v3006 = vpack.c.b16 %v2158, %v2150
    %v3007 = vpack.c.b16 %v2159, %v2151
    %v3008 = vpack.c.b16 %v2160, %v2152
    %v3009 = vpack.c.b16 %v2161, %v2153
    %v3010 = vpack.c.b16 %v2162, %v2154
    %v3011 = vpack.c.b16 %v2163, %v2155
    %v3012 = vpack.c.b16 %v2164, %v2156
    %v3013 = vpack.c.b16 %v2173, %v2165
    %v3014 = vpack.c.b16 %v2174, %v2166
    %v3015 = vpack.c.b16 %v2175, %v2167
    %v3016 = vpack.c.b16 %v2176, %v2168
    %v3017 = vpack.c.b16 %v2177, %v2169
    %v3018 = vpack.c.b16 %v2178, %v2170
    %v3019 = vpack.c.b16 %v2179, %v2171
    %v3020 = vpack.c.b16 %v2180, %v2172
    %v3021 = vpack.c.b16 %v2189, %v2181
    %v3022 = vpack.c.b16 %v2190, %v2182
    %v3023 = vpack.c.b16 %v2191, %v2183
    %v3024 = vpack.c.b16 %v2192, %v2184
    %v3025 = vpack.c.b16 %v2193, %v2185
    %v3026 = vpack.c.b16 %v2194, %v2186
    %v3027 = vpack.c.b16 %v2195, %v2187
    %v3028 = vpack.c.b16 %v2196, %v2188
    %v3029 = vpack.c.b16 %v2205, %v2197
    %v3030 = vpack.c.b16 %v2206, %v2198
    %v3031 = vpack.c.b16 %v2207, %v2199
    %v3032 = vpack.c.b16 %v2208, %v2200
    %v3033 = vpack.c.b16 %v2209, %v2201
    %v3034 = vpack.c.b16 %v2210, %v2202
    %v3035 = vpack.c.b16 %v2211, %v2203
    %v3036 = vpack.c.b16 %v2212, %v2204
    %v3037 = vpack.c.b16 %v2221, %v2213
    %v3038 = vpack.c.b16 %v2222, %v2214
    %v3039 = vpack.c.b16 %v2223, %v2215
    %v3040 = vpack.c.b16 %v2224, %v2216
    %v3041 = vpack.c.b16 %v2225, %v2217
    %v3042 = vpack.c.b16 %v2226, %v2218
    %v3043 = vpack.c.b16 %v2227, %v2219
    %v3044 = vpack.c.b16 %v2228, %v2220
    %v3045 = vpack.c.b16 %v2237, %v2229
    %v3046 = vpack.c.b16 %v2238, %v2230
    %v3047 = vpack.c.b16 %v2239, %v2231
    %v3048 = vpack.c.b16 %v2240, %v2232
    %v3049 = vpack.c.b16 %v2241, %v2233
    %v3050 = vpack.c.b16 %v2242, %v2234
    %v3051 = vpack.c.b16 %v2243, %v2235
    %v3052 = vpack.c.b16 %v2244, %v2236
    %v3053 = vpack.c.b16 %v2253, %v2245
    %v3054 = vpack.c.b16 %v2254, %v2246
    %v3055 = vpack.c.b16 %v2255, %v2247
    %v3056 = vpack.c.b16 %v2256, %v2248
    %v3057 = vpack.c.b16 %v2257, %v2249
    %v3058 = vpack.c.b16 %v2258, %v2250
    %v3059 = vpack.c.b16 %v2259, %v2251
    %v3060 = vpack.c.b16 %v2260, %v2252
    %v3061 = vpack.c.b16 %v2269, %v2261
    %v3062 = vpack.c.b16 %v2270, %v2262
    %v3063 = vpack.c.b16 %v2271, %v2263
    %v3064 = vpack.c.b16 %v2272, %v2264
    %v3065 = vpack.c.b16 %v2273, %v2265
    %v3066 = vpack.c.b16 %v2274, %v2266
    %v3067 = vpack.c.b16 %v2275, %v2267
    %v3068 = vpack.c.b16 %v2276, %v2268
    %v3069 = vpack.c.b16 %v2285, %v2277
    %v3070 = vpack.c.b16 %v2286, %v2278
    %v3071 = vpack.c.b16 %v2287, %v2279
    %v3072 = vpack.c.b16 %v2288, %v2280
    %v3073 = vpack.c.b16 %v2289, %v2281
    %v3074 = vpack.c.b16 %v2290, %v2282
    %v3075 = vpack.c.b16 %v2291, %v2283
    %v3076 = vpack.c.b16 %v2292, %v2284
    %v3077 = vpack.c.b16 %v2301, %v2293
    %v3078 = vpack.c.b16 %v2302, %v2294
    %v3079 = vpack.c.b16 %v2303, %v2295
    %v3080 = vpack.c.b16 %v2304, %v2296
    %v3081 = vpack.c.b16 %v2305, %v2297
    %v3082 = vpack.c.b16 %v2306, %v2298
    %v3083 = vpack.c.b16 %v2307, %v2299
    %v3084 = vpack.c.b16 %v2308, %v2300
    %v3085 = vpack.c.b16 %v2317, %v2309
    %v3086 = vpack.c.b16 %v2318, %v2310
    %v3087 = vpack.c.b16 %v2319, %v2311
    %v3088 = vpack.c.b16 %v2320, %v2312
    %v3089 = vpack.c.b16 %v2321, %v2313
    %v3090 = vpack.c.b16 %v2322, %v2314
    %v3091 = vpack.c.b16 %v2323, %v2315
    %v3092 = vpack.c.b16 %v2324, %v2316
    %v3093 = vpack.c.b16 %v2333, %v2325
    %v3094 = vpack.c.b16 %v2334, %v2326
    %v3095 = vpack.c.b16 %v2335, %v2327
    %v3096 = vpack.c.b16 %v2336, %v2328
    %v3097 = vpack.c.b16 %v2337, %v2329
    %v3098 = vpack.c.b16 %v2338, %v2330
    %v3099 = vpack.c.b16 %v2339, %v2331
    %v3100 = vpack.c.b16 %v2340, %v2332
    %v3101 = vpack.c.b16 %v2349, %v2341
    %v3102 = vpack.c.b16 %v2350, %v2342
    %v3103 = vpack.c.b16 %v2351, %v2343
    %v3104 = vpack.c.b16 %v2352, %v2344
    %v3105 = vpack.c.b16 %v2353, %v2345
    %v3106 = vpack.c.b16 %v2354, %v2346
    %v3107 = vpack.c.b16 %v2355, %v2347
    %v3108 = vpack.c.b16 %v2356, %v2348
    %v3109 = vpack.c.b16 %v2365, %v2357
    %v3110 = vpack.c.b16 %v2366, %v2358
    %v3111 = vpack.c.b16 %v2367, %v2359
    %v3112 = vpack.c.b16 %v2368, %v2360
    %v3113 = vpack.c.b16 %v2369, %v2361
    %v3114 = vpack.c.b16 %v2370, %v2362
    %v3115 = vpack.c.b16 %v2371, %v2363
    %v3116 = vpack.c.b16 %v2372, %v2364
    %v3117 = vpack.c.b16 %v2381, %v2373
    %v3118 = vpack.c.b16 %v2382, %v2374
    %v3119 = vpack.c.b16 %v2383, %v2375
    %v3120 = vpack.c.b16 %v2384, %v2376
    %v3121 = vpack.c.b16 %v2385, %v2377
    %v3122 = vpack.c.b16 %v2386, %v2378
    %v3123 = vpack.c.b16 %v2387, %v2379
    %v3124 = vpack.c.b16 %v2388, %v2380
    %v3125 = vpack.c.b16 %v2397, %v2389
    %v3126 = vpack.c.b16 %v2398, %v2390
    %v3127 = vpack.c.b16 %v2399, %v2391
    %v3128 = vpack.c.b16 %v2400, %v2392
    %v3129 = vpack.c.b16 %v2401, %v2393
    %v3130 = vpack.c.b16 %v2402, %v2394
    %v3131 = vpack.c.b16 %v2403, %v2395
    %v3132 = vpack.c.b16 %v2404, %v2396
    %v3133 = vpack.c.b16 %v2413, %v2405
    %v3134 = vpack.c.b16 %v2414, %v2406
    %v3135 = vpack.c.b16 %v2415, %v2407
    %v3136 = vpack.c.b16 %v2416, %v2408
    %v3137 = vpack.c.b16 %v2417, %v2409
    %v3138 = vpack.c.b16 %v2418, %v2410
    %v3139 = vpack.c.b16 %v2419, %v2411
    %v3140 = vpack.c.b16 %v2420, %v2412
    %v3141 = vpack.c.b16 %v2429, %v2421
    %v3142 = vpack.c.b16 %v2430, %v2422
    %v3143 = vpack.c.b16 %v2431, %v2423
    %v3144 = vpack.c.b16 %v2432, %v2424
    %v3145 = vpack.c.b16 %v2433, %v2425
    %v3146 = vpack.c.b16 %v2434, %v2426
    %v3147 = vpack.c.b16 %v2435, %v2427
    %v3148 = vpack.c.b16 %v2436, %v2428
    %v3149 = vpack.c.b16 %v2445, %v2437
    %v3150 = vpack.c.b16 %v2446, %v2438
    %v3151 = vpack.c.b16 %v2447, %v2439
    %v3152 = vpack.c.b16 %v2448, %v2440
    %v3153 = vpack.c.b16 %v2449, %v2441
    %v3154 = vpack.c.b16 %v2450, %v2442
    %v3155 = vpack.c.b16 %v2451, %v2443
    %v3156 = vpack.c.b16 %v2452, %v2444
    %v3157 = vpack.c.b16 %v2461, %v2453
    %v3158 = vpack.c.b16 %v2462, %v2454
    %v3159 = vpack.c.b16 %v2463, %v2455
    %v3160 = vpack.c.b16 %v2464, %v2456
    %v3161 = vpack.c.b16 %v2465, %v2457
    %v3162 = vpack.c.b16 %v2466, %v2458
    %v3163 = vpack.c.b16 %v2467, %v2459
    %v3164 = vpack.c.b16 %v2468, %v2460
    %v3165 = vpack.c.b16 %v2477, %v2469
    %v3166 = vpack.c.b16 %v2478, %v2470
    %v3167 = vpack.c.b16 %v2479, %v2471
    %v3168 = vpack.c.b16 %v2480, %v2472
    %v3169 = vpack.c.b16 %v2481, %v2473
    %v3170 = vpack.c.b16 %v2482, %v2474
    %v3171 = vpack.c.b16 %v2483, %v2475
    %v3172 = vpack.c.b16 %v2484, %v2476
    %v3173 = vpack.c.b16 %v2493, %v2485
    %v3174 = vpack.c.b16 %v2494, %v2486
    %v3175 = vpack.c.b16 %v2495, %v2487
    %v3176 = vpack.c.b16 %v2496, %v2488
    %v3177 = vpack.c.b16 %v2497, %v2489
    %v3178 = vpack.c.b16 %v2498, %v2490
    %v3179 = vpack.c.b16 %v2499, %v2491
    %v3180 = vpack.c.b16 %v2500, %v2492
    %v3181 = vpack.c.b16 %v2509, %v2501
    %v3182 = vpack.c.b16 %v2510, %v2502
    %v3183 = vpack.c.b16 %v2511, %v2503
    %v3184 = vpack.c.b16 %v2512, %v2504
    %v3185 = vpack.c.b16 %v2513, %v2505
    %v3186 = vpack.c.b16 %v2514, %v2506
    %v3187 = vpack.c.b16 %v2515, %v2507
    %v3188 = vpack.c.b16 %v2516, %v2508
    %v3189 = vpack.c.b16 %v2525, %v2517
    %v3190 = vpack.c.b16 %v2526, %v2518
    %v3191 = vpack.c.b16 %v2527, %v2519
    %v3192 = vpack.c.b16 %v2528, %v2520
    %v3193 = vpack.c.b16 %v2529, %v2521
    %v3194 = vpack.c.b16 %v2530, %v2522
    %v3195 = vpack.c.b16 %v2531, %v2523
    %v3196 = vpack.c.b16 %v2532, %v2524
    %v3197 = vpack.c.b16 %v2541, %v2533
    %v3198 = vpack.c.b16 %v2542, %v2534
    %v3199 = vpack.c.b16 %v2543, %v2535
    %v3200 = vpack.c.b16 %v2544, %v2536
    %v3201 = vpack.c.b16 %v2545, %v2537
    %v3202 = vpack.c.b16 %v2546, %v2538
    %v3203 = vpack.c.b16 %v2547, %v2539
    %v3204 = vpack.c.b16 %v2548, %v2540
    %v3205 = vpack.c.b16 %v2557, %v2549
    %v3206 = vpack.c.b16 %v2558, %v2550
    %v3207 = vpack.c.b16 %v2559, %v2551
    %v3208 = vpack.c.b16 %v2560, %v2552
    %v3209 = vpack.c.b16 %v2561, %v2553
    %v3210 = vpack.c.b16 %v2562, %v2554
    %v3211 = vpack.c.b16 %v2563, %v2555
    %v3212 = vpack.c.b16 %v2564, %v2556
    %v3213 = vpack.c.b16 %v2573, %v2565
    %v3214 = vpack.c.b16 %v2574, %v2566
    %v3215 = vpack.c.b16 %v2575, %v2567
    %v3216 = vpack.c.b16 %v2576, %v2568
    %v3217 = vpack.c.b16 %v2577, %v2569
    %v3218 = vpack.c.b16 %v2578, %v2570
    %v3219 = vpack.c.b16 %v2579, %v2571
    %v3220 = vpack.c.b16 %v2580, %v2572
    %v3221 = vpack.c.b16 %v2589, %v2581
    %v3222 = vpack.c.b16 %v2590, %v2582
    %v3223 = vpack.c.b16 %v2591, %v2583
    %v3224 = vpack.c.b16 %v2592, %v2584
    %v3225 = vpack.c.b16 %v2593, %v2585
    %v3226 = vpack.c.b16 %v2594, %v2586
    %v3227 = vpack.c.b16 %v2595, %v2587
    %v3228 = vpack.c.b16 %v2596, %v2588
    %v3229 = vpack.c.b16 %v2605, %v2597
    %v3230 = vpack.c.b16 %v2606, %v2598
    %v3231 = vpack.c.b16 %v2607, %v2599
    %v3232 = vpack.c.b16 %v2608, %v2600
    %v3233 = vpack.c.b16 %v2609, %v2601
    %v3234 = vpack.c.b16 %v2610, %v2602
    %v3235 = vpack.c.b16 %v2611, %v2603
    %v3236 = vpack.c.b16 %v2612, %v2604
    %v3237 = vpack.c.b16 %v2621, %v2613
    %v3238 = vpack.c.b16 %v2622, %v2614
    %v3239 = vpack.c.b16 %v2623, %v2615
    %v3240 = vpack.c.b16 %v2624, %v2616
    %v3241 = vpack.c.b16 %v2625, %v2617
    %v3242 = vpack.c.b16 %v2626, %v2618
    %v3243 = vpack.c.b16 %v2627, %v2619
    %v3244 = vpack.c.b16 %v2628, %v2620
    %v3245 = vpack.c.b16 %v2637, %v2629
    %v3246 = vpack.c.b16 %v2638, %v2630
    %v3247 = vpack.c.b16 %v2639, %v2631
    %v3248 = vpack.c.b16 %v2640, %v2632
    %v3249 = vpack.c.b16 %v2641, %v2633
    %v3250 = vpack.c.b16 %v2642, %v2634
    %v3251 = vpack.c.b16 %v2643, %v2635
    %v3252 = vpack.c.b16 %v2644, %v2636
    %v3253 = vpack.c.b16 %v2653, %v2645
    %v3254 = vpack.c.b16 %v2654, %v2646
    %v3255 = vpack.c.b16 %v2655, %v2647
    %v3256 = vpack.c.b16 %v2656, %v2648
    %v3257 = vpack.c.b16 %v2657, %v2649
    %v3258 = vpack.c.b16 %v2658, %v2650
    %v3259 = vpack.c.b16 %v2659, %v2651
    %v3260 = vpack.c.b16 %v2660, %v2652
    %v3261 = vpack.c.b16 %v2669, %v2661
    %v3262 = vpack.c.b16 %v2670, %v2662
    %v3263 = vpack.c.b16 %v2671, %v2663
    %v3264 = vpack.c.b16 %v2672, %v2664
    %v3265 = vpack.c.b16 %v2673, %v2665
    %v3266 = vpack.c.b16 %v2674, %v2666
    %v3267 = vpack.c.b16 %v2675, %v2667
    %v3268 = vpack.c.b16 %v2676, %v2668
    %v3269 = vpack.c.b16 %v2685, %v2677
    %v3270 = vpack.c.b16 %v2686, %v2678
    %v3271 = vpack.c.b16 %v2687, %v2679
    %v3272 = vpack.c.b16 %v2688, %v2680
    %v3273 = vpack.c.b16 %v2689, %v2681
    %v3274 = vpack.c.b16 %v2690, %v2682
    %v3275 = vpack.c.b16 %v2691, %v2683
    %v3276 = vpack.c.b16 %v2692, %v2684
    %v3277 = vpack.c.b16 %v2701, %v2693
    %v3278 = vpack.c.b16 %v2702, %v2694
    %v3279 = vpack.c.b16 %v2703, %v2695
    %v3280 = vpack.c.b16 %v2704, %v2696
    %v3281 = vpack.c.b16 %v2705, %v2697
    %v3282 = vpack.c.b16 %v2706, %v2698
    %v3283 = vpack.c.b16 %v2707, %v2699
    %v3284 = vpack.c.b16 %v2708, %v2700
    %v3285 = vpack.c.b16 %v2717, %v2709
    %v3286 = vpack.c.b16 %v2718, %v2710
    %v3287 = vpack.c.b16 %v2719, %v2711
    %v3288 = vpack.c.b16 %v2720, %v2712
    %v3289 = vpack.c.b16 %v2721, %v2713
    %v3290 = vpack.c.b16 %v2722, %v2714
    %v3291 = vpack.c.b16 %v2723, %v2715
    %v3292 = vpack.c.b16 %v2724, %v2716
    %v3293 = vpack.c.b16 %v2733, %v2725
    %v3294 = vpack.c.b16 %v2734, %v2726
    %v3295 = vpack.c.b16 %v2735, %v2727
    %v3296 = vpack.c.b16 %v2736, %v2728
    %v3297 = vpack.c.b16 %v2737, %v2729
    %v3298 = vpack.c.b16 %v2738, %v2730
    %v3299 = vpack.c.b16 %v2739, %v2731
    %v3300 = vpack.c.b16 %v2740, %v2732
    %v3301 = vpack.c.b16 %v2749, %v2741
    %v3302 = vpack.c.b16 %v2750, %v2742
    %v3303 = vpack.c.b16 %v2751, %v2743
    %v3304 = vpack.c.b16 %v2752, %v2744
    %v3305 = vpack.c.b16 %v2753, %v2745
    %v3306 = vpack.c.b16 %v2754, %v2746
    %v3307 = vpack.c.b16 %v2755, %v2747
    %v3308 = vpack.c.b16 %v2756, %v2748
    %v3309 = vpack.c.b16 %v2765, %v2757
    %v3310 = vpack.c.b16 %v2766, %v2758
    %v3311 = vpack.c.b16 %v2767, %v2759
    %v3312 = vpack.c.b16 %v2768, %v2760
    %v3313 = vpack.c.b16 %v2769, %v2761
    %v3314 = vpack.c.b16 %v2770, %v2762
    %v3315 = vpack.c.b16 %v2771, %v2763
    %v3316 = vpack.c.b16 %v2772, %v2764
    %v3317 = vpack.c.b16 %v2781, %v2773
    %v3318 = vpack.c.b16 %v2782, %v2774
    %v3319 = vpack.c.b16 %v2783, %v2775
    %v3320 = vpack.c.b16 %v2784, %v2776
    %v3321 = vpack.c.b16 %v2785, %v2777
    %v3322 = vpack.c.b16 %v2786, %v2778
    %v3323 = vpack.c.b16 %v2787, %v2779
    %v3324 = vpack.c.b16 %v2788, %v2780
    %v3325 = vpack.c.b16 %v2797, %v2789
    %v3326 = vpack.c.b16 %v2798, %v2790
    %v3327 = vpack.c.b16 %v2799, %v2791
    %v3328 = vpack.c.b16 %v2800, %v2792
    %v3329 = vpack.c.b16 %v2801, %v2793
    %v3330 = vpack.c.b16 %v2802, %v2794
    %v3331 = vpack.c.b16 %v2803, %v2795
    %v3332 = vpack.c.b16 %v2804, %v2796
    %v3333 = vpack.c.b16 %v2813, %v2805
    %v3334 = vpack.c.b16 %v2814, %v2806
    %v3335 = vpack.c.b16 %v2815, %v2807
    %v3336 = vpack.c.b16 %v2816, %v2808
    %v3337 = vpack.c.b16 %v2817, %v2809
    %v3338 = vpack.c.b16 %v2818, %v2810
    %v3339 = vpack.c.b16 %v2819, %v2811
    %v3340 = vpack.c.b16 %v2820, %v2812
    %v3341 = vpack.c.b16 %v2829, %v2821
    %v3342 = vpack.c.b16 %v2830, %v2822
    %v3343 = vpack.c.b16 %v2831, %v2823
    %v3344 = vpack.c.b16 %v2832, %v2824
    %v3345 = vpack.c.b16 %v2833, %v2825
    %v3346 = vpack.c.b16 %v2834, %v2826
    %v3347 = vpack.c.b16 %v2835, %v2827
    %v3348 = vpack.c.b16 %v2836, %v2828
    %3861 = vmatprep.subr.bf16.mxu0 %v2894
    %3862 = vmatpush1.bf16.msra.mxu0 %v2893
    %3863 = vmatprep.subr.bf16.mxu0 %v2886
    %3864 = vmatpush1.bf16.msra.mxu0 %v2885
    %3865 = vmatprep.subr.bf16.mxu0 %v2878
    %3866 = vmatpush1.bf16.msra.mxu0 %v2877
    %3867 = vmatprep.subr.bf16.mxu0 %v2870
    %3868 = vmatpush1.bf16.msra.mxu0 %v2869
    %3869 = vmatprep.subr.bf16.mxu0 %v2862
    %3870 = vmatpush1.bf16.msra.mxu0 %v2861
    %3871 = vmatprep.subr.bf16.mxu0 %v2854
    %3872 = vmatpush1.bf16.msra.mxu0 %v2853
    %3873 = vmatprep.subr.bf16.mxu0 %v2846
    %3874 = vmatpush1.bf16.msra.mxu0 %v2845
    %3875 = vmatprep.subr.bf16.mxu0 %v2838
    %3876 = vmatpush1.bf16.msra.mxu0 %v2837
    %3877 = vmatprep.subr.bf16.mxu0 %v2958
    %3878 = vmatpush2.bf16.msra.mxu0 %v2957
    %3879 = vmatprep.subr.bf16.mxu0 %v2950
    %3880 = vmatpush2.bf16.msra.mxu0 %v2949
    %3881 = vmatprep.subr.bf16.mxu0 %v2942
    %3882 = vmatpush2.bf16.msra.mxu0 %v2941
    %3883 = vmatprep.subr.bf16.mxu0 %v2934
    %3884 = vmatpush2.bf16.msra.mxu0 %v2933
    %3885 = vmatprep.subr.bf16.mxu0 %v2926
    %3886 = vmatpush2.bf16.msra.mxu0 %v2925
    %3887 = vmatprep.subr.bf16.mxu0 %v2918
    %3888 = vmatpush2.bf16.msra.mxu0 %v2917
    %3889 = vmatprep.subr.bf16.mxu0 %v2910
    %3890 = vmatpush2.bf16.msra.mxu0 %v2909
    %3891 = vmatprep.subr.bf16.mxu0 %v2902
    %3892 = vmatpush2.bf16.msra.mxu0 %v2901
    %3893 = vmatprep.mubr.bf16.mxu0 %v740
    %3894 = vmatmul.mubr.bf16.gmra.mxu0 %v739
    %v3895 = vpop.f32.mrf.mxu0
    %v3896 = vadd.f32 %v1264, %v3895
    %v3897 = vpop.f32.mrf.mxu0
    %v3898 = vadd.f32 %v1268, %v3897
    %v3899 = vpop.f32.mrf.mxu0
    %v3900 = vadd.f32 %v1264, %v3899
    %v3901 = vpop.f32.mrf.mxu0
    %v3902 = vadd.f32 %v1268, %v3901
    %3903 = vdwg.mxu0
    %3904 = vmatprep.subr.bf16.mxu0 %v3022
    %3905 = vmatpush1.bf16.msra.mxu0 %v3021
    %3906 = vmatprep.subr.bf16.mxu0 %v3014
    %3907 = vmatpush1.bf16.msra.mxu0 %v3013
    %3908 = vmatprep.subr.bf16.mxu0 %v3006
    %3909 = vmatpush1.bf16.msra.mxu0 %v3005
    %3910 = vmatprep.subr.bf16.mxu0 %v2998
    %3911 = vmatpush1.bf16.msra.mxu0 %v2997
    %3912 = vmatprep.subr.bf16.mxu0 %v2990
    %3913 = vmatpush1.bf16.msra.mxu0 %v2989
    %3914 = vmatprep.subr.bf16.mxu0 %v2982
    %3915 = vmatpush1.bf16.msra.mxu0 %v2981
    %3916 = vmatprep.subr.bf16.mxu0 %v2974
    %3917 = vmatpush1.bf16.msra.mxu0 %v2973
    %3918 = vmatprep.subr.bf16.mxu0 %v2966
    %3919 = vmatpush1.bf16.msra.mxu0 %v2965
    %3920 = vmatprep.subr.bf16.mxu0 %v3086
    %3921 = vmatpush2.bf16.msra.mxu0 %v3085
    %3922 = vmatprep.subr.bf16.mxu0 %v3078
    %3923 = vmatpush2.bf16.msra.mxu0 %v3077
    %3924 = vmatprep.subr.bf16.mxu0 %v3070
    %3925 = vmatpush2.bf16.msra.mxu0 %v3069
    %3926 = vmatprep.subr.bf16.mxu0 %v3062
    %3927 = vmatpush2.bf16.msra.mxu0 %v3061
    %3928 = vmatprep.subr.bf16.mxu0 %v3054
    %3929 = vmatpush2.bf16.msra.mxu0 %v3053
    %3930 = vmatprep.subr.bf16.mxu0 %v3046
    %3931 = vmatpush2.bf16.msra.mxu0 %v3045
    %3932 = vmatprep.subr.bf16.mxu0 %v3038
    %3933 = vmatpush2.bf16.msra.mxu0 %v3037
    %3934 = vmatprep.subr.bf16.mxu0 %v3030
    %3935 = vmatpush2.bf16.msra.mxu0 %v3029
    %3936 = vmatprep.mubr.bf16.mxu0 %v742
    %3937 = vmatmul.mubr.bf16.gmra.mxu0 %v741
    %v3938 = vpop.f32.mrf.mxu0
    %v3939 = vadd.f32 %v3896, %v3938
    %v3940 = vpop.f32.mrf.mxu0
    %v3941 = vadd.f32 %v3898, %v3940
    %v3942 = vpop.f32.mrf.mxu0
    %v3943 = vadd.f32 %v3900, %v3942
    %v3944 = vpop.f32.mrf.mxu0
    %v3945 = vadd.f32 %v3902, %v3944
    %3946 = vdwg.mxu0
    %3947 = vmatprep.subr.bf16.mxu0 %v3150
    %3948 = vmatpush1.bf16.msra.mxu0 %v3149
    %3949 = vmatprep.subr.bf16.mxu0 %v3142
    %3950 = vmatpush1.bf16.msra.mxu0 %v3141
    %3951 = vmatprep.subr.bf16.mxu0 %v3134
    %3952 = vmatpush1.bf16.msra.mxu0 %v3133
    %3953 = vmatprep.subr.bf16.mxu0 %v3126
    %3954 = vmatpush1.bf16.msra.mxu0 %v3125
    %3955 = vmatprep.subr.bf16.mxu0 %v3118
    %3956 = vmatpush1.bf16.msra.mxu0 %v3117
    %3957 = vmatprep.subr.bf16.mxu0 %v3110
    %3958 = vmatpush1.bf16.msra.mxu0 %v3109
    %3959 = vmatprep.subr.bf16.mxu0 %v3102
    %3960 = vmatpush1.bf16.msra.mxu0 %v3101
    %3961 = vmatprep.subr.bf16.mxu0 %v3094
    %3962 = vmatpush1.bf16.msra.mxu0 %v3093
    %3963 = vmatprep.subr.bf16.mxu0 %v3214
    %3964 = vmatpush2.bf16.msra.mxu0 %v3213
    %3965 = vmatprep.subr.bf16.mxu0 %v3206
    %3966 = vmatpush2.bf16.msra.mxu0 %v3205
    %3967 = vmatprep.subr.bf16.mxu0 %v3198
    %3968 = vmatpush2.bf16.msra.mxu0 %v3197
    %3969 = vmatprep.subr.bf16.mxu0 %v3190
    %3970 = vmatpush2.bf16.msra.mxu0 %v3189
    %3971 = vmatprep.subr.bf16.mxu0 %v3182
    %3972 = vmatpush2.bf16.msra.mxu0 %v3181
    %3973 = vmatprep.subr.bf16.mxu0 %v3174
    %3974 = vmatpush2.bf16.msra.mxu0 %v3173
    %3975 = vmatprep.subr.bf16.mxu0 %v3166
    %3976 = vmatpush2.bf16.msra.mxu0 %v3165
    %3977 = vmatprep.subr.bf16.mxu0 %v3158
    %3978 = vmatpush2.bf16.msra.mxu0 %v3157
    %3979 = vmatprep.mubr.bf16.mxu0 %v744
    %3980 = vmatmul.mubr.bf16.gmra.mxu0 %v743
    %v3981 = vpop.f32.mrf.mxu0
    %v3982 = vadd.f32 %v3939, %v3981
    %v3983 = vpop.f32.mrf.mxu0
    %v3984 = vadd.f32 %v3941, %v3983
    %v3985 = vpop.f32.mrf.mxu0
    %v3986 = vadd.f32 %v3943, %v3985
    %v3987 = vpop.f32.mrf.mxu0
    %v3988 = vadd.f32 %v3945, %v3987
    %3989 = vdwg.mxu0
    %3990 = vmatprep.subr.bf16.mxu0 %v3278
    %3991 = vmatpush1.bf16.msra.mxu0 %v3277
    %3992 = vmatprep.subr.bf16.mxu0 %v3270
    %3993 = vmatpush1.bf16.msra.mxu0 %v3269
    %3994 = vmatprep.subr.bf16.mxu0 %v3262
    %3995 = vmatpush1.bf16.msra.mxu0 %v3261
    %3996 = vmatprep.subr.bf16.mxu0 %v3254
    %3997 = vmatpush1.bf16.msra.mxu0 %v3253
    %3998 = vmatprep.subr.bf16.mxu0 %v3246
    %3999 = vmatpush1.bf16.msra.mxu0 %v3245
    %4000 = vmatprep.subr.bf16.mxu0 %v3238
    %4001 = vmatpush1.bf16.msra.mxu0 %v3237
    %4002 = vmatprep.subr.bf16.mxu0 %v3230
    %4003 = vmatpush1.bf16.msra.mxu0 %v3229
    %4004 = vmatprep.subr.bf16.mxu0 %v3222
    %4005 = vmatpush1.bf16.msra.mxu0 %v3221
    %4006 = vmatprep.subr.bf16.mxu0 %v3342
    %4007 = vmatpush2.bf16.msra.mxu0 %v3341
    %4008 = vmatprep.subr.bf16.mxu0 %v3334
    %4009 = vmatpush2.bf16.msra.mxu0 %v3333
    %4010 = vmatprep.subr.bf16.mxu0 %v3326
    %4011 = vmatpush2.bf16.msra.mxu0 %v3325
    %4012 = vmatprep.subr.bf16.mxu0 %v3318
    %4013 = vmatpush2.bf16.msra.mxu0 %v3317
    %4014 = vmatprep.subr.bf16.mxu0 %v3310
    %4015 = vmatpush2.bf16.msra.mxu0 %v3309
    %4016 = vmatprep.subr.bf16.mxu0 %v3302
    %4017 = vmatpush2.bf16.msra.mxu0 %v3301
    %4018 = vmatprep.subr.bf16.mxu0 %v3294
    %4019 = vmatpush2.bf16.msra.mxu0 %v3293
    %4020 = vmatprep.subr.bf16.mxu0 %v3286
    %4021 = vmatpush2.bf16.msra.mxu0 %v3285
    %4022 = vmatprep.mubr.bf16.mxu0 %v746
    %4023 = vmatmul.mubr.bf16.gmra.mxu0 %v745
    %v4024 = vpop.f32.mrf.mxu0
    %v4025 = vadd.f32 %v3982, %v4024
    %v4026 = vpop.f32.mrf.mxu0
    %v4027 = vadd.f32 %v3984, %v4026
    %v4028 = vpop.f32.mrf.mxu0
    %v4029 = vadd.f32 %v3986, %v4028
    %v4030 = vpop.f32.mrf.mxu0
    %v4031 = vadd.f32 %v3988, %v4030
    %4032 = vdwg.mxu0
    %4033 = vmatprep.subr.bf16.mxu0 %v2896
    %4034 = vmatpush1.bf16.msra.mxu0 %v2895
    %4035 = vmatprep.subr.bf16.mxu0 %v2888
    %4036 = vmatpush1.bf16.msra.mxu0 %v2887
    %4037 = vmatprep.subr.bf16.mxu0 %v2880
    %4038 = vmatpush1.bf16.msra.mxu0 %v2879
    %4039 = vmatprep.subr.bf16.mxu0 %v2872
    %4040 = vmatpush1.bf16.msra.mxu0 %v2871
    %4041 = vmatprep.subr.bf16.mxu0 %v2864
    %4042 = vmatpush1.bf16.msra.mxu0 %v2863
    %4043 = vmatprep.subr.bf16.mxu0 %v2856
    %4044 = vmatpush1.bf16.msra.mxu0 %v2855
    %4045 = vmatprep.subr.bf16.mxu0 %v2848
    %4046 = vmatpush1.bf16.msra.mxu0 %v2847
    %4047 = vmatprep.subr.bf16.mxu0 %v2840
    %4048 = vmatpush1.bf16.msra.mxu0 %v2839
    %4049 = vmatprep.subr.bf16.mxu0 %v2960
    %4050 = vmatpush2.bf16.msra.mxu0 %v2959
    %4051 = vmatprep.subr.bf16.mxu0 %v2952
    %4052 = vmatpush2.bf16.msra.mxu0 %v2951
    %4053 = vmatprep.subr.bf16.mxu0 %v2944
    %4054 = vmatpush2.bf16.msra.mxu0 %v2943
    %4055 = vmatprep.subr.bf16.mxu0 %v2936
    %4056 = vmatpush2.bf16.msra.mxu0 %v2935
    %4057 = vmatprep.subr.bf16.mxu0 %v2928
    %4058 = vmatpush2.bf16.msra.mxu0 %v2927
    %4059 = vmatprep.subr.bf16.mxu0 %v2920
    %4060 = vmatpush2.bf16.msra.mxu0 %v2919
    %4061 = vmatprep.subr.bf16.mxu0 %v2912
    %4062 = vmatpush2.bf16.msra.mxu0 %v2911
    %4063 = vmatprep.subr.bf16.mxu0 %v2904
    %4064 = vmatpush2.bf16.msra.mxu0 %v2903
    %4065 = vmatprep.mubr.bf16.mxu0 %v740
    %4066 = vmatmul.mubr.bf16.gmra.mxu0 %v739
    %v4067 = vpop.f32.mrf.mxu0
    %v4068 = vadd.f32 %v1272, %v4067
    %v4069 = vpop.f32.mrf.mxu0
    %v4070 = vadd.f32 %v1276, %v4069
    %v4071 = vpop.f32.mrf.mxu0
    %v4072 = vadd.f32 %v1272, %v4071
    %v4073 = vpop.f32.mrf.mxu0
    %v4074 = vadd.f32 %v1276, %v4073
    %4075 = vdwg.mxu0
    %4076 = vmatprep.subr.bf16.mxu0 %v3024
    %4077 = vmatpush1.bf16.msra.mxu0 %v3023
    %4078 = vmatprep.subr.bf16.mxu0 %v3016
    %4079 = vmatpush1.bf16.msra.mxu0 %v3015
    %4080 = vmatprep.subr.bf16.mxu0 %v3008
    %4081 = vmatpush1.bf16.msra.mxu0 %v3007
    %4082 = vmatprep.subr.bf16.mxu0 %v3000
    %4083 = vmatpush1.bf16.msra.mxu0 %v2999
    %4084 = vmatprep.subr.bf16.mxu0 %v2992
    %4085 = vmatpush1.bf16.msra.mxu0 %v2991
    %4086 = vmatprep.subr.bf16.mxu0 %v2984
    %4087 = vmatpush1.bf16.msra.mxu0 %v2983
    %4088 = vmatprep.subr.bf16.mxu0 %v2976
    %4089 = vmatpush1.bf16.msra.mxu0 %v2975
    %4090 = vmatprep.subr.bf16.mxu0 %v2968
    %4091 = vmatpush1.bf16.msra.mxu0 %v2967
    %4092 = vmatprep.subr.bf16.mxu0 %v3088
    %4093 = vmatpush2.bf16.msra.mxu0 %v3087
    %4094 = vmatprep.subr.bf16.mxu0 %v3080
    %4095 = vmatpush2.bf16.msra.mxu0 %v3079
    %4096 = vmatprep.subr.bf16.mxu0 %v3072
    %4097 = vmatpush2.bf16.msra.mxu0 %v3071
    %4098 = vmatprep.subr.bf16.mxu0 %v3064
    %4099 = vmatpush2.bf16.msra.mxu0 %v3063
    %4100 = vmatprep.subr.bf16.mxu0 %v3056
    %4101 = vmatpush2.bf16.msra.mxu0 %v3055
    %4102 = vmatprep.subr.bf16.mxu0 %v3048
    %4103 = vmatpush2.bf16.msra.mxu0 %v3047
    %4104 = vmatprep.subr.bf16.mxu0 %v3040
    %4105 = vmatpush2.bf16.msra.mxu0 %v3039
    %4106 = vmatprep.subr.bf16.mxu0 %v3032
    %4107 = vmatpush2.bf16.msra.mxu0 %v3031
    %4108 = vmatprep.mubr.bf16.mxu0 %v742
    %4109 = vmatmul.mubr.bf16.gmra.mxu0 %v741
    %v4110 = vpop.f32.mrf.mxu0
    %v4111 = vadd.f32 %v4068, %v4110
    %v4112 = vpop.f32.mrf.mxu0
    %v4113 = vadd.f32 %v4070, %v4112
    %v4114 = vpop.f32.mrf.mxu0
    %v4115 = vadd.f32 %v4072, %v4114
    %v4116 = vpop.f32.mrf.mxu0
    %v4117 = vadd.f32 %v4074, %v4116
    %4118 = vdwg.mxu0
    %4119 = vmatprep.subr.bf16.mxu0 %v3152
    %4120 = vmatpush1.bf16.msra.mxu0 %v3151
    %4121 = vmatprep.subr.bf16.mxu0 %v3144
    %4122 = vmatpush1.bf16.msra.mxu0 %v3143
    %4123 = vmatprep.subr.bf16.mxu0 %v3136
    %4124 = vmatpush1.bf16.msra.mxu0 %v3135
    %4125 = vmatprep.subr.bf16.mxu0 %v3128
    %4126 = vmatpush1.bf16.msra.mxu0 %v3127
    %4127 = vmatprep.subr.bf16.mxu0 %v3120
    %4128 = vmatpush1.bf16.msra.mxu0 %v3119
    %4129 = vmatprep.subr.bf16.mxu0 %v3112
    %4130 = vmatpush1.bf16.msra.mxu0 %v3111
    %4131 = vmatprep.subr.bf16.mxu0 %v3104
    %4132 = vmatpush1.bf16.msra.mxu0 %v3103
    %4133 = vmatprep.subr.bf16.mxu0 %v3096
    %4134 = vmatpush1.bf16.msra.mxu0 %v3095
    %4135 = vmatprep.subr.bf16.mxu0 %v3216
    %4136 = vmatpush2.bf16.msra.mxu0 %v3215
    %4137 = vmatprep.subr.bf16.mxu0 %v3208
    %4138 = vmatpush2.bf16.msra.mxu0 %v3207
    %4139 = vmatprep.subr.bf16.mxu0 %v3200
    %4140 = vmatpush2.bf16.msra.mxu0 %v3199
    %4141 = vmatprep.subr.bf16.mxu0 %v3192
    %4142 = vmatpush2.bf16.msra.mxu0 %v3191
    %4143 = vmatprep.subr.bf16.mxu0 %v3184
    %4144 = vmatpush2.bf16.msra.mxu0 %v3183
    %4145 = vmatprep.subr.bf16.mxu0 %v3176
    %4146 = vmatpush2.bf16.msra.mxu0 %v3175
    %4147 = vmatprep.subr.bf16.mxu0 %v3168
    %4148 = vmatpush2.bf16.msra.mxu0 %v3167
    %4149 = vmatprep.subr.bf16.mxu0 %v3160
    %4150 = vmatpush2.bf16.msra.mxu0 %v3159
    %4151 = vmatprep.mubr.bf16.mxu0 %v744
    %4152 = vmatmul.mubr.bf16.gmra.mxu0 %v743
    %v4153 = vpop.f32.mrf.mxu0
    %v4154 = vadd.f32 %v4111, %v4153
    %v4155 = vpop.f32.mrf.mxu0
    %v4156 = vadd.f32 %v4113, %v4155
    %v4157 = vpop.f32.mrf.mxu0
    %v4158 = vadd.f32 %v4115, %v4157
    %v4159 = vpop.f32.mrf.mxu0
    %v4160 = vadd.f32 %v4117, %v4159
    %4161 = vdwg.mxu0
    %4162 = vmatprep.subr.bf16.mxu0 %v3280
    %4163 = vmatpush1.bf16.msra.mxu0 %v3279
    %4164 = vmatprep.subr.bf16.mxu0 %v3272
    %4165 = vmatpush1.bf16.msra.mxu0 %v3271
    %4166 = vmatprep.subr.bf16.mxu0 %v3264
    %4167 = vmatpush1.bf16.msra.mxu0 %v3263
    %4168 = vmatprep.subr.bf16.mxu0 %v3256
    %4169 = vmatpush1.bf16.msra.mxu0 %v3255
    %4170 = vmatprep.subr.bf16.mxu0 %v3248
    %4171 = vmatpush1.bf16.msra.mxu0 %v3247
    %4172 = vmatprep.subr.bf16.mxu0 %v3240
    %4173 = vmatpush1.bf16.msra.mxu0 %v3239
    %4174 = vmatprep.subr.bf16.mxu0 %v3232
    %4175 = vmatpush1.bf16.msra.mxu0 %v3231
    %4176 = vmatprep.subr.bf16.mxu0 %v3224
    %4177 = vmatpush1.bf16.msra.mxu0 %v3223
    %4178 = vmatprep.subr.bf16.mxu0 %v3344
    %4179 = vmatpush2.bf16.msra.mxu0 %v3343
    %4180 = vmatprep.subr.bf16.mxu0 %v3336
    %4181 = vmatpush2.bf16.msra.mxu0 %v3335
    %4182 = vmatprep.subr.bf16.mxu0 %v3328
    %4183 = vmatpush2.bf16.msra.mxu0 %v3327
    %4184 = vmatprep.subr.bf16.mxu0 %v3320
    %4185 = vmatpush2.bf16.msra.mxu0 %v3319
    %4186 = vmatprep.subr.bf16.mxu0 %v3312
    %4187 = vmatpush2.bf16.msra.mxu0 %v3311
    %4188 = vmatprep.subr.bf16.mxu0 %v3304
    %4189 = vmatpush2.bf16.msra.mxu0 %v3303
    %4190 = vmatprep.subr.bf16.mxu0 %v3296
    %4191 = vmatpush2.bf16.msra.mxu0 %v3295
    %4192 = vmatprep.subr.bf16.mxu0 %v3288
    %4193 = vmatpush2.bf16.msra.mxu0 %v3287
    %4194 = vmatprep.mubr.bf16.mxu0 %v746
    %4195 = vmatmul.mubr.bf16.gmra.mxu0 %v745
    %v4196 = vpop.f32.mrf.mxu0
    %v4197 = vadd.f32 %v4154, %v4196
    %v4198 = vpop.f32.mrf.mxu0
    %v4199 = vadd.f32 %v4156, %v4198
    %v4200 = vpop.f32.mrf.mxu0
    %v4201 = vadd.f32 %v4158, %v4200
    %v4202 = vpop.f32.mrf.mxu0
    %v4203 = vadd.f32 %v4160, %v4202
    %4204 = vdwg.mxu0
    %4205 = vmatprep.subr.bf16.mxu0 %v2898
    %4206 = vmatpush1.bf16.msra.mxu0 %v2897
    %4207 = vmatprep.subr.bf16.mxu0 %v2890
    %4208 = vmatpush1.bf16.msra.mxu0 %v2889
    %4209 = vmatprep.subr.bf16.mxu0 %v2882
    %4210 = vmatpush1.bf16.msra.mxu0 %v2881
    %4211 = vmatprep.subr.bf16.mxu0 %v2874
    %4212 = vmatpush1.bf16.msra.mxu0 %v2873
    %4213 = vmatprep.subr.bf16.mxu0 %v2866
    %4214 = vmatpush1.bf16.msra.mxu0 %v2865
    %4215 = vmatprep.subr.bf16.mxu0 %v2858
    %4216 = vmatpush1.bf16.msra.mxu0 %v2857
    %4217 = vmatprep.subr.bf16.mxu0 %v2850
    %4218 = vmatpush1.bf16.msra.mxu0 %v2849
    %4219 = vmatprep.subr.bf16.mxu0 %v2842
    %4220 = vmatpush1.bf16.msra.mxu0 %v2841
    %4221 = vmatprep.subr.bf16.mxu0 %v2962
    %4222 = vmatpush2.bf16.msra.mxu0 %v2961
    %4223 = vmatprep.subr.bf16.mxu0 %v2954
    %4224 = vmatpush2.bf16.msra.mxu0 %v2953
    %4225 = vmatprep.subr.bf16.mxu0 %v2946
    %4226 = vmatpush2.bf16.msra.mxu0 %v2945
    %4227 = vmatprep.subr.bf16.mxu0 %v2938
    %4228 = vmatpush2.bf16.msra.mxu0 %v2937
    %4229 = vmatprep.subr.bf16.mxu0 %v2930
    %4230 = vmatpush2.bf16.msra.mxu0 %v2929
    %4231 = vmatprep.subr.bf16.mxu0 %v2922
    %4232 = vmatpush2.bf16.msra.mxu0 %v2921
    %4233 = vmatprep.subr.bf16.mxu0 %v2914
    %4234 = vmatpush2.bf16.msra.mxu0 %v2913
    %4235 = vmatprep.subr.bf16.mxu0 %v2906
    %4236 = vmatpush2.bf16.msra.mxu0 %v2905
    %4237 = vmatprep.mubr.bf16.mxu0 %v740
    %4238 = vmatmul.mubr.bf16.gmra.mxu0 %v739
    %v4239 = vpop.f32.mrf.mxu0
    %v4240 = vadd.f32 %v1280, %v4239
    %v4241 = vpop.f32.mrf.mxu0
    %v4242 = vadd.f32 %v1284, %v4241
    %v4243 = vpop.f32.mrf.mxu0
    %v4244 = vadd.f32 %v1280, %v4243
    %v4245 = vpop.f32.mrf.mxu0
    %v4246 = vadd.f32 %v1284, %v4245
    %4247 = vdwg.mxu0
    %4248 = vmatprep.subr.bf16.mxu0 %v3026
    %4249 = vmatpush1.bf16.msra.mxu0 %v3025
    %4250 = vmatprep.subr.bf16.mxu0 %v3018
    %4251 = vmatpush1.bf16.msra.mxu0 %v3017
    %4252 = vmatprep.subr.bf16.mxu0 %v3010
    %4253 = vmatpush1.bf16.msra.mxu0 %v3009
    %4254 = vmatprep.subr.bf16.mxu0 %v3002
    %4255 = vmatpush1.bf16.msra.mxu0 %v3001
    %4256 = vmatprep.subr.bf16.mxu0 %v2994
    %4257 = vmatpush1.bf16.msra.mxu0 %v2993
    %4258 = vmatprep.subr.bf16.mxu0 %v2986
    %4259 = vmatpush1.bf16.msra.mxu0 %v2985
    %4260 = vmatprep.subr.bf16.mxu0 %v2978
    %4261 = vmatpush1.bf16.msra.mxu0 %v2977
    %4262 = vmatprep.subr.bf16.mxu0 %v2970
    %4263 = vmatpush1.bf16.msra.mxu0 %v2969
    %4264 = vmatprep.subr.bf16.mxu0 %v3090
    %4265 = vmatpush2.bf16.msra.mxu0 %v3089
    %4266 = vmatprep.subr.bf16.mxu0 %v3082
    %4267 = vmatpush2.bf16.msra.mxu0 %v3081
    %4268 = vmatprep.subr.bf16.mxu0 %v3074
    %4269 = vmatpush2.bf16.msra.mxu0 %v3073
    %4270 = vmatprep.subr.bf16.mxu0 %v3066
    %4271 = vmatpush2.bf16.msra.mxu0 %v3065
    %4272 = vmatprep.subr.bf16.mxu0 %v3058
    %4273 = vmatpush2.bf16.msra.mxu0 %v3057
    %4274 = vmatprep.subr.bf16.mxu0 %v3050
    %4275 = vmatpush2.bf16.msra.mxu0 %v3049
    %4276 = vmatprep.subr.bf16.mxu0 %v3042
    %4277 = vmatpush2.bf16.msra.mxu0 %v3041
    %4278 = vmatprep.subr.bf16.mxu0 %v3034
    %4279 = vmatpush2.bf16.msra.mxu0 %v3033
    %4280 = vmatprep.mubr.bf16.mxu0 %v742
    %4281 = vmatmul.mubr.bf16.gmra.mxu0 %v741
    %v4282 = vpop.f32.mrf.mxu0
    %v4283 = vadd.f32 %v4240, %v4282
    %v4284 = vpop.f32.mrf.mxu0
    %v4285 = vadd.f32 %v4242, %v4284
    %v4286 = vpop.f32.mrf.mxu0
    %v4287 = vadd.f32 %v4244, %v4286
    %v4288 = vpop.f32.mrf.mxu0
    %v4289 = vadd.f32 %v4246, %v4288
    %4290 = vdwg.mxu0
    %4291 = vmatprep.subr.bf16.mxu0 %v3154
    %4292 = vmatpush1.bf16.msra.mxu0 %v3153
    %4293 = vmatprep.subr.bf16.mxu0 %v3146
    %4294 = vmatpush1.bf16.msra.mxu0 %v3145
    %4295 = vmatprep.subr.bf16.mxu0 %v3138
    %4296 = vmatpush1.bf16.msra.mxu0 %v3137
    %4297 = vmatprep.subr.bf16.mxu0 %v3130
    %4298 = vmatpush1.bf16.msra.mxu0 %v3129
    %4299 = vmatprep.subr.bf16.mxu0 %v3122
    %4300 = vmatpush1.bf16.msra.mxu0 %v3121
    %4301 = vmatprep.subr.bf16.mxu0 %v3114
    %4302 = vmatpush1.bf16.msra.mxu0 %v3113
    %4303 = vmatprep.subr.bf16.mxu0 %v3106
    %4304 = vmatpush1.bf16.msra.mxu0 %v3105
    %4305 = vmatprep.subr.bf16.mxu0 %v3098
    %4306 = vmatpush1.bf16.msra.mxu0 %v3097
    %4307 = vmatprep.subr.bf16.mxu0 %v3218
    %4308 = vmatpush2.bf16.msra.mxu0 %v3217
    %4309 = vmatprep.subr.bf16.mxu0 %v3210
    %4310 = vmatpush2.bf16.msra.mxu0 %v3209
    %4311 = vmatprep.subr.bf16.mxu0 %v3202
    %4312 = vmatpush2.bf16.msra.mxu0 %v3201
    %4313 = vmatprep.subr.bf16.mxu0 %v3194
    %4314 = vmatpush2.bf16.msra.mxu0 %v3193
    %4315 = vmatprep.subr.bf16.mxu0 %v3186
    %4316 = vmatpush2.bf16.msra.mxu0 %v3185
    %4317 = vmatprep.subr.bf16.mxu0 %v3178
    %4318 = vmatpush2.bf16.msra.mxu0 %v3177
    %4319 = vmatprep.subr.bf16.mxu0 %v3170
    %4320 = vmatpush2.bf16.msra.mxu0 %v3169
    %4321 = vmatprep.subr.bf16.mxu0 %v3162
    %4322 = vmatpush2.bf16.msra.mxu0 %v3161
    %4323 = vmatprep.mubr.bf16.mxu0 %v744
    %4324 = vmatmul.mubr.bf16.gmra.mxu0 %v743
    %v4325 = vpop.f32.mrf.mxu0
    %v4326 = vadd.f32 %v4283, %v4325
    %v4327 = vpop.f32.mrf.mxu0
    %v4328 = vadd.f32 %v4285, %v4327
    %v4329 = vpop.f32.mrf.mxu0
    %v4330 = vadd.f32 %v4287, %v4329
    %v4331 = vpop.f32.mrf.mxu0
    %v4332 = vadd.f32 %v4289, %v4331
    %4333 = vdwg.mxu0
    %4334 = vmatprep.subr.bf16.mxu0 %v3282
    %4335 = vmatpush1.bf16.msra.mxu0 %v3281
    %4336 = vmatprep.subr.bf16.mxu0 %v3274
    %4337 = vmatpush1.bf16.msra.mxu0 %v3273
    %4338 = vmatprep.subr.bf16.mxu0 %v3266
    %4339 = vmatpush1.bf16.msra.mxu0 %v3265
    %4340 = vmatprep.subr.bf16.mxu0 %v3258
    %4341 = vmatpush1.bf16.msra.mxu0 %v3257
    %4342 = vmatprep.subr.bf16.mxu0 %v3250
    %4343 = vmatpush1.bf16.msra.mxu0 %v3249
    %4344 = vmatprep.subr.bf16.mxu0 %v3242
    %4345 = vmatpush1.bf16.msra.mxu0 %v3241
    %4346 = vmatprep.subr.bf16.mxu0 %v3234
    %4347 = vmatpush1.bf16.msra.mxu0 %v3233
    %4348 = vmatprep.subr.bf16.mxu0 %v3226
    %4349 = vmatpush1.bf16.msra.mxu0 %v3225
    %4350 = vmatprep.subr.bf16.mxu0 %v3346
    %4351 = vmatpush2.bf16.msra.mxu0 %v3345
    %4352 = vmatprep.subr.bf16.mxu0 %v3338
    %4353 = vmatpush2.bf16.msra.mxu0 %v3337
    %4354 = vmatprep.subr.bf16.mxu0 %v3330
    %4355 = vmatpush2.bf16.msra.mxu0 %v3329
    %4356 = vmatprep.subr.bf16.mxu0 %v3322
    %4357 = vmatpush2.bf16.msra.mxu0 %v3321
    %4358 = vmatprep.subr.bf16.mxu0 %v3314
    %4359 = vmatpush2.bf16.msra.mxu0 %v3313
    %4360 = vmatprep.subr.bf16.mxu0 %v3306
    %4361 = vmatpush2.bf16.msra.mxu0 %v3305
    %4362 = vmatprep.subr.bf16.mxu0 %v3298
    %4363 = vmatpush2.bf16.msra.mxu0 %v3297
    %4364 = vmatprep.subr.bf16.mxu0 %v3290
    %4365 = vmatpush2.bf16.msra.mxu0 %v3289
    %4366 = vmatprep.mubr.bf16.mxu0 %v746
    %4367 = vmatmul.mubr.bf16.gmra.mxu0 %v745
    %v4368 = vpop.f32.mrf.mxu0
    %v4369 = vadd.f32 %v4326, %v4368
    %v4370 = vpop.f32.mrf.mxu0
    %v4371 = vadd.f32 %v4328, %v4370
    %v4372 = vpop.f32.mrf.mxu0
    %v4373 = vadd.f32 %v4330, %v4372
    %v4374 = vpop.f32.mrf.mxu0
    %v4375 = vadd.f32 %v4332, %v4374
    %4376 = vdwg.mxu0
    %4377 = vmatprep.subr.bf16.mxu0 %v2900
    %4378 = vmatpush1.bf16.msra.mxu0 %v2899
    %4379 = vmatprep.subr.bf16.mxu0 %v2892
    %4380 = vmatpush1.bf16.msra.mxu0 %v2891
    %4381 = vmatprep.subr.bf16.mxu0 %v2884
    %4382 = vmatpush1.bf16.msra.mxu0 %v2883
    %4383 = vmatprep.subr.bf16.mxu0 %v2876
    %4384 = vmatpush1.bf16.msra.mxu0 %v2875
    %4385 = vmatprep.subr.bf16.mxu0 %v2868
    %4386 = vmatpush1.bf16.msra.mxu0 %v2867
    %4387 = vmatprep.subr.bf16.mxu0 %v2860
    %4388 = vmatpush1.bf16.msra.mxu0 %v2859
    %4389 = vmatprep.subr.bf16.mxu0 %v2852
    %4390 = vmatpush1.bf16.msra.mxu0 %v2851
    %4391 = vmatprep.subr.bf16.mxu0 %v2844
    %4392 = vmatpush1.bf16.msra.mxu0 %v2843
    %4393 = vmatprep.subr.bf16.mxu0 %v2964
    %4394 = vmatpush2.bf16.msra.mxu0 %v2963
    %4395 = vmatprep.subr.bf16.mxu0 %v2956
    %4396 = vmatpush2.bf16.msra.mxu0 %v2955
    %4397 = vmatprep.subr.bf16.mxu0 %v2948
    %4398 = vmatpush2.bf16.msra.mxu0 %v2947
    %4399 = vmatprep.subr.bf16.mxu0 %v2940
    %4400 = vmatpush2.bf16.msra.mxu0 %v2939
    %4401 = vmatprep.subr.bf16.mxu0 %v2932
    %4402 = vmatpush2.bf16.msra.mxu0 %v2931
    %4403 = vmatprep.subr.bf16.mxu0 %v2924
    %4404 = vmatpush2.bf16.msra.mxu0 %v2923
    %4405 = vmatprep.subr.bf16.mxu0 %v2916
    %4406 = vmatpush2.bf16.msra.mxu0 %v2915
    %4407 = vmatprep.subr.bf16.mxu0 %v2908
    %4408 = vmatpush2.bf16.msra.mxu0 %v2907
    %4409 = vmatprep.mubr.bf16.mxu0 %v740
    %4410 = vmatmul.mubr.bf16.gmra.mxu0 %v739
    %v4411 = vpop.f32.mrf.mxu0
    %v4412 = vadd.f32 %v1288, %v4411
    %v4413 = vpop.f32.mrf.mxu0
    %v4414 = vadd.f32 %v1292, %v4413
    %v4415 = vpop.f32.mrf.mxu0
    %v4416 = vadd.f32 %v1288, %v4415
    %v4417 = vpop.f32.mrf.mxu0
    %v4418 = vadd.f32 %v1292, %v4417
    %4419 = vdwg.mxu0
    %4420 = vmatprep.subr.bf16.mxu0 %v3028
    %4421 = vmatpush1.bf16.msra.mxu0 %v3027
    %4422 = vmatprep.subr.bf16.mxu0 %v3020
    %4423 = vmatpush1.bf16.msra.mxu0 %v3019
    %4424 = vmatprep.subr.bf16.mxu0 %v3012
    %4425 = vmatpush1.bf16.msra.mxu0 %v3011
    %4426 = vmatprep.subr.bf16.mxu0 %v3004
    %4427 = vmatpush1.bf16.msra.mxu0 %v3003
    %4428 = vmatprep.subr.bf16.mxu0 %v2996
    %4429 = vmatpush1.bf16.msra.mxu0 %v2995
    %4430 = vmatprep.subr.bf16.mxu0 %v2988
    %4431 = vmatpush1.bf16.msra.mxu0 %v2987
    %4432 = vmatprep.subr.bf16.mxu0 %v2980
    %4433 = vmatpush1.bf16.msra.mxu0 %v2979
    %4434 = vmatprep.subr.bf16.mxu0 %v2972
    %4435 = vmatpush1.bf16.msra.mxu0 %v2971
    %4436 = vmatprep.subr.bf16.mxu0 %v3092
    %4437 = vmatpush2.bf16.msra.mxu0 %v3091
    %4438 = vmatprep.subr.bf16.mxu0 %v3084
    %4439 = vmatpush2.bf16.msra.mxu0 %v3083
    %4440 = vmatprep.subr.bf16.mxu0 %v3076
    %4441 = vmatpush2.bf16.msra.mxu0 %v3075
    %4442 = vmatprep.subr.bf16.mxu0 %v3068
    %4443 = vmatpush2.bf16.msra.mxu0 %v3067
    %4444 = vmatprep.subr.bf16.mxu0 %v3060
    %4445 = vmatpush2.bf16.msra.mxu0 %v3059
    %4446 = vmatprep.subr.bf16.mxu0 %v3052
    %4447 = vmatpush2.bf16.msra.mxu0 %v3051
    %4448 = vmatprep.subr.bf16.mxu0 %v3044
    %4449 = vmatpush2.bf16.msra.mxu0 %v3043
    %4450 = vmatprep.subr.bf16.mxu0 %v3036
    %4451 = vmatpush2.bf16.msra.mxu0 %v3035
    %4452 = vmatprep.mubr.bf16.mxu0 %v742
    %4453 = vmatmul.mubr.bf16.gmra.mxu0 %v741
    %v4454 = vpop.f32.mrf.mxu0
    %v4455 = vadd.f32 %v4412, %v4454
    %v4456 = vpop.f32.mrf.mxu0
    %v4457 = vadd.f32 %v4414, %v4456
    %v4458 = vpop.f32.mrf.mxu0
    %v4459 = vadd.f32 %v4416, %v4458
    %v4460 = vpop.f32.mrf.mxu0
    %v4461 = vadd.f32 %v4418, %v4460
    %4462 = vdwg.mxu0
    %4463 = vmatprep.subr.bf16.mxu0 %v3156
    %4464 = vmatpush1.bf16.msra.mxu0 %v3155
    %4465 = vmatprep.subr.bf16.mxu0 %v3148
    %4466 = vmatpush1.bf16.msra.mxu0 %v3147
    %4467 = vmatprep.subr.bf16.mxu0 %v3140
    %4468 = vmatpush1.bf16.msra.mxu0 %v3139
    %4469 = vmatprep.subr.bf16.mxu0 %v3132
    %4470 = vmatpush1.bf16.msra.mxu0 %v3131
    %4471 = vmatprep.subr.bf16.mxu0 %v3124
    %4472 = vmatpush1.bf16.msra.mxu0 %v3123
    %4473 = vmatprep.subr.bf16.mxu0 %v3116
    %4474 = vmatpush1.bf16.msra.mxu0 %v3115
    %4475 = vmatprep.subr.bf16.mxu0 %v3108
    %4476 = vmatpush1.bf16.msra.mxu0 %v3107
    %4477 = vmatprep.subr.bf16.mxu0 %v3100
    %4478 = vmatpush1.bf16.msra.mxu0 %v3099
    %4479 = vmatprep.subr.bf16.mxu0 %v3220
    %4480 = vmatpush2.bf16.msra.mxu0 %v3219
    %4481 = vmatprep.subr.bf16.mxu0 %v3212
    %4482 = vmatpush2.bf16.msra.mxu0 %v3211
    %4483 = vmatprep.subr.bf16.mxu0 %v3204
    %4484 = vmatpush2.bf16.msra.mxu0 %v3203
    %4485 = vmatprep.subr.bf16.mxu0 %v3196
    %4486 = vmatpush2.bf16.msra.mxu0 %v3195
    %4487 = vmatprep.subr.bf16.mxu0 %v3188
    %4488 = vmatpush2.bf16.msra.mxu0 %v3187
    %4489 = vmatprep.subr.bf16.mxu0 %v3180
    %4490 = vmatpush2.bf16.msra.mxu0 %v3179
    %4491 = vmatprep.subr.bf16.mxu0 %v3172
    %4492 = vmatpush2.bf16.msra.mxu0 %v3171
    %4493 = vmatprep.subr.bf16.mxu0 %v3164
    %4494 = vmatpush2.bf16.msra.mxu0 %v3163
    %4495 = vmatprep.mubr.bf16.mxu0 %v744
    %4496 = vmatmul.mubr.bf16.gmra.mxu0 %v743
    %v4497 = vpop.f32.mrf.mxu0
    %v4498 = vadd.f32 %v4455, %v4497
    %v4499 = vpop.f32.mrf.mxu0
    %v4500 = vadd.f32 %v4457, %v4499
    %v4501 = vpop.f32.mrf.mxu0
    %v4502 = vadd.f32 %v4459, %v4501
    %v4503 = vpop.f32.mrf.mxu0
    %v4504 = vadd.f32 %v4461, %v4503
    %4505 = vdwg.mxu0
    %4506 = vmatprep.subr.bf16.mxu0 %v3284
    %4507 = vmatpush1.bf16.msra.mxu0 %v3283
    %4508 = vmatprep.subr.bf16.mxu0 %v3276
    %4509 = vmatpush1.bf16.msra.mxu0 %v3275
    %4510 = vmatprep.subr.bf16.mxu0 %v3268
    %4511 = vmatpush1.bf16.msra.mxu0 %v3267
    %4512 = vmatprep.subr.bf16.mxu0 %v3260
    %4513 = vmatpush1.bf16.msra.mxu0 %v3259
    %4514 = vmatprep.subr.bf16.mxu0 %v3252
    %4515 = vmatpush1.bf16.msra.mxu0 %v3251
    %4516 = vmatprep.subr.bf16.mxu0 %v3244
    %4517 = vmatpush1.bf16.msra.mxu0 %v3243
    %4518 = vmatprep.subr.bf16.mxu0 %v3236
    %4519 = vmatpush1.bf16.msra.mxu0 %v3235
    %4520 = vmatprep.subr.bf16.mxu0 %v3228
    %4521 = vmatpush1.bf16.msra.mxu0 %v3227
    %4522 = vmatprep.subr.bf16.mxu0 %v3348
    %4523 = vmatpush2.bf16.msra.mxu0 %v3347
    %4524 = vmatprep.subr.bf16.mxu0 %v3340
    %4525 = vmatpush2.bf16.msra.mxu0 %v3339
    %4526 = vmatprep.subr.bf16.mxu0 %v3332
    %4527 = vmatpush2.bf16.msra.mxu0 %v3331
    %4528 = vmatprep.subr.bf16.mxu0 %v3324
    %4529 = vmatpush2.bf16.msra.mxu0 %v3323
    %4530 = vmatprep.subr.bf16.mxu0 %v3316
    %4531 = vmatpush2.bf16.msra.mxu0 %v3315
    %4532 = vmatprep.subr.bf16.mxu0 %v3308
    %4533 = vmatpush2.bf16.msra.mxu0 %v3307
    %4534 = vmatprep.subr.bf16.mxu0 %v3300
    %4535 = vmatpush2.bf16.msra.mxu0 %v3299
    %4536 = vmatprep.subr.bf16.mxu0 %v3292
    %4537 = vmatpush2.bf16.msra.mxu0 %v3291
    %4538 = vmatprep.mubr.bf16.mxu0 %v746
    %4539 = vmatmul.mubr.bf16.gmra.mxu0 %v745
    %v4540 = vpop.f32.mrf.mxu0
    %v4541 = vadd.f32 %v4498, %v4540
    %v4542 = vpop.f32.mrf.mxu0
    %v4543 = vadd.f32 %v4500, %v4542
    %v4544 = vpop.f32.mrf.mxu0
    %v4545 = vadd.f32 %v4502, %v4544
    %v4546 = vpop.f32.mrf.mxu0
    %v4547 = vadd.f32 %v4504, %v4546
    %4548 = vdwg.mxu0
    %v4549 = vmax.f32 %v4025, 0.0
    %v4550 = vmax.f32 %v4027, 0.0
    %v4551 = vmax.f32 %v4197, 0.0
    %v4552 = vmax.f32 %v4199, 0.0
    %v4553 = vmax.f32 %v4369, 0.0
    %v4554 = vmax.f32 %v4371, 0.0
    %v4555 = vmax.f32 %v4541, 0.0
    %v4556 = vmax.f32 %v4543, 0.0
    %v4557 = vmax.f32 %v4029, 0.0
    %v4558 = vmax.f32 %v4031, 0.0
    %v4559 = vmax.f32 %v4201, 0.0
    %v4560 = vmax.f32 %v4203, 0.0
    %v4561 = vmax.f32 %v4373, 0.0
    %v4562 = vmax.f32 %v4375, 0.0
    %v4563 = vmax.f32 %v4545, 0.0
    %v4564 = vmax.f32 %v4547, 0.0
    %v4565 = vpack.c.bf16 %v4557, %v4549
    %v4566 = vpack.c.bf16 %v4558, %v4550
    %v4567 = vpack.c.bf16 %v4559, %v4551
    %v4568 = vpack.c.bf16 %v4560, %v4552
    %v4569 = vpack.c.bf16 %v4561, %v4553
    %v4570 = vpack.c.bf16 %v4562, %v4554
    %v4571 = vpack.c.bf16 %v4563, %v4555
    %v4572 = vpack.c.bf16 %v4564, %v4556
    %v4573 = vld [vmem:[#allocation11] sm:$0xf]
    %v4574 = vld [vmem:[#allocation11 + $0x4] sm:$0xf]
    %v4575 = vld [vmem:[#allocation11 + $0x8] sm:$0xf]
    %v4576 = vld [vmem:[#allocation11 + $0xc] sm:$0xf]
    %v4577 = vld [vmem:[#allocation11 + $0x10] sm:$0xf]
    %v4578 = vld [vmem:[#allocation11 + $0x14] sm:$0xf]
    %v4579 = vld [vmem:[#allocation11 + $0x18] sm:$0xf]
    %v4580 = vld [vmem:[#allocation11 + $0x1c] sm:$0xf]
    %v4581 = vld [vmem:[#allocation11 + $0x20] sm:$0xf]
    %v4582 = vld [vmem:[#allocation11 + $0x24] sm:$0xf]
    %v4583 = vld [vmem:[#allocation11 + $0x28] sm:$0xf]
    %v4584 = vld [vmem:[#allocation11 + $0x2c] sm:$0xf]
    %v4585 = vld [vmem:[#allocation11 + $0x30] sm:$0xf]
    %v4586 = vld [vmem:[#allocation11 + $0x34] sm:$0xf]
    %v4587 = vld [vmem:[#allocation11 + $0x38] sm:$0xf]
    %v4588 = vld [vmem:[#allocation11 + $0x3c] sm:$0xf]
    %v4589 = vld [vmem:[#allocation11 + $0x40] sm:$0xf]
    %v4590 = vld [vmem:[#allocation11 + $0x44] sm:$0xf]
    %v4591 = vld [vmem:[#allocation11 + $0x48] sm:$0xf]
    %v4592 = vld [vmem:[#allocation11 + $0x4c] sm:$0xf]
    %v4593 = vld [vmem:[#allocation11 + $0x50] sm:$0xf]
    %v4594 = vld [vmem:[#allocation11 + $0x54] sm:$0xf]
    %v4595 = vld [vmem:[#allocation11 + $0x58] sm:$0xf]
    %v4596 = vld [vmem:[#allocation11 + $0x5c] sm:$0xf]
    %v4597 = vld [vmem:[#allocation11 + $0x60] sm:$0xf]
    %v4598 = vld [vmem:[#allocation11 + $0x64] sm:$0xf]
    %v4599 = vld [vmem:[#allocation11 + $0x68] sm:$0xf]
    %v4600 = vld [vmem:[#allocation11 + $0x6c] sm:$0xf]
    %v4601 = vld [vmem:[#allocation11 + $0x70] sm:$0xf]
    %v4602 = vld [vmem:[#allocation11 + $0x74] sm:$0xf]
    %v4603 = vld [vmem:[#allocation11 + $0x78] sm:$0xf]
    %v4604 = vld [vmem:[#allocation11 + $0x7c] sm:$0xf]
    %v4605 = vld [vmem:[#allocation11 + $0x80] sm:$0xf]
    %v4606 = vld [vmem:[#allocation11 + $0x84] sm:$0xf]
    %v4607 = vld [vmem:[#allocation11 + $0x88] sm:$0xf]
    %v4608 = vld [vmem:[#allocation11 + $0x8c] sm:$0xf]
    %v4609 = vld [vmem:[#allocation11 + $0x90] sm:$0xf]
    %v4610 = vld [vmem:[#allocation11 + $0x94] sm:$0xf]
    %v4611 = vld [vmem:[#allocation11 + $0x98] sm:$0xf]
    %v4612 = vld [vmem:[#allocation11 + $0x9c] sm:$0xf]
    %v4613 = vld [vmem:[#allocation11 + $0xa0] sm:$0xf]
    %v4614 = vld [vmem:[#allocation11 + $0xa4] sm:$0xf]
    %v4615 = vld [vmem:[#allocation11 + $0xa8] sm:$0xf]
    %v4616 = vld [vmem:[#allocation11 + $0xac] sm:$0xf]
    %v4617 = vld [vmem:[#allocation11 + $0xb0] sm:$0xf]
    %v4618 = vld [vmem:[#allocation11 + $0xb4] sm:$0xf]
    %v4619 = vld [vmem:[#allocation11 + $0xb8] sm:$0xf]
    %v4620 = vld [vmem:[#allocation11 + $0xbc] sm:$0xf]
    %v4621 = vld [vmem:[#allocation11 + $0xc0] sm:$0xf]
    %v4622 = vld [vmem:[#allocation11 + $0xc4] sm:$0xf]
    %v4623 = vld [vmem:[#allocation11 + $0xc8] sm:$0xf]
    %v4624 = vld [vmem:[#allocation11 + $0xcc] sm:$0xf]
    %v4625 = vld [vmem:[#allocation11 + $0xd0] sm:$0xf]
    %v4626 = vld [vmem:[#allocation11 + $0xd4] sm:$0xf]
    %v4627 = vld [vmem:[#allocation11 + $0xd8] sm:$0xf]
    %v4628 = vld [vmem:[#allocation11 + $0xdc] sm:$0xf]
    %v4629 = vld [vmem:[#allocation11 + $0xe0] sm:$0xf]
    %v4630 = vld [vmem:[#allocation11 + $0xe4] sm:$0xf]
    %v4631 = vld [vmem:[#allocation11 + $0xe8] sm:$0xf]
    %v4632 = vld [vmem:[#allocation11 + $0xec] sm:$0xf]
    %v4633 = vld [vmem:[#allocation11 + $0xf0] sm:$0xf]
    %v4634 = vld [vmem:[#allocation11 + $0xf4] sm:$0xf]
    %v4635 = vld [vmem:[#allocation11 + $0xf8] sm:$0xf]
    %v4636 = vld [vmem:[#allocation11 + $0xfc] sm:$0xf]
    %v4637 = vld [vmem:[#allocation11 + $0x100] sm:$0xf]
    %v4638 = vld [vmem:[#allocation11 + $0x104] sm:$0xf]
    %v4639 = vld [vmem:[#allocation11 + $0x108] sm:$0xf]
    %v4640 = vld [vmem:[#allocation11 + $0x10c] sm:$0xf]
    %v4641 = vld [vmem:[#allocation11 + $0x110] sm:$0xf]
    %v4642 = vld [vmem:[#allocation11 + $0x114] sm:$0xf]
    %v4643 = vld [vmem:[#allocation11 + $0x118] sm:$0xf]
    %v4644 = vld [vmem:[#allocation11 + $0x11c] sm:$0xf]
    %v4645 = vld [vmem:[#allocation11 + $0x120] sm:$0xf]
    %v4646 = vld [vmem:[#allocation11 + $0x124] sm:$0xf]
    %v4647 = vld [vmem:[#allocation11 + $0x128] sm:$0xf]
    %v4648 = vld [vmem:[#allocation11 + $0x12c] sm:$0xf]
    %v4649 = vld [vmem:[#allocation11 + $0x130] sm:$0xf]
    %v4650 = vld [vmem:[#allocation11 + $0x134] sm:$0xf]
    %v4651 = vld [vmem:[#allocation11 + $0x138] sm:$0xf]
    %v4652 = vld [vmem:[#allocation11 + $0x13c] sm:$0xf]
    %v4653 = vld [vmem:[#allocation11 + $0x140] sm:$0xf]
    %v4654 = vld [vmem:[#allocation11 + $0x144] sm:$0xf]
    %v4655 = vld [vmem:[#allocation11 + $0x148] sm:$0xf]
    %v4656 = vld [vmem:[#allocation11 + $0x14c] sm:$0xf]
    %v4657 = vld [vmem:[#allocation11 + $0x150] sm:$0xf]
    %v4658 = vld [vmem:[#allocation11 + $0x154] sm:$0xf]
    %v4659 = vld [vmem:[#allocation11 + $0x158] sm:$0xf]
    %v4660 = vld [vmem:[#allocation11 + $0x15c] sm:$0xf]
    %v4661 = vld [vmem:[#allocation11 + $0x160] sm:$0xf]
    %v4662 = vld [vmem:[#allocation11 + $0x164] sm:$0xf]
    %v4663 = vld [vmem:[#allocation11 + $0x168] sm:$0xf]
    %v4664 = vld [vmem:[#allocation11 + $0x16c] sm:$0xf]
    %v4665 = vld [vmem:[#allocation11 + $0x170] sm:$0xf]
    %v4666 = vld [vmem:[#allocation11 + $0x174] sm:$0xf]
    %v4667 = vld [vmem:[#allocation11 + $0x178] sm:$0xf]
    %v4668 = vld [vmem:[#allocation11 + $0x17c] sm:$0xf]
    %v4669 = vld [vmem:[#allocation11 + $0x180] sm:$0xf]
    %v4670 = vld [vmem:[#allocation11 + $0x184] sm:$0xf]
    %v4671 = vld [vmem:[#allocation11 + $0x188] sm:$0xf]
    %v4672 = vld [vmem:[#allocation11 + $0x18c] sm:$0xf]
    %v4673 = vld [vmem:[#allocation11 + $0x190] sm:$0xf]
    %v4674 = vld [vmem:[#allocation11 + $0x194] sm:$0xf]
    %v4675 = vld [vmem:[#allocation11 + $0x198] sm:$0xf]
    %v4676 = vld [vmem:[#allocation11 + $0x19c] sm:$0xf]
    %v4677 = vld [vmem:[#allocation11 + $0x1a0] sm:$0xf]
    %v4678 = vld [vmem:[#allocation11 + $0x1a4] sm:$0xf]
    %v4679 = vld [vmem:[#allocation11 + $0x1a8] sm:$0xf]
    %v4680 = vld [vmem:[#allocation11 + $0x1ac] sm:$0xf]
    %v4681 = vld [vmem:[#allocation11 + $0x1b0] sm:$0xf]
    %v4682 = vld [vmem:[#allocation11 + $0x1b4] sm:$0xf]
    %v4683 = vld [vmem:[#allocation11 + $0x1b8] sm:$0xf]
    %v4684 = vld [vmem:[#allocation11 + $0x1bc] sm:$0xf]
    %v4685 = vld [vmem:[#allocation11 + $0x1c0] sm:$0xf]
    %v4686 = vld [vmem:[#allocation11 + $0x1c4] sm:$0xf]
    %v4687 = vld [vmem:[#allocation11 + $0x1c8] sm:$0xf]
    %v4688 = vld [vmem:[#allocation11 + $0x1cc] sm:$0xf]
    %v4689 = vld [vmem:[#allocation11 + $0x1d0] sm:$0xf]
    %v4690 = vld [vmem:[#allocation11 + $0x1d4] sm:$0xf]
    %v4691 = vld [vmem:[#allocation11 + $0x1d8] sm:$0xf]
    %v4692 = vld [vmem:[#allocation11 + $0x1dc] sm:$0xf]
    %v4693 = vld [vmem:[#allocation11 + $0x1e0] sm:$0xf]
    %v4694 = vld [vmem:[#allocation11 + $0x1e4] sm:$0xf]
    %v4695 = vld [vmem:[#allocation11 + $0x1e8] sm:$0xf]
    %v4696 = vld [vmem:[#allocation11 + $0x1ec] sm:$0xf]
    %v4697 = vld [vmem:[#allocation11 + $0x1f0] sm:$0xf]
    %v4698 = vld [vmem:[#allocation11 + $0x1f4] sm:$0xf]
    %v4699 = vld [vmem:[#allocation11 + $0x1f8] sm:$0xf]
    %v4700 = vld [vmem:[#allocation11 + $0x1fc] sm:$0xf]
    %v4701 = vld [vmem:[#allocation13] sm:$0x1]
    %v4703 = vlaneseq
    %v4704 = vshrl.u32 %v4703, 7
    %v4705 = vsub.s32 0, %v4704
    %v4706 = vrot.slane %v4701, %v4705
    %v4836 = vunpack.c.l.b16 %v4573
    %v4837 = vunpack.c.l.b16 %v4574
    %v4838 = vunpack.c.l.b16 %v4575
    %v4839 = vunpack.c.l.b16 %v4576
    %v4840 = vunpack.c.l.b16 %v4577
    %v4841 = vunpack.c.l.b16 %v4578
    %v4842 = vunpack.c.l.b16 %v4579
    %v4843 = vunpack.c.l.b16 %v4580
    %v4844 = vunpack.c.l.b16 %v4581
    %v4845 = vunpack.c.l.b16 %v4582
    %v4846 = vunpack.c.l.b16 %v4583
    %v4847 = vunpack.c.l.b16 %v4584
    %v4848 = vunpack.c.l.b16 %v4585
    %v4849 = vunpack.c.l.b16 %v4586
    %v4850 = vunpack.c.l.b16 %v4587
    %v4851 = vunpack.c.l.b16 %v4588
    %v4852 = vunpack.c.l.b16 %v4589
    %v4853 = vunpack.c.l.b16 %v4590
    %v4854 = vunpack.c.l.b16 %v4591
    %v4855 = vunpack.c.l.b16 %v4592
    %v4856 = vunpack.c.l.b16 %v4593
    %v4857 = vunpack.c.l.b16 %v4594
    %v4858 = vunpack.c.l.b16 %v4595
    %v4859 = vunpack.c.l.b16 %v4596
    %v4860 = vunpack.c.l.b16 %v4597
    %v4861 = vunpack.c.l.b16 %v4598
    %v4862 = vunpack.c.l.b16 %v4599
    %v4863 = vunpack.c.l.b16 %v4600
    %v4864 = vunpack.c.l.b16 %v4601
    %v4865 = vunpack.c.l.b16 %v4602
    %v4866 = vunpack.c.l.b16 %v4603
    %v4867 = vunpack.c.l.b16 %v4604
    %v4868 = vunpack.c.l.b16 %v4605
    %v4869 = vunpack.c.l.b16 %v4606
    %v4870 = vunpack.c.l.b16 %v4607
    %v4871 = vunpack.c.l.b16 %v4608
    %v4872 = vunpack.c.l.b16 %v4609
    %v4873 = vunpack.c.l.b16 %v4610
    %v4874 = vunpack.c.l.b16 %v4611
    %v4875 = vunpack.c.l.b16 %v4612
    %v4876 = vunpack.c.l.b16 %v4613
    %v4877 = vunpack.c.l.b16 %v4614
    %v4878 = vunpack.c.l.b16 %v4615
    %v4879 = vunpack.c.l.b16 %v4616
    %v4880 = vunpack.c.l.b16 %v4617
    %v4881 = vunpack.c.l.b16 %v4618
    %v4882 = vunpack.c.l.b16 %v4619
    %v4883 = vunpack.c.l.b16 %v4620
    %v4884 = vunpack.c.l.b16 %v4621
    %v4885 = vunpack.c.l.b16 %v4622
    %v4886 = vunpack.c.l.b16 %v4623
    %v4887 = vunpack.c.l.b16 %v4624
    %v4888 = vunpack.c.l.b16 %v4625
    %v4889 = vunpack.c.l.b16 %v4626
    %v4890 = vunpack.c.l.b16 %v4627
    %v4891 = vunpack.c.l.b16 %v4628
    %v4892 = vunpack.c.l.b16 %v4629
    %v4893 = vunpack.c.l.b16 %v4630
    %v4894 = vunpack.c.l.b16 %v4631
    %v4895 = vunpack.c.l.b16 %v4632
    %v4896 = vunpack.c.l.b16 %v4633
    %v4897 = vunpack.c.l.b16 %v4634
    %v4898 = vunpack.c.l.b16 %v4635
    %v4899 = vunpack.c.l.b16 %v4636
    %v4900 = vunpack.c.l.b16 %v4637
    %v4901 = vunpack.c.l.b16 %v4638
    %v4902 = vunpack.c.l.b16 %v4639
    %v4903 = vunpack.c.l.b16 %v4640
    %v4904 = vunpack.c.l.b16 %v4641
    %v4905 = vunpack.c.l.b16 %v4642
    %v4906 = vunpack.c.l.b16 %v4643
    %v4907 = vunpack.c.l.b16 %v4644
    %v4908 = vunpack.c.l.b16 %v4645
    %v4909 = vunpack.c.l.b16 %v4646
    %v4910 = vunpack.c.l.b16 %v4647
    %v4911 = vunpack.c.l.b16 %v4648
    %v4912 = vunpack.c.l.b16 %v4649
    %v4913 = vunpack.c.l.b16 %v4650
    %v4914 = vunpack.c.l.b16 %v4651
    %v4915 = vunpack.c.l.b16 %v4652
    %v4916 = vunpack.c.l.b16 %v4653
    %v4917 = vunpack.c.l.b16 %v4654
    %v4918 = vunpack.c.l.b16 %v4655
    %v4919 = vunpack.c.l.b16 %v4656
    %v4920 = vunpack.c.l.b16 %v4657
    %v4921 = vunpack.c.l.b16 %v4658
    %v4922 = vunpack.c.l.b16 %v4659
    %v4923 = vunpack.c.l.b16 %v4660
    %v4924 = vunpack.c.l.b16 %v4661
    %v4925 = vunpack.c.l.b16 %v4662
    %v4926 = vunpack.c.l.b16 %v4663
    %v4927 = vunpack.c.l.b16 %v4664
    %v4928 = vunpack.c.l.b16 %v4665
    %v4929 = vunpack.c.l.b16 %v4666
    %v4930 = vunpack.c.l.b16 %v4667
    %v4931 = vunpack.c.l.b16 %v4668
    %v4932 = vunpack.c.l.b16 %v4669
    %v4933 = vunpack.c.l.b16 %v4670
    %v4934 = vunpack.c.l.b16 %v4671
    %v4935 = vunpack.c.l.b16 %v4672
    %v4936 = vunpack.c.l.b16 %v4673
    %v4937 = vunpack.c.l.b16 %v4674
    %v4938 = vunpack.c.l.b16 %v4675
    %v4939 = vunpack.c.l.b16 %v4676
    %v4940 = vunpack.c.l.b16 %v4677
    %v4941 = vunpack.c.l.b16 %v4678
    %v4942 = vunpack.c.l.b16 %v4679
    %v4943 = vunpack.c.l.b16 %v4680
    %v4944 = vunpack.c.l.b16 %v4681
    %v4945 = vunpack.c.l.b16 %v4682
    %v4946 = vunpack.c.l.b16 %v4683
    %v4947 = vunpack.c.l.b16 %v4684
    %v4948 = vunpack.c.l.b16 %v4685
    %v4949 = vunpack.c.l.b16 %v4686
    %v4950 = vunpack.c.l.b16 %v4687
    %v4951 = vunpack.c.l.b16 %v4688
    %v4952 = vunpack.c.l.b16 %v4689
    %v4953 = vunpack.c.l.b16 %v4690
    %v4954 = vunpack.c.l.b16 %v4691
    %v4955 = vunpack.c.l.b16 %v4692
    %v4956 = vunpack.c.l.b16 %v4693
    %v4957 = vunpack.c.l.b16 %v4694
    %v4958 = vunpack.c.l.b16 %v4695
    %v4959 = vunpack.c.l.b16 %v4696
    %v4960 = vunpack.c.l.b16 %v4697
    %v4961 = vunpack.c.l.b16 %v4698
    %v4962 = vunpack.c.l.b16 %v4699
    %v4963 = vunpack.c.l.b16 %v4700
    %v4964 = vpack.c.b16 %v4837, %v4836
    %v4965 = vpack.c.b16 %v4839, %v4838
    %v4966 = vpack.c.b16 %v4841, %v4840
    %v4967 = vpack.c.b16 %v4843, %v4842
    %v4968 = vpack.c.b16 %v4845, %v4844
    %v4969 = vpack.c.b16 %v4847, %v4846
    %v4970 = vpack.c.b16 %v4849, %v4848
    %v4971 = vpack.c.b16 %v4851, %v4850
    %v4972 = vpack.c.b16 %v4853, %v4852
    %v4973 = vpack.c.b16 %v4855, %v4854
    %v4974 = vpack.c.b16 %v4857, %v4856
    %v4975 = vpack.c.b16 %v4859, %v4858
    %v4976 = vpack.c.b16 %v4861, %v4860
    %v4977 = vpack.c.b16 %v4863, %v4862
    %v4978 = vpack.c.b16 %v4865, %v4864
    %v4979 = vpack.c.b16 %v4867, %v4866
    %v4980 = vpack.c.b16 %v4869, %v4868
    %v4981 = vpack.c.b16 %v4871, %v4870
    %v4982 = vpack.c.b16 %v4873, %v4872
    %v4983 = vpack.c.b16 %v4875, %v4874
    %v4984 = vpack.c.b16 %v4877, %v4876
    %v4985 = vpack.c.b16 %v4879, %v4878
    %v4986 = vpack.c.b16 %v4881, %v4880
    %v4987 = vpack.c.b16 %v4883, %v4882
    %v4988 = vpack.c.b16 %v4885, %v4884
    %v4989 = vpack.c.b16 %v4887, %v4886
    %v4990 = vpack.c.b16 %v4889, %v4888
    %v4991 = vpack.c.b16 %v4891, %v4890
    %v4992 = vpack.c.b16 %v4893, %v4892
    %v4993 = vpack.c.b16 %v4895, %v4894
    %v4994 = vpack.c.b16 %v4897, %v4896
    %v4995 = vpack.c.b16 %v4899, %v4898
    %v4996 = vpack.c.b16 %v4901, %v4900
    %v4997 = vpack.c.b16 %v4903, %v4902
    %v4998 = vpack.c.b16 %v4905, %v4904
    %v4999 = vpack.c.b16 %v4907, %v4906
    %v5000 = vpack.c.b16 %v4909, %v4908
    %v5001 = vpack.c.b16 %v4911, %v4910
    %v5002 = vpack.c.b16 %v4913, %v4912
    %v5003 = vpack.c.b16 %v4915, %v4914
    %v5004 = vpack.c.b16 %v4917, %v4916
    %v5005 = vpack.c.b16 %v4919, %v4918
    %v5006 = vpack.c.b16 %v4921, %v4920
    %v5007 = vpack.c.b16 %v4923, %v4922
    %v5008 = vpack.c.b16 %v4925, %v4924
    %v5009 = vpack.c.b16 %v4927, %v4926
    %v5010 = vpack.c.b16 %v4929, %v4928
    %v5011 = vpack.c.b16 %v4931, %v4930
    %v5012 = vpack.c.b16 %v4933, %v4932
    %v5013 = vpack.c.b16 %v4935, %v4934
    %v5014 = vpack.c.b16 %v4937, %v4936
    %v5015 = vpack.c.b16 %v4939, %v4938
    %v5016 = vpack.c.b16 %v4941, %v4940
    %v5017 = vpack.c.b16 %v4943, %v4942
    %v5018 = vpack.c.b16 %v4945, %v4944
    %v5019 = vpack.c.b16 %v4947, %v4946
    %v5020 = vpack.c.b16 %v4949, %v4948
    %v5021 = vpack.c.b16 %v4951, %v4950
    %v5022 = vpack.c.b16 %v4953, %v4952
    %v5023 = vpack.c.b16 %v4955, %v4954
    %v5024 = vpack.c.b16 %v4957, %v4956
    %v5025 = vpack.c.b16 %v4959, %v4958
    %v5026 = vpack.c.b16 %v4961, %v4960
    %v5027 = vpack.c.b16 %v4963, %v4962
    %5092 = vmatprep.subr.bf16.mxu0 0
    %5093 = vmatpush1.bf16.msra.mxu0 %v4971
    %5094 = vmatprep.subr.bf16.mxu0 0
    %5095 = vmatpush1.bf16.msra.mxu0 %v4970
    %5096 = vmatprep.subr.bf16.mxu0 0
    %5097 = vmatpush1.bf16.msra.mxu0 %v4969
    %5098 = vmatprep.subr.bf16.mxu0 0
    %5099 = vmatpush1.bf16.msra.mxu0 %v4968
    %5100 = vmatprep.subr.bf16.mxu0 0
    %5101 = vmatpush1.bf16.msra.mxu0 %v4967
    %5102 = vmatprep.subr.bf16.mxu0 0
    %5103 = vmatpush1.bf16.msra.mxu0 %v4966
    %5104 = vmatprep.subr.bf16.mxu0 0
    %5105 = vmatpush1.bf16.msra.mxu0 %v4965
    %5106 = vmatprep.subr.bf16.mxu0 0
    %5107 = vmatpush1.bf16.msra.mxu0 %v4964
    %5108 = vmatprep.subr.bf16.mxu0 0
    %5109 = vmatpush2.bf16.msra.mxu0 %v4979
    %5110 = vmatprep.subr.bf16.mxu0 0
    %5111 = vmatpush2.bf16.msra.mxu0 %v4978
    %5112 = vmatprep.subr.bf16.mxu0 0
    %5113 = vmatpush2.bf16.msra.mxu0 %v4977
    %5114 = vmatprep.subr.bf16.mxu0 0
    %5115 = vmatpush2.bf16.msra.mxu0 %v4976
    %5116 = vmatprep.subr.bf16.mxu0 0
    %5117 = vmatpush2.bf16.msra.mxu0 %v4975
    %5118 = vmatprep.subr.bf16.mxu0 0
    %5119 = vmatpush2.bf16.msra.mxu0 %v4974
    %5120 = vmatprep.subr.bf16.mxu0 0
    %5121 = vmatpush2.bf16.msra.mxu0 %v4973
    %5122 = vmatprep.subr.bf16.mxu0 0
    %5123 = vmatpush2.bf16.msra.mxu0 %v4972
    %5124 = vmatprep.mubr.bf16.mxu0 %v4566
    %5125 = vmatmul.mubr.bf16.gmra.mxu0 %v4565
    %v5126 = vpop.f32.mrf.mxu0
    %v5127 = vadd.f32 %v4706, %v5126
    %v5128 = vpop.f32.mrf.mxu0
    %v5129 = vpop.f32.mrf.mxu0
    %v5130 = vadd.f32 %v4706, %v5129
    %v5131 = vpop.f32.mrf.mxu0
    %5132 = vdwg.mxu0
    %5133 = vmatprep.subr.bf16.mxu0 0
    %5134 = vmatpush1.bf16.msra.mxu0 %v4987
    %5135 = vmatprep.subr.bf16.mxu0 0
    %5136 = vmatpush1.bf16.msra.mxu0 %v4986
    %5137 = vmatprep.subr.bf16.mxu0 0
    %5138 = vmatpush1.bf16.msra.mxu0 %v4985
    %5139 = vmatprep.subr.bf16.mxu0 0
    %5140 = vmatpush1.bf16.msra.mxu0 %v4984
    %5141 = vmatprep.subr.bf16.mxu0 0
    %5142 = vmatpush1.bf16.msra.mxu0 %v4983
    %5143 = vmatprep.subr.bf16.mxu0 0
    %5144 = vmatpush1.bf16.msra.mxu0 %v4982
    %5145 = vmatprep.subr.bf16.mxu0 0
    %5146 = vmatpush1.bf16.msra.mxu0 %v4981
    %5147 = vmatprep.subr.bf16.mxu0 0
    %5148 = vmatpush1.bf16.msra.mxu0 %v4980
    %5149 = vmatprep.subr.bf16.mxu0 0
    %5150 = vmatpush2.bf16.msra.mxu0 %v4995
    %5151 = vmatprep.subr.bf16.mxu0 0
    %5152 = vmatpush2.bf16.msra.mxu0 %v4994
    %5153 = vmatprep.subr.bf16.mxu0 0
    %5154 = vmatpush2.bf16.msra.mxu0 %v4993
    %5155 = vmatprep.subr.bf16.mxu0 0
    %5156 = vmatpush2.bf16.msra.mxu0 %v4992
    %5157 = vmatprep.subr.bf16.mxu0 0
    %5158 = vmatpush2.bf16.msra.mxu0 %v4991
    %5159 = vmatprep.subr.bf16.mxu0 0
    %5160 = vmatpush2.bf16.msra.mxu0 %v4990
    %5161 = vmatprep.subr.bf16.mxu0 0
    %5162 = vmatpush2.bf16.msra.mxu0 %v4989
    %5163 = vmatprep.subr.bf16.mxu0 0
    %5164 = vmatpush2.bf16.msra.mxu0 %v4988
    %5165 = vmatprep.mubr.bf16.mxu0 %v4568
    %5166 = vmatmul.mubr.bf16.gmra.mxu0 %v4567
    %v5167 = vpop.f32.mrf.mxu0
    %v5168 = vadd.f32 %v5127, %v5167
    %v5169 = vpop.f32.mrf.mxu0
    %v5170 = vpop.f32.mrf.mxu0
    %v5171 = vadd.f32 %v5130, %v5170
    %v5172 = vpop.f32.mrf.mxu0
    %5173 = vdwg.mxu0
    %5174 = vmatprep.subr.bf16.mxu0 0
    %5175 = vmatpush1.bf16.msra.mxu0 %v5003
    %5176 = vmatprep.subr.bf16.mxu0 0
    %5177 = vmatpush1.bf16.msra.mxu0 %v5002
    %5178 = vmatprep.subr.bf16.mxu0 0
    %5179 = vmatpush1.bf16.msra.mxu0 %v5001
    %5180 = vmatprep.subr.bf16.mxu0 0
    %5181 = vmatpush1.bf16.msra.mxu0 %v5000
    %5182 = vmatprep.subr.bf16.mxu0 0
    %5183 = vmatpush1.bf16.msra.mxu0 %v4999
    %5184 = vmatprep.subr.bf16.mxu0 0
    %5185 = vmatpush1.bf16.msra.mxu0 %v4998
    %5186 = vmatprep.subr.bf16.mxu0 0
    %5187 = vmatpush1.bf16.msra.mxu0 %v4997
    %5188 = vmatprep.subr.bf16.mxu0 0
    %5189 = vmatpush1.bf16.msra.mxu0 %v4996
    %5190 = vmatprep.subr.bf16.mxu0 0
    %5191 = vmatpush2.bf16.msra.mxu0 %v5011
    %5192 = vmatprep.subr.bf16.mxu0 0
    %5193 = vmatpush2.bf16.msra.mxu0 %v5010
    %5194 = vmatprep.subr.bf16.mxu0 0
    %5195 = vmatpush2.bf16.msra.mxu0 %v5009
    %5196 = vmatprep.subr.bf16.mxu0 0
    %5197 = vmatpush2.bf16.msra.mxu0 %v5008
    %5198 = vmatprep.subr.bf16.mxu0 0
    %5199 = vmatpush2.bf16.msra.mxu0 %v5007
    %5200 = vmatprep.subr.bf16.mxu0 0
    %5201 = vmatpush2.bf16.msra.mxu0 %v5006
    %5202 = vmatprep.subr.bf16.mxu0 0
    %5203 = vmatpush2.bf16.msra.mxu0 %v5005
    %5204 = vmatprep.subr.bf16.mxu0 0
    %5205 = vmatpush2.bf16.msra.mxu0 %v5004
    %5206 = vmatprep.mubr.bf16.mxu0 %v4570
    %5207 = vmatmul.mubr.bf16.gmra.mxu0 %v4569
    %v5208 = vpop.f32.mrf.mxu0
    %v5209 = vadd.f32 %v5168, %v5208
    %v5210 = vpop.f32.mrf.mxu0
    %v5211 = vpop.f32.mrf.mxu0
    %v5212 = vadd.f32 %v5171, %v5211
    %v5213 = vpop.f32.mrf.mxu0
    %5214 = vdwg.mxu0
    %5215 = vmatprep.subr.bf16.mxu0 0
    %5216 = vmatpush1.bf16.msra.mxu0 %v5019
    %5217 = vmatprep.subr.bf16.mxu0 0
    %5218 = vmatpush1.bf16.msra.mxu0 %v5018
    %5219 = vmatprep.subr.bf16.mxu0 0
    %5220 = vmatpush1.bf16.msra.mxu0 %v5017
    %5221 = vmatprep.subr.bf16.mxu0 0
    %5222 = vmatpush1.bf16.msra.mxu0 %v5016
    %5223 = vmatprep.subr.bf16.mxu0 0
    %5224 = vmatpush1.bf16.msra.mxu0 %v5015
    %5225 = vmatprep.subr.bf16.mxu0 0
    %5226 = vmatpush1.bf16.msra.mxu0 %v5014
    %5227 = vmatprep.subr.bf16.mxu0 0
    %5228 = vmatpush1.bf16.msra.mxu0 %v5013
    %5229 = vmatprep.subr.bf16.mxu0 0
    %5230 = vmatpush1.bf16.msra.mxu0 %v5012
    %5231 = vmatprep.subr.bf16.mxu0 0
    %5232 = vmatpush2.bf16.msra.mxu0 %v5027
    %5233 = vmatprep.subr.bf16.mxu0 0
    %5234 = vmatpush2.bf16.msra.mxu0 %v5026
    %5235 = vmatprep.subr.bf16.mxu0 0
    %5236 = vmatpush2.bf16.msra.mxu0 %v5025
    %5237 = vmatprep.subr.bf16.mxu0 0
    %5238 = vmatpush2.bf16.msra.mxu0 %v5024
    %5239 = vmatprep.subr.bf16.mxu0 0
    %5240 = vmatpush2.bf16.msra.mxu0 %v5023
    %5241 = vmatprep.subr.bf16.mxu0 0
    %5242 = vmatpush2.bf16.msra.mxu0 %v5022
    %5243 = vmatprep.subr.bf16.mxu0 0
    %5244 = vmatpush2.bf16.msra.mxu0 %v5021
    %5245 = vmatprep.subr.bf16.mxu0 0
    %5246 = vmatpush2.bf16.msra.mxu0 %v5020
    %5247 = vmatprep.mubr.bf16.mxu0 %v4572
    %5248 = vmatmul.mubr.bf16.gmra.mxu0 %v4571
    %v5249 = vpop.f32.mrf.mxu0
    %v5250 = vadd.f32 %v5209, %v5249
    %v5251 = vpop.f32.mrf.mxu0
    %v5252 = vpop.f32.mrf.mxu0
    %v5253 = vadd.f32 %v5212, %v5252
    %v5254 = vpop.f32.mrf.mxu0
    %5255 = vdwg.mxu0
    %v5256 = vtanh.pop %v5250
    %v5257 = vtanh.pop %v5253
    %v5258 = vmul.f32 %v5256, %v5256
    %v5259 = vmul.f32 %v5257, %v5257
    %5260 = vadd.xlane.f32.xlu0 %v5258
    %v5261 = vpop.xlane.xlu0 %5260
    %5262 = vadd.xlane.f32.xlu0 %v5259
    %v5263 = vpop.xlane.xlu0 %5262
    %v5264 = vadd.f32 %v5261, 1e-12
    %v5265 = vadd.f32 %v5263, 1e-12
    %v5266 = vrsqrt.pop %v5264
    %v5267 = vrsqrt.pop %v5265
    %v5268 = vmul.f32 %v5256, %v5266
    %v5269 = vmul.f32 %v5257, %v5267
    %5270 = vst [vmem:[#allocation14] sm:$0xff] %v5268
    %5271 = vst [vmem:[#allocation14 + $0x8] sm:$0xff] %v5269
    // Predicated region
    $region58: #{tpu_custom_call.1} parent=1 // pred_check
      _
    $region59: #{tpu_custom_call.1} parent=1 // pred_check_branch
      %5273 = sbr.rel (0) target = $region61
    $region60: #{tpu_custom_call.1} parent=1 // pred_region
      %s5275 = ssub.s32 256, 256
      %5276 = vsyncadd [#allocation4], %s5275
      %s5277 = sshll.u32 [#allocation14], 4
      %s5278 = int_to_ptr.vmem [resolvable:$true] %s5277
      %5283 = dma.vmem_to_hbm [thread:$0]  %s5278, 256, %s7, [#allocation4], 128, 128, 8
    $region61: #{tpu_custom_call.1} parent=1 // pred_fallthru
      _
    // Predicated region
    $region62: #{tpu_custom_call.1} parent=1 // pred_check
      _
    $region63: #{tpu_custom_call.1} parent=1 // pred_check_branch
      %5285 = sbr.rel (0) target = $region65
    $region64: #{tpu_custom_call.1} parent=1 // pred_region
      %5286 = dma.done [#allocation4], 256
    $region65: #{tpu_custom_call.1} parent=1 // pred_fallthru
      _
    %5287 = vsyncpa [#allocation3], 1
    %5288 = vsyncpa [#allocation6], 1
    %5289 = vsyncpa [#allocation9], 1
    %5290 = vsyncpa [#allocation12], 1
    %5291 = vsyncpa [#allocation4], 1

</llo_original>
